<compile_context>
chip_gen: v6e
topology: v6e:2x2x1
jax: 0.10.0
libtpu: 0.0.40
codegen_flags: <defaults>
</compile_context>

<pallas_src>
import functools
import math

import jax
import jax.numpy as jnp
from jax import lax
from jax.experimental import pallas as pl
from jax.experimental.pallas import tpu as pltpu


def _choose_batch_block(n_batch, seq_len):
    """Batch elements handled per grid step.

    The second-to-last block dim must be a multiple of 8 or span the full
    array dim, so Bn is either all of N or an 8-aligned divisor.  When several
    steps are possible we keep >= 2 of them so both v7x TensorCores get work
    on the "parallel" batch axis.
    """
    if n_batch % 8 != 0:
        return n_batch
    bn = 8
    while ((bn * 2) * 2 <= n_batch and n_batch % (bn * 2) == 0
           and bn * seq_len < 256):
        bn *= 2
    return bn


def _fused_mha_kernel(x_ref, win_ref, bin_ref, wout_ref, bout_ref, o_ref, *,
                      num_heads, head_dim, batch_block, kv_block):
    """Refs:
      x_ref:    (L, Bn, E)  input batch-tile (native seq-major layout)
      win_ref:  (E, 3E)     in_proj_weight.T, bf16, q columns pre-scaled
      bin_ref:  (1, 3E)     in_proj_bias, f32, q part pre-scaled
      wout_ref: (E, E)      out_proj_weight.T, bf16
      bout_ref: (1, E)      out_proj_bias, f32
      o_ref:    (L, Bn, E)  output batch-tile
    """
    E = num_heads * head_dim
    L = x_ref.shape[0]
    num_kv_tiles = (L + kv_block - 1) // kv_block

    # Hoist constant-index weight/bias loads out of the batch/head loops.
    w_in = win_ref[...]            # (E, 3E) bf16
    bias_in = bin_ref[...]         # (1, 3E) f32
    w_out = wout_ref[...]          # (E, E)  bf16
    bias_out = bout_ref[...]       # (1, E)  f32

    for bi in range(batch_block):
        xb = x_ref[:, bi, :].astype(jnp.bfloat16)                   # (L, E)

        # Fused QKV projection: bf16 x bf16 -> f32 accumulate on the MXU.
        qkv = (jnp.dot(xb, w_in, preferred_element_type=jnp.float32)
               + bias_in)                                           # (L, 3E)
        # q columns already carry the folded 1/sqrt(head_dim) scale.
        q_bf = qkv[:, :E].astype(jnp.bfloat16)
        k_bf = qkv[:, E:2 * E].astype(jnp.bfloat16)
        v_bf = qkv[:, 2 * E:].astype(jnp.bfloat16)

        heads = []
        for h in range(num_heads):
            lo = h * head_dim
            hi = lo + head_dim
            qh = q_bf[:, lo:hi]                                     # (L, d)

            # Online softmax over kv tiles (degenerates to plain softmax
            # when the whole sequence fits one tile).
            m_i = jnp.full((L, 1), -1e30, jnp.float32)
            l_i = jnp.zeros((L, 1), jnp.float32)
            acc = jnp.zeros((L, head_dim), jnp.float32)
            for t in range(num_kv_tiles):
                klo = t * kv_block
                khi = min(L, klo + kv_block)
                kh = k_bf[klo:khi, lo:hi]                           # (tk, d)
                vh = v_bf[klo:khi, lo:hi]                           # (tk, d)
                # Contract head_dim directly — no explicit kh.T relayout.
                s = lax.dot_general(qh, kh, (((1,), (1,)), ((), ())),
                                    preferred_element_type=jnp.float32)
                m_new = jnp.maximum(m_i, jnp.max(s, axis=-1, keepdims=True))
                alpha = jnp.exp(m_i - m_new)
                p = jnp.exp(s - m_new)                              # f32 VPU/EUP
                l_i = alpha * l_i + jnp.sum(p, axis=-1, keepdims=True)
                acc = alpha * acc + jnp.dot(p.astype(jnp.bfloat16), vh,
                                            preferred_element_type=jnp.float32)
                m_i = m_new
            heads.append(acc * pl.reciprocal(l_i, approx=True))     # (L, d)

        # Single full-width concat feeding the output projection (no scratch,
        # no narrow per-head column stores).
        attn = jnp.concatenate(heads, axis=-1).astype(jnp.bfloat16)  # (L, E)
        out = (jnp.dot(attn, w_out, preferred_element_type=jnp.float32)
               + bias_out)
        o_ref[:, bi, :] = out.astype(o_ref.dtype)


def fused_self_attention(x, w_in_t, b_in, w_out_t, b_out, num_heads, *,
                         single_buffer_weights=True):
    """x: (L, N, E) in its native layout; weights pre-transposed / pre-scaled."""
    L, N, E = x.shape
    head_dim = E // num_heads
    bn = _choose_batch_block(N, L)
    kv_block = min(L, 512)

    kernel = functools.partial(
        _fused_mha_kernel, num_heads=num_heads, head_dim=head_dim,
        batch_block=bn, kv_block=kv_block)

    # Constant-index weights: single buffer (no double-buffer VMEM waste).
    w_mode = pl.Buffered(1) if single_buffer_weights else None

    # Explicit scoped-VMEM budget sized from the actual buffers (+ headroom),
    # capped below v7x's 64 MiB physical VMEM.
    itemsize = jnp.dtype(x.dtype).itemsize
    vmem_est = ((E * 3 * E + E * E) * 2                 # bf16 weights
                + (3 * E + E) * 4                       # f32 biases
                + 2 * (L * bn * E) * (2 * itemsize)     # dbl-buffered x / out
                + L * 3 * E * 4                         # qkv
                + 2 * L * kv_block * 4                  # score tile + exp
                + 2 * L * E * 4)                        # head outs + concat
    vmem_limit = int(min(max(2 * vmem_est + (8 << 20), 32 << 20), 60 << 20))

    return pl.pallas_call(
        kernel,
        out_shape=jax.ShapeDtypeStruct((L, N, E), x.dtype),
        grid=(N // bn,),
        in_specs=[
            pl.BlockSpec((L, bn, E), lambda n: (0, n, 0)),           # x tile
            pl.BlockSpec((E, 3 * E), lambda n: (0, 0), pipeline_mode=w_mode),
            pl.BlockSpec((1, 3 * E), lambda n: (0, 0), pipeline_mode=w_mode),
            pl.BlockSpec((E, E), lambda n: (0, 0), pipeline_mode=w_mode),
            pl.BlockSpec((1, E), lambda n: (0, 0), pipeline_mode=w_mode),
        ],
        out_specs=pl.BlockSpec((L, bn, E), lambda n: (0, n, 0)),
        compiler_params=pltpu.CompilerParams(
            dimension_semantics=("parallel",),
            vmem_limit_bytes=vmem_limit),
    )(x, w_in_t, b_in, w_out_t, b_out)


def self_attention_layer(x, params, num_heads, single_buffer_weights=True):
    """Equivalent of SelfAttentionLayer.forward(x) with x of shape (L, N, E)."""
    L, N, E = x.shape
    assert E % num_heads == 0
    d = E // num_heads
    scale = 1.0 / math.sqrt(d)

    # Fold the 1/sqrt(d) score scale into the q part of the input projection;
    # cast the (constant) projection weights to bf16 once (MXU operands),
    # keep the biases in f32 (added after the f32-accumulated matmul).
    scale_vec = jnp.concatenate(
        [jnp.full((E,), scale, jnp.float32), jnp.ones((2 * E,), jnp.float32)])
    w_in_t = (params["in_proj_weight"].T * scale_vec[None, :]).astype(jnp.bfloat16)
    b_in = (params["in_proj_bias"] * scale_vec).reshape(1, 3 * E).astype(jnp.float32)
    w_out_t = params["out_proj_weight"].T.astype(jnp.bfloat16)
    b_out = params["out_proj_bias"].reshape(1, E).astype(jnp.float32)

    return fused_self_attention(x, w_in_t, b_in, w_out_t, b_out, num_heads,
                                single_buffer_weights=single_buffer_weights)


# Pure-JAX f32 reference (exact softmax, no Pallas) for the correctness check.
def reference_forward(x, params, num_heads):
    L, N, E = x.shape
    d = E // num_heads
    qkv = x.reshape(L * N, E) @ params["in_proj_weight"].T + params["in_proj_bias"]
    q, k, v = jnp.split(qkv, 3, axis=-1)

    def to_heads(t):
        return t.reshape(L, N * num_heads, d).transpose(1, 0, 2)

    qh, kh, vh = to_heads(q), to_heads(k), to_heads(v)
    s = jnp.einsum("bqd,bkd->bqk", qh, kh) / math.sqrt(d)
    p = jax.nn.softmax(s, axis=-1)
    oh = jnp.einsum("bqk,bkd->bqd", p, vh)
    o = oh.transpose(1, 0, 2).reshape(L * N, E)
    out = o @ params["out_proj_weight"].T + params["out_proj_bias"]
    return out.reshape(L, N, E)


if __name__ == "__main__":
    # Small shapes consistent with nn.MultiheadAttention(embed_dim=32, num_heads=4)
    L, N, E, H = 8, 2, 32, 4

    key = jax.random.PRNGKey(0)
    k_in, k_out, k_x = jax.random.split(key, 3)

    bound_in = math.sqrt(6.0 / (E + 3 * E))
    bound_out = 1.0 / math.sqrt(E)
    params = {
        "in_proj_weight": jax.random.uniform(
            k_in, (3 * E, E), jnp.float32, -bound_in, bound_in),
        "in_proj_bias": jnp.zeros((3 * E,), jnp.float32),
        "out_proj_weight": jax.random.uniform(
            k_out, (E, E), jnp.float32, -bound_out, bound_out),
        "out_proj_bias": jnp.zeros((E,), jnp.float32),
    }

    x = jax.random.normal(k_x, (L, N, E), jnp.float32)

    fwd = jax.jit(self_attention_layer, static_argnums=(2, 3))
    try:
        out = jax.block_until_ready(fwd(x, params, H, True))
    except Exception:
        # Fallback: default (double-buffered) weight blocks.
        out = jax.block_until_ready(fwd(x, params, H, False))

    ref = reference_forward(x, params, H)
    assert out.shape == (L, N, E)
    # Tolerance accounts for bf16 MXU operands (f32 accumulation) and the EUP
    # approximate reciprocal in the softmax normalization.
    assert jnp.allclose(out, ref, atol=3e-2, rtol=3e-2), (
        float(jnp.max(jnp.abs(out - ref))))

    print("KERNEL_OK")
</pallas_src>

<mosaic_0001>
module attributes {stable_mosaic.version = 11 : i64} {
  func.func @_fused_mha_kernel(%arg0: i32, %arg1: memref<8x2x32xf32, #tpu.memory_space<vmem>>, %arg2: memref<32x96xbf16, #tpu.memory_space<vmem>>, %arg3: memref<1x96xf32, #tpu.memory_space<vmem>>, %arg4: memref<32x32xbf16, #tpu.memory_space<vmem>>, %arg5: memref<1x32xf32, #tpu.memory_space<vmem>>, %arg6: memref<8x2x32xf32, #tpu.memory_space<vmem>>) attributes {dimension_semantics = [#tpu.dimension_semantics<parallel>], iteration_bounds = array<i64: 1>, scalar_prefetch = 0 : i64, scratch_operands = 0 : i64, tpu.core_type = #tpu.core_type<tc>, window_params = [{transform_indices = @transform_0, window_bounds = array<i64: 8, 2, 32>}, {pipeline_mode = #tpu.pipeline_mode<synchronous>, transform_indices = @transform_1, window_bounds = array<i64: 32, 96>}, {pipeline_mode = #tpu.pipeline_mode<synchronous>, transform_indices = @transform_2, window_bounds = array<i64: 1, 96>}, {pipeline_mode = #tpu.pipeline_mode<synchronous>, transform_indices = @transform_3, window_bounds = array<i64: 32, 32>}, {pipeline_mode = #tpu.pipeline_mode<synchronous>, transform_indices = @transform_4, window_bounds = array<i64: 1, 32>}, {transform_indices = @transform_5, window_bounds = array<i64: 8, 2, 32>}]} {
    %c0 = arith.constant 0 : index
    %c0_0 = arith.constant 0 : index
    %0 = vector.load %arg2[%c0, %c0_0] : memref<32x96xbf16, #tpu.memory_space<vmem>>, vector<32x96xbf16>
    %c0_1 = arith.constant 0 : index
    %c0_2 = arith.constant 0 : index
    %1 = vector.load %arg3[%c0_1, %c0_2] : memref<1x96xf32, #tpu.memory_space<vmem>>, vector<1x96xf32>
    %c0_3 = arith.constant 0 : index
    %c0_4 = arith.constant 0 : index
    %2 = vector.load %arg4[%c0_3, %c0_4] : memref<32x32xbf16, #tpu.memory_space<vmem>>, vector<32x32xbf16>
    %c0_5 = arith.constant 0 : index
    %c0_6 = arith.constant 0 : index
    %3 = vector.load %arg5[%c0_5, %c0_6] : memref<1x32xf32, #tpu.memory_space<vmem>>, vector<1x32xf32>
    %c0_7 = arith.constant 0 : index
    %c0_8 = arith.constant 0 : index
    %c0_9 = arith.constant 0 : index
    %4 = vector.load %arg1[%c0_7, %c0_8, %c0_9] : memref<8x2x32xf32, #tpu.memory_space<vmem>>, vector<8x1x32xf32>
    %5 = vector.shape_cast %4 : vector<8x1x32xf32> to vector<8x32xf32>
    %6 = arith.truncf %5 : vector<8x32xf32> to vector<8x32xbf16>
    %cst = arith.constant dense<0.000000e+00> : vector<8x96xf32>
    %7 = tpu.matmul %6, %0, %cst {dimension_numbers = #tpu.dot_dimension_numbers<[1], [0], [0], [1], [0, 0, 1, 1], [], []>} : vector<8x32xbf16>, vector<32x96xbf16>, vector<8x96xf32> -> vector<8x96xf32>
    %8 = vector.broadcast %1 : vector<1x96xf32> to vector<8x96xf32>
    %9 = arith.addf %7, %8 : vector<8x96xf32>
    %10 = vector.extract_strided_slice %9 {offsets = [0, 0], sizes = [8, 32], strides = [1, 1]} : vector<8x96xf32> to vector<8x32xf32>
    %11 = arith.truncf %10 : vector<8x32xf32> to vector<8x32xbf16>
    %12 = vector.extract_strided_slice %9 {offsets = [0, 32], sizes = [8, 32], strides = [1, 1]} : vector<8x96xf32> to vector<8x32xf32>
    %13 = arith.truncf %12 : vector<8x32xf32> to vector<8x32xbf16>
    %14 = vector.extract_strided_slice %9 {offsets = [0, 64], sizes = [8, 32], strides = [1, 1]} : vector<8x96xf32> to vector<8x32xf32>
    %15 = arith.truncf %14 : vector<8x32xf32> to vector<8x32xbf16>
    %16 = vector.extract_strided_slice %11 {offsets = [0, 0], sizes = [8, 8], strides = [1, 1]} : vector<8x32xbf16> to vector<8x8xbf16>
    %cst_10 = arith.constant -1.000000e+30 : f32
    %17 = vector.broadcast %cst_10 : f32 to vector<8x1xf32>
    %cst_11 = arith.constant 0.000000e+00 : f32
    %18 = vector.broadcast %cst_11 : f32 to vector<8x1xf32>
    %cst_12 = arith.constant 0.000000e+00 : f32
    %19 = vector.broadcast %cst_12 : f32 to vector<8x8xf32>
    %20 = vector.extract_strided_slice %13 {offsets = [0, 0], sizes = [8, 8], strides = [1, 1]} : vector<8x32xbf16> to vector<8x8xbf16>
    %21 = vector.extract_strided_slice %15 {offsets = [0, 0], sizes = [8, 8], strides = [1, 1]} : vector<8x32xbf16> to vector<8x8xbf16>
    %cst_13 = arith.constant dense<0.000000e+00> : vector<8x8xf32>
    %22 = tpu.matmul %16, %20, %cst_13 {dimension_numbers = #tpu.dot_dimension_numbers<[1], [1], [0], [0], [0, 0, 1, 0], [], []>} : vector<8x8xbf16>, vector<8x8xbf16>, vector<8x8xf32> -> vector<8x8xf32>
    %cst_14 = arith.constant dense<0xFF800000> : vector<8xf32>
    %23 = vector.multi_reduction <maximumf>, %22, %cst_14 [1] : vector<8x8xf32> to vector<8xf32>
    %24 = vector.shape_cast %23 : vector<8xf32> to vector<8x1xf32>
    %25 = arith.maximumf %17, %24 : vector<8x1xf32>
    %26 = arith.subf %17, %25 : vector<8x1xf32>
    %27 = math.exp %26 : vector<8x1xf32>
    %28 = vector.broadcast %25 : vector<8x1xf32> to vector<8x8xf32>
    %29 = arith.subf %22, %28 : vector<8x8xf32>
    %30 = math.exp %29 : vector<8x8xf32>
    %31 = arith.mulf %27, %18 : vector<8x1xf32>
    %cst_15 = arith.constant dense<0.000000e+00> : vector<8xf32>
    %32 = vector.multi_reduction <add>, %30, %cst_15 [1] : vector<8x8xf32> to vector<8xf32>
    %33 = vector.shape_cast %32 : vector<8xf32> to vector<8x1xf32>
    %34 = arith.addf %31, %33 : vector<8x1xf32>
    %35 = vector.broadcast %27 : vector<8x1xf32> to vector<8x8xf32>
    %36 = arith.mulf %35, %19 : vector<8x8xf32>
    %37 = arith.truncf %30 : vector<8x8xf32> to vector<8x8xbf16>
    %cst_16 = arith.constant dense<0.000000e+00> : vector<8x8xf32>
    %38 = tpu.matmul %37, %21, %cst_16 {dimension_numbers = #tpu.dot_dimension_numbers<[1], [0], [0], [1], [0, 0, 1, 1], [], []>} : vector<8x8xbf16>, vector<8x8xbf16>, vector<8x8xf32> -> vector<8x8xf32>
    %39 = arith.addf %36, %38 : vector<8x8xf32>
    %40 = tpu.reciprocal %34 {approx = true} : vector<8x1xf32> -> vector<8x1xf32>
    %41 = vector.broadcast %40 : vector<8x1xf32> to vector<8x8xf32>
    %42 = arith.mulf %39, %41 : vector<8x8xf32>
    %43 = vector.extract_strided_slice %11 {offsets = [0, 8], sizes = [8, 8], strides = [1, 1]} : vector<8x32xbf16> to vector<8x8xbf16>
    %cst_17 = arith.constant -1.000000e+30 : f32
    %44 = vector.broadcast %cst_17 : f32 to vector<8x1xf32>
    %cst_18 = arith.constant 0.000000e+00 : f32
    %45 = vector.broadcast %cst_18 : f32 to vector<8x1xf32>
    %cst_19 = arith.constant 0.000000e+00 : f32
    %46 = vector.broadcast %cst_19 : f32 to vector<8x8xf32>
    %47 = vector.extract_strided_slice %13 {offsets = [0, 8], sizes = [8, 8], strides = [1, 1]} : vector<8x32xbf16> to vector<8x8xbf16>
    %48 = vector.extract_strided_slice %15 {offsets = [0, 8], sizes = [8, 8], strides = [1, 1]} : vector<8x32xbf16> to vector<8x8xbf16>
    %cst_20 = arith.constant dense<0.000000e+00> : vector<8x8xf32>
    %49 = tpu.matmul %43, %47, %cst_20 {dimension_numbers = #tpu.dot_dimension_numbers<[1], [1], [0], [0], [0, 0, 1, 0], [], []>} : vector<8x8xbf16>, vector<8x8xbf16>, vector<8x8xf32> -> vector<8x8xf32>
    %cst_21 = arith.constant dense<0xFF800000> : vector<8xf32>
    %50 = vector.multi_reduction <maximumf>, %49, %cst_21 [1] : vector<8x8xf32> to vector<8xf32>
    %51 = vector.shape_cast %50 : vector<8xf32> to vector<8x1xf32>
    %52 = arith.maximumf %44, %51 : vector<8x1xf32>
    %53 = arith.subf %44, %52 : vector<8x1xf32>
    %54 = math.exp %53 : vector<8x1xf32>
    %55 = vector.broadcast %52 : vector<8x1xf32> to vector<8x8xf32>
    %56 = arith.subf %49, %55 : vector<8x8xf32>
    %57 = math.exp %56 : vector<8x8xf32>
    %58 = arith.mulf %54, %45 : vector<8x1xf32>
    %cst_22 = arith.constant dense<0.000000e+00> : vector<8xf32>
    %59 = vector.multi_reduction <add>, %57, %cst_22 [1] : vector<8x8xf32> to vector<8xf32>
    %60 = vector.shape_cast %59 : vector<8xf32> to vector<8x1xf32>
    %61 = arith.addf %58, %60 : vector<8x1xf32>
    %62 = vector.broadcast %54 : vector<8x1xf32> to vector<8x8xf32>
    %63 = arith.mulf %62, %46 : vector<8x8xf32>
    %64 = arith.truncf %57 : vector<8x8xf32> to vector<8x8xbf16>
    %cst_23 = arith.constant dense<0.000000e+00> : vector<8x8xf32>
    %65 = tpu.matmul %64, %48, %cst_23 {dimension_numbers = #tpu.dot_dimension_numbers<[1], [0], [0], [1], [0, 0, 1, 1], [], []>} : vector<8x8xbf16>, vector<8x8xbf16>, vector<8x8xf32> -> vector<8x8xf32>
    %66 = arith.addf %63, %65 : vector<8x8xf32>
    %67 = tpu.reciprocal %61 {approx = true} : vector<8x1xf32> -> vector<8x1xf32>
    %68 = vector.broadcast %67 : vector<8x1xf32> to vector<8x8xf32>
    %69 = arith.mulf %66, %68 : vector<8x8xf32>
    %70 = vector.extract_strided_slice %11 {offsets = [0, 16], sizes = [8, 8], strides = [1, 1]} : vector<8x32xbf16> to vector<8x8xbf16>
    %cst_24 = arith.constant -1.000000e+30 : f32
    %71 = vector.broadcast %cst_24 : f32 to vector<8x1xf32>
    %cst_25 = arith.constant 0.000000e+00 : f32
    %72 = vector.broadcast %cst_25 : f32 to vector<8x1xf32>
    %cst_26 = arith.constant 0.000000e+00 : f32
    %73 = vector.broadcast %cst_26 : f32 to vector<8x8xf32>
    %74 = vector.extract_strided_slice %13 {offsets = [0, 16], sizes = [8, 8], strides = [1, 1]} : vector<8x32xbf16> to vector<8x8xbf16>
    %75 = vector.extract_strided_slice %15 {offsets = [0, 16], sizes = [8, 8], strides = [1, 1]} : vector<8x32xbf16> to vector<8x8xbf16>
    %cst_27 = arith.constant dense<0.000000e+00> : vector<8x8xf32>
    %76 = tpu.matmul %70, %74, %cst_27 {dimension_numbers = #tpu.dot_dimension_numbers<[1], [1], [0], [0], [0, 0, 1, 0], [], []>} : vector<8x8xbf16>, vector<8x8xbf16>, vector<8x8xf32> -> vector<8x8xf32>
    %cst_28 = arith.constant dense<0xFF800000> : vector<8xf32>
    %77 = vector.multi_reduction <maximumf>, %76, %cst_28 [1] : vector<8x8xf32> to vector<8xf32>
    %78 = vector.shape_cast %77 : vector<8xf32> to vector<8x1xf32>
    %79 = arith.maximumf %71, %78 : vector<8x1xf32>
    %80 = arith.subf %71, %79 : vector<8x1xf32>
    %81 = math.exp %80 : vector<8x1xf32>
    %82 = vector.broadcast %79 : vector<8x1xf32> to vector<8x8xf32>
    %83 = arith.subf %76, %82 : vector<8x8xf32>
    %84 = math.exp %83 : vector<8x8xf32>
    %85 = arith.mulf %81, %72 : vector<8x1xf32>
    %cst_29 = arith.constant dense<0.000000e+00> : vector<8xf32>
    %86 = vector.multi_reduction <add>, %84, %cst_29 [1] : vector<8x8xf32> to vector<8xf32>
    %87 = vector.shape_cast %86 : vector<8xf32> to vector<8x1xf32>
    %88 = arith.addf %85, %87 : vector<8x1xf32>
    %89 = vector.broadcast %81 : vector<8x1xf32> to vector<8x8xf32>
    %90 = arith.mulf %89, %73 : vector<8x8xf32>
    %91 = arith.truncf %84 : vector<8x8xf32> to vector<8x8xbf16>
    %cst_30 = arith.constant dense<0.000000e+00> : vector<8x8xf32>
    %92 = tpu.matmul %91, %75, %cst_30 {dimension_numbers = #tpu.dot_dimension_numbers<[1], [0], [0], [1], [0, 0, 1, 1], [], []>} : vector<8x8xbf16>, vector<8x8xbf16>, vector<8x8xf32> -> vector<8x8xf32>
    %93 = arith.addf %90, %92 : vector<8x8xf32>
    %94 = tpu.reciprocal %88 {approx = true} : vector<8x1xf32> -> vector<8x1xf32>
    %95 = vector.broadcast %94 : vector<8x1xf32> to vector<8x8xf32>
    %96 = arith.mulf %93, %95 : vector<8x8xf32>
    %97 = vector.extract_strided_slice %11 {offsets = [0, 24], sizes = [8, 8], strides = [1, 1]} : vector<8x32xbf16> to vector<8x8xbf16>
    %cst_31 = arith.constant -1.000000e+30 : f32
    %98 = vector.broadcast %cst_31 : f32 to vector<8x1xf32>
    %cst_32 = arith.constant 0.000000e+00 : f32
    %99 = vector.broadcast %cst_32 : f32 to vector<8x1xf32>
    %cst_33 = arith.constant 0.000000e+00 : f32
    %100 = vector.broadcast %cst_33 : f32 to vector<8x8xf32>
    %101 = vector.extract_strided_slice %13 {offsets = [0, 24], sizes = [8, 8], strides = [1, 1]} : vector<8x32xbf16> to vector<8x8xbf16>
    %102 = vector.extract_strided_slice %15 {offsets = [0, 24], sizes = [8, 8], strides = [1, 1]} : vector<8x32xbf16> to vector<8x8xbf16>
    %cst_34 = arith.constant dense<0.000000e+00> : vector<8x8xf32>
    %103 = tpu.matmul %97, %101, %cst_34 {dimension_numbers = #tpu.dot_dimension_numbers<[1], [1], [0], [0], [0, 0, 1, 0], [], []>} : vector<8x8xbf16>, vector<8x8xbf16>, vector<8x8xf32> -> vector<8x8xf32>
    %cst_35 = arith.constant dense<0xFF800000> : vector<8xf32>
    %104 = vector.multi_reduction <maximumf>, %103, %cst_35 [1] : vector<8x8xf32> to vector<8xf32>
    %105 = vector.shape_cast %104 : vector<8xf32> to vector<8x1xf32>
    %106 = arith.maximumf %98, %105 : vector<8x1xf32>
    %107 = arith.subf %98, %106 : vector<8x1xf32>
    %108 = math.exp %107 : vector<8x1xf32>
    %109 = vector.broadcast %106 : vector<8x1xf32> to vector<8x8xf32>
    %110 = arith.subf %103, %109 : vector<8x8xf32>
    %111 = math.exp %110 : vector<8x8xf32>
    %112 = arith.mulf %108, %99 : vector<8x1xf32>
    %cst_36 = arith.constant dense<0.000000e+00> : vector<8xf32>
    %113 = vector.multi_reduction <add>, %111, %cst_36 [1] : vector<8x8xf32> to vector<8xf32>
    %114 = vector.shape_cast %113 : vector<8xf32> to vector<8x1xf32>
    %115 = arith.addf %112, %114 : vector<8x1xf32>
    %116 = vector.broadcast %108 : vector<8x1xf32> to vector<8x8xf32>
    %117 = arith.mulf %116, %100 : vector<8x8xf32>
    %118 = arith.truncf %111 : vector<8x8xf32> to vector<8x8xbf16>
    %cst_37 = arith.constant dense<0.000000e+00> : vector<8x8xf32>
    %119 = tpu.matmul %118, %102, %cst_37 {dimension_numbers = #tpu.dot_dimension_numbers<[1], [0], [0], [1], [0, 0, 1, 1], [], []>} : vector<8x8xbf16>, vector<8x8xbf16>, vector<8x8xf32> -> vector<8x8xf32>
    %120 = arith.addf %117, %119 : vector<8x8xf32>
    %121 = tpu.reciprocal %115 {approx = true} : vector<8x1xf32> -> vector<8x1xf32>
    %122 = vector.broadcast %121 : vector<8x1xf32> to vector<8x8xf32>
    %123 = arith.mulf %120, %122 : vector<8x8xf32>
    %124 = tpu.concatenate %42, %69, %96, %123 in 1 : vector<8x8xf32>, vector<8x8xf32>, vector<8x8xf32>, vector<8x8xf32> -> vector<8x32xf32>
    %125 = arith.truncf %124 : vector<8x32xf32> to vector<8x32xbf16>
    %cst_38 = arith.constant dense<0.000000e+00> : vector<8x32xf32>
    %126 = tpu.matmul %125, %2, %cst_38 {dimension_numbers = #tpu.dot_dimension_numbers<[1], [0], [0], [1], [0, 0, 1, 1], [], []>} : vector<8x32xbf16>, vector<32x32xbf16>, vector<8x32xf32> -> vector<8x32xf32>
    %127 = vector.broadcast %3 : vector<1x32xf32> to vector<8x32xf32>
    %128 = arith.addf %126, %127 : vector<8x32xf32>
    %c0_39 = arith.constant 0 : index
    %c0_40 = arith.constant 0 : index
    %c0_41 = arith.constant 0 : index
    %129 = vector.load %arg6[%c0_39, %c0_40, %c0_41] : memref<8x2x32xf32, #tpu.memory_space<vmem>>, vector<8x1x32xf32>
    %130 = vector.shape_cast %129 : vector<8x1x32xf32> to vector<8x32xf32>
    %131 = vector.shape_cast %128 : vector<8x32xf32> to vector<8x1x32xf32>
    tpu.vector_store %arg6[%c0_39, %c0_40, %c0_41], %131 {strides = array<i32>} : memref<8x2x32xf32, #tpu.memory_space<vmem>>, vector<8x1x32xf32>,
    %c0_42 = arith.constant 0 : index
    %c1 = arith.constant 1 : index
    %c0_43 = arith.constant 0 : index
    %132 = vector.load %arg1[%c0_42, %c1, %c0_43] : memref<8x2x32xf32, #tpu.memory_space<vmem>>, vector<8x1x32xf32>
    %133 = vector.shape_cast %132 : vector<8x1x32xf32> to vector<8x32xf32>
    %134 = arith.truncf %133 : vector<8x32xf32> to vector<8x32xbf16>
    %cst_44 = arith.constant dense<0.000000e+00> : vector<8x96xf32>
    %135 = tpu.matmul %134, %0, %cst_44 {dimension_numbers = #tpu.dot_dimension_numbers<[1], [0], [0], [1], [0, 0, 1, 1], [], []>} : vector<8x32xbf16>, vector<32x96xbf16>, vector<8x96xf32> -> vector<8x96xf32>
    %136 = vector.broadcast %1 : vector<1x96xf32> to vector<8x96xf32>
    %137 = arith.addf %135, %136 : vector<8x96xf32>
    %138 = vector.extract_strided_slice %137 {offsets = [0, 0], sizes = [8, 32], strides = [1, 1]} : vector<8x96xf32> to vector<8x32xf32>
    %139 = arith.truncf %138 : vector<8x32xf32> to vector<8x32xbf16>
    %140 = vector.extract_strided_slice %137 {offsets = [0, 32], sizes = [8, 32], strides = [1, 1]} : vector<8x96xf32> to vector<8x32xf32>
    %141 = arith.truncf %140 : vector<8x32xf32> to vector<8x32xbf16>
    %142 = vector.extract_strided_slice %137 {offsets = [0, 64], sizes = [8, 32], strides = [1, 1]} : vector<8x96xf32> to vector<8x32xf32>
    %143 = arith.truncf %142 : vector<8x32xf32> to vector<8x32xbf16>
    %144 = vector.extract_strided_slice %139 {offsets = [0, 0], sizes = [8, 8], strides = [1, 1]} : vector<8x32xbf16> to vector<8x8xbf16>
    %cst_45 = arith.constant -1.000000e+30 : f32
    %145 = vector.broadcast %cst_45 : f32 to vector<8x1xf32>
    %cst_46 = arith.constant 0.000000e+00 : f32
    %146 = vector.broadcast %cst_46 : f32 to vector<8x1xf32>
    %cst_47 = arith.constant 0.000000e+00 : f32
    %147 = vector.broadcast %cst_47 : f32 to vector<8x8xf32>
    %148 = vector.extract_strided_slice %141 {offsets = [0, 0], sizes = [8, 8], strides = [1, 1]} : vector<8x32xbf16> to vector<8x8xbf16>
    %149 = vector.extract_strided_slice %143 {offsets = [0, 0], sizes = [8, 8], strides = [1, 1]} : vector<8x32xbf16> to vector<8x8xbf16>
    %cst_48 = arith.constant dense<0.000000e+00> : vector<8x8xf32>
    %150 = tpu.matmul %144, %148, %cst_48 {dimension_numbers = #tpu.dot_dimension_numbers<[1], [1], [0], [0], [0, 0, 1, 0], [], []>} : vector<8x8xbf16>, vector<8x8xbf16>, vector<8x8xf32> -> vector<8x8xf32>
    %cst_49 = arith.constant dense<0xFF800000> : vector<8xf32>
    %151 = vector.multi_reduction <maximumf>, %150, %cst_49 [1] : vector<8x8xf32> to vector<8xf32>
    %152 = vector.shape_cast %151 : vector<8xf32> to vector<8x1xf32>
    %153 = arith.maximumf %145, %152 : vector<8x1xf32>
    %154 = arith.subf %145, %153 : vector<8x1xf32>
    %155 = math.exp %154 : vector<8x1xf32>
    %156 = vector.broadcast %153 : vector<8x1xf32> to vector<8x8xf32>
    %157 = arith.subf %150, %156 : vector<8x8xf32>
    %158 = math.exp %157 : vector<8x8xf32>
    %159 = arith.mulf %155, %146 : vector<8x1xf32>
    %cst_50 = arith.constant dense<0.000000e+00> : vector<8xf32>
    %160 = vector.multi_reduction <add>, %158, %cst_50 [1] : vector<8x8xf32> to vector<8xf32>
    %161 = vector.shape_cast %160 : vector<8xf32> to vector<8x1xf32>
    %162 = arith.addf %159, %161 : vector<8x1xf32>
    %163 = vector.broadcast %155 : vector<8x1xf32> to vector<8x8xf32>
    %164 = arith.mulf %163, %147 : vector<8x8xf32>
    %165 = arith.truncf %158 : vector<8x8xf32> to vector<8x8xbf16>
    %cst_51 = arith.constant dense<0.000000e+00> : vector<8x8xf32>
    %166 = tpu.matmul %165, %149, %cst_51 {dimension_numbers = #tpu.dot_dimension_numbers<[1], [0], [0], [1], [0, 0, 1, 1], [], []>} : vector<8x8xbf16>, vector<8x8xbf16>, vector<8x8xf32> -> vector<8x8xf32>
    %167 = arith.addf %164, %166 : vector<8x8xf32>
    %168 = tpu.reciprocal %162 {approx = true} : vector<8x1xf32> -> vector<8x1xf32>
    %169 = vector.broadcast %168 : vector<8x1xf32> to vector<8x8xf32>
    %170 = arith.mulf %167, %169 : vector<8x8xf32>
    %171 = vector.extract_strided_slice %139 {offsets = [0, 8], sizes = [8, 8], strides = [1, 1]} : vector<8x32xbf16> to vector<8x8xbf16>
    %cst_52 = arith.constant -1.000000e+30 : f32
    %172 = vector.broadcast %cst_52 : f32 to vector<8x1xf32>
    %cst_53 = arith.constant 0.000000e+00 : f32
    %173 = vector.broadcast %cst_53 : f32 to vector<8x1xf32>
    %cst_54 = arith.constant 0.000000e+00 : f32
    %174 = vector.broadcast %cst_54 : f32 to vector<8x8xf32>
    %175 = vector.extract_strided_slice %141 {offsets = [0, 8], sizes = [8, 8], strides = [1, 1]} : vector<8x32xbf16> to vector<8x8xbf16>
    %176 = vector.extract_strided_slice %143 {offsets = [0, 8], sizes = [8, 8], strides = [1, 1]} : vector<8x32xbf16> to vector<8x8xbf16>
    %cst_55 = arith.constant dense<0.000000e+00> : vector<8x8xf32>
    %177 = tpu.matmul %171, %175, %cst_55 {dimension_numbers = #tpu.dot_dimension_numbers<[1], [1], [0], [0], [0, 0, 1, 0], [], []>} : vector<8x8xbf16>, vector<8x8xbf16>, vector<8x8xf32> -> vector<8x8xf32>
    %cst_56 = arith.constant dense<0xFF800000> : vector<8xf32>
    %178 = vector.multi_reduction <maximumf>, %177, %cst_56 [1] : vector<8x8xf32> to vector<8xf32>
    %179 = vector.shape_cast %178 : vector<8xf32> to vector<8x1xf32>
    %180 = arith.maximumf %172, %179 : vector<8x1xf32>
    %181 = arith.subf %172, %180 : vector<8x1xf32>
    %182 = math.exp %181 : vector<8x1xf32>
    %183 = vector.broadcast %180 : vector<8x1xf32> to vector<8x8xf32>
    %184 = arith.subf %177, %183 : vector<8x8xf32>
    %185 = math.exp %184 : vector<8x8xf32>
    %186 = arith.mulf %182, %173 : vector<8x1xf32>
    %cst_57 = arith.constant dense<0.000000e+00> : vector<8xf32>
    %187 = vector.multi_reduction <add>, %185, %cst_57 [1] : vector<8x8xf32> to vector<8xf32>
    %188 = vector.shape_cast %187 : vector<8xf32> to vector<8x1xf32>
    %189 = arith.addf %186, %188 : vector<8x1xf32>
    %190 = vector.broadcast %182 : vector<8x1xf32> to vector<8x8xf32>
    %191 = arith.mulf %190, %174 : vector<8x8xf32>
    %192 = arith.truncf %185 : vector<8x8xf32> to vector<8x8xbf16>
    %cst_58 = arith.constant dense<0.000000e+00> : vector<8x8xf32>
    %193 = tpu.matmul %192, %176, %cst_58 {dimension_numbers = #tpu.dot_dimension_numbers<[1], [0], [0], [1], [0, 0, 1, 1], [], []>} : vector<8x8xbf16>, vector<8x8xbf16>, vector<8x8xf32> -> vector<8x8xf32>
    %194 = arith.addf %191, %193 : vector<8x8xf32>
    %195 = tpu.reciprocal %189 {approx = true} : vector<8x1xf32> -> vector<8x1xf32>
    %196 = vector.broadcast %195 : vector<8x1xf32> to vector<8x8xf32>
    %197 = arith.mulf %194, %196 : vector<8x8xf32>
    %198 = vector.extract_strided_slice %139 {offsets = [0, 16], sizes = [8, 8], strides = [1, 1]} : vector<8x32xbf16> to vector<8x8xbf16>
    %cst_59 = arith.constant -1.000000e+30 : f32
    %199 = vector.broadcast %cst_59 : f32 to vector<8x1xf32>
    %cst_60 = arith.constant 0.000000e+00 : f32
    %200 = vector.broadcast %cst_60 : f32 to vector<8x1xf32>
    %cst_61 = arith.constant 0.000000e+00 : f32
    %201 = vector.broadcast %cst_61 : f32 to vector<8x8xf32>
    %202 = vector.extract_strided_slice %141 {offsets = [0, 16], sizes = [8, 8], strides = [1, 1]} : vector<8x32xbf16> to vector<8x8xbf16>
    %203 = vector.extract_strided_slice %143 {offsets = [0, 16], sizes = [8, 8], strides = [1, 1]} : vector<8x32xbf16> to vector<8x8xbf16>
    %cst_62 = arith.constant dense<0.000000e+00> : vector<8x8xf32>
    %204 = tpu.matmul %198, %202, %cst_62 {dimension_numbers = #tpu.dot_dimension_numbers<[1], [1], [0], [0], [0, 0, 1, 0], [], []>} : vector<8x8xbf16>, vector<8x8xbf16>, vector<8x8xf32> -> vector<8x8xf32>
    %cst_63 = arith.constant dense<0xFF800000> : vector<8xf32>
    %205 = vector.multi_reduction <maximumf>, %204, %cst_63 [1] : vector<8x8xf32> to vector<8xf32>
    %206 = vector.shape_cast %205 : vector<8xf32> to vector<8x1xf32>
    %207 = arith.maximumf %199, %206 : vector<8x1xf32>
    %208 = arith.subf %199, %207 : vector<8x1xf32>
    %209 = math.exp %208 : vector<8x1xf32>
    %210 = vector.broadcast %207 : vector<8x1xf32> to vector<8x8xf32>
    %211 = arith.subf %204, %210 : vector<8x8xf32>
    %212 = math.exp %211 : vector<8x8xf32>
    %213 = arith.mulf %209, %200 : vector<8x1xf32>
    %cst_64 = arith.constant dense<0.000000e+00> : vector<8xf32>
    %214 = vector.multi_reduction <add>, %212, %cst_64 [1] : vector<8x8xf32> to vector<8xf32>
    %215 = vector.shape_cast %214 : vector<8xf32> to vector<8x1xf32>
    %216 = arith.addf %213, %215 : vector<8x1xf32>
    %217 = vector.broadcast %209 : vector<8x1xf32> to vector<8x8xf32>
    %218 = arith.mulf %217, %201 : vector<8x8xf32>
    %219 = arith.truncf %212 : vector<8x8xf32> to vector<8x8xbf16>
    %cst_65 = arith.constant dense<0.000000e+00> : vector<8x8xf32>
    %220 = tpu.matmul %219, %203, %cst_65 {dimension_numbers = #tpu.dot_dimension_numbers<[1], [0], [0], [1], [0, 0, 1, 1], [], []>} : vector<8x8xbf16>, vector<8x8xbf16>, vector<8x8xf32> -> vector<8x8xf32>
    %221 = arith.addf %218, %220 : vector<8x8xf32>
    %222 = tpu.reciprocal %216 {approx = true} : vector<8x1xf32> -> vector<8x1xf32>
    %223 = vector.broadcast %222 : vector<8x1xf32> to vector<8x8xf32>
    %224 = arith.mulf %221, %223 : vector<8x8xf32>
    %225 = vector.extract_strided_slice %139 {offsets = [0, 24], sizes = [8, 8], strides = [1, 1]} : vector<8x32xbf16> to vector<8x8xbf16>
    %cst_66 = arith.constant -1.000000e+30 : f32
    %226 = vector.broadcast %cst_66 : f32 to vector<8x1xf32>
    %cst_67 = arith.constant 0.000000e+00 : f32
    %227 = vector.broadcast %cst_67 : f32 to vector<8x1xf32>
    %cst_68 = arith.constant 0.000000e+00 : f32
    %228 = vector.broadcast %cst_68 : f32 to vector<8x8xf32>
    %229 = vector.extract_strided_slice %141 {offsets = [0, 24], sizes = [8, 8], strides = [1, 1]} : vector<8x32xbf16> to vector<8x8xbf16>
    %230 = vector.extract_strided_slice %143 {offsets = [0, 24], sizes = [8, 8], strides = [1, 1]} : vector<8x32xbf16> to vector<8x8xbf16>
    %cst_69 = arith.constant dense<0.000000e+00> : vector<8x8xf32>
    %231 = tpu.matmul %225, %229, %cst_69 {dimension_numbers = #tpu.dot_dimension_numbers<[1], [1], [0], [0], [0, 0, 1, 0], [], []>} : vector<8x8xbf16>, vector<8x8xbf16>, vector<8x8xf32> -> vector<8x8xf32>
    %cst_70 = arith.constant dense<0xFF800000> : vector<8xf32>
    %232 = vector.multi_reduction <maximumf>, %231, %cst_70 [1] : vector<8x8xf32> to vector<8xf32>
    %233 = vector.shape_cast %232 : vector<8xf32> to vector<8x1xf32>
    %234 = arith.maximumf %226, %233 : vector<8x1xf32>
    %235 = arith.subf %226, %234 : vector<8x1xf32>
    %236 = math.exp %235 : vector<8x1xf32>
    %237 = vector.broadcast %234 : vector<8x1xf32> to vector<8x8xf32>
    %238 = arith.subf %231, %237 : vector<8x8xf32>
    %239 = math.exp %238 : vector<8x8xf32>
    %240 = arith.mulf %236, %227 : vector<8x1xf32>
    %cst_71 = arith.constant dense<0.000000e+00> : vector<8xf32>
    %241 = vector.multi_reduction <add>, %239, %cst_71 [1] : vector<8x8xf32> to vector<8xf32>
    %242 = vector.shape_cast %241 : vector<8xf32> to vector<8x1xf32>
    %243 = arith.addf %240, %242 : vector<8x1xf32>
    %244 = vector.broadcast %236 : vector<8x1xf32> to vector<8x8xf32>
    %245 = arith.mulf %244, %228 : vector<8x8xf32>
    %246 = arith.truncf %239 : vector<8x8xf32> to vector<8x8xbf16>
    %cst_72 = arith.constant dense<0.000000e+00> : vector<8x8xf32>
    %247 = tpu.matmul %246, %230, %cst_72 {dimension_numbers = #tpu.dot_dimension_numbers<[1], [0], [0], [1], [0, 0, 1, 1], [], []>} : vector<8x8xbf16>, vector<8x8xbf16>, vector<8x8xf32> -> vector<8x8xf32>
    %248 = arith.addf %245, %247 : vector<8x8xf32>
    %249 = tpu.reciprocal %243 {approx = true} : vector<8x1xf32> -> vector<8x1xf32>
    %250 = vector.broadcast %249 : vector<8x1xf32> to vector<8x8xf32>
    %251 = arith.mulf %248, %250 : vector<8x8xf32>
    %252 = tpu.concatenate %170, %197, %224, %251 in 1 : vector<8x8xf32>, vector<8x8xf32>, vector<8x8xf32>, vector<8x8xf32> -> vector<8x32xf32>
    %253 = arith.truncf %252 : vector<8x32xf32> to vector<8x32xbf16>
    %cst_73 = arith.constant dense<0.000000e+00> : vector<8x32xf32>
    %254 = tpu.matmul %253, %2, %cst_73 {dimension_numbers = #tpu.dot_dimension_numbers<[1], [0], [0], [1], [0, 0, 1, 1], [], []>} : vector<8x32xbf16>, vector<32x32xbf16>, vector<8x32xf32> -> vector<8x32xf32>
    %255 = vector.broadcast %3 : vector<1x32xf32> to vector<8x32xf32>
    %256 = arith.addf %254, %255 : vector<8x32xf32>
    %c0_74 = arith.constant 0 : index
    %c1_75 = arith.constant 1 : index
    %c0_76 = arith.constant 0 : index
    %257 = vector.load %arg6[%c0_74, %c1_75, %c0_76] : memref<8x2x32xf32, #tpu.memory_space<vmem>>, vector<8x1x32xf32>
    %258 = vector.shape_cast %257 : vector<8x1x32xf32> to vector<8x32xf32>
    %259 = vector.shape_cast %256 : vector<8x32xf32> to vector<8x1x32xf32>
    tpu.vector_store %arg6[%c0_74, %c1_75, %c0_76], %259 {strides = array<i32>} : memref<8x2x32xf32, #tpu.memory_space<vmem>>, vector<8x1x32xf32>,
    return
  }
  func.func @transform_0(%arg0: i32) -> (i32, i32, i32) {
    %c0_i32 = arith.constant 0 : i32
    %c0_i32_0 = arith.constant 0 : i32
    %c0_i32_1 = arith.constant 0 : i32
    return %c0_i32, %arg0, %c0_i32_0 : i32, i32, i32
  }
  func.func @transform_1(%arg0: i32) -> (i32, i32) {
    %c0_i32 = arith.constant 0 : i32
    %c0_i32_0 = arith.constant 0 : i32
    %c0_i32_1 = arith.constant 0 : i32
    return %c0_i32, %c0_i32_0 : i32, i32
  }
  func.func @transform_2(%arg0: i32) -> (i32, i32) {
    %c0_i32 = arith.constant 0 : i32
    %c0_i32_0 = arith.constant 0 : i32
    %c0_i32_1 = arith.constant 0 : i32
    return %c0_i32, %c0_i32_0 : i32, i32
  }
  func.func @transform_3(%arg0: i32) -> (i32, i32) {
    %c0_i32 = arith.constant 0 : i32
    %c0_i32_0 = arith.constant 0 : i32
    %c0_i32_1 = arith.constant 0 : i32
    return %c0_i32, %c0_i32_0 : i32, i32
  }
  func.func @transform_4(%arg0: i32) -> (i32, i32) {
    %c0_i32 = arith.constant 0 : i32
    %c0_i32_0 = arith.constant 0 : i32
    %c0_i32_1 = arith.constant 0 : i32
    return %c0_i32, %c0_i32_0 : i32, i32
  }
  func.func @transform_5(%arg0: i32) -> (i32, i32, i32) {
    %c0_i32 = arith.constant 0 : i32
    %c0_i32_0 = arith.constant 0 : i32
    %c0_i32_1 = arith.constant 0 : i32
    return %c0_i32, %arg0, %c0_i32_0 : i32, i32, i32
  }
}

module attributes {stable_mosaic.version = 11 : i64} {
  func.func @_fused_mha_kernel(%arg0: i32, %arg1: memref<8x2x32xf32, #tpu.memory_space<vmem>>, %arg2: memref<32x96xbf16, #tpu.memory_space<vmem>>, %arg3: memref<1x96xf32, #tpu.memory_space<vmem>>, %arg4: memref<32x32xbf16, #tpu.memory_space<vmem>>, %arg5: memref<1x32xf32, #tpu.memory_space<vmem>>, %arg6: memref<8x2x32xf32, #tpu.memory_space<vmem>>) attributes {dimension_semantics = [#tpu.dimension_semantics<parallel>], iteration_bounds = array<i64: 1>, scalar_prefetch = 0 : i64, scratch_operands = 0 : i64, tpu.core_type = #tpu.core_type<tc>, window_params = [{transform_indices = @transform_0, window_bounds = array<i64: 8, 2, 32>}, {pipeline_mode = #tpu.pipeline_mode<synchronous>, transform_indices = @transform_1, window_bounds = array<i64: 32, 96>}, {pipeline_mode = #tpu.pipeline_mode<synchronous>, transform_indices = @transform_2, window_bounds = array<i64: 1, 96>}, {pipeline_mode = #tpu.pipeline_mode<synchronous>, transform_indices = @transform_3, window_bounds = array<i64: 32, 32>}, {pipeline_mode = #tpu.pipeline_mode<synchronous>, transform_indices = @transform_4, window_bounds = array<i64: 1, 32>}, {transform_indices = @transform_5, window_bounds = array<i64: 8, 2, 32>}]} {
    %c0 = arith.constant 0 : index
    %c0_0 = arith.constant 0 : index
    %0 = vector.load %arg2[%c0, %c0_0] : memref<32x96xbf16, #tpu.memory_space<vmem>>, vector<32x96xbf16>
    %c0_1 = arith.constant 0 : index
    %c0_2 = arith.constant 0 : index
    %1 = vector.load %arg3[%c0_1, %c0_2] : memref<1x96xf32, #tpu.memory_space<vmem>>, vector<1x96xf32>
    %c0_3 = arith.constant 0 : index
    %c0_4 = arith.constant 0 : index
    %2 = vector.load %arg4[%c0_3, %c0_4] : memref<32x32xbf16, #tpu.memory_space<vmem>>, vector<32x32xbf16>
    %c0_5 = arith.constant 0 : index
    %c0_6 = arith.constant 0 : index
    %3 = vector.load %arg5[%c0_5, %c0_6] : memref<1x32xf32, #tpu.memory_space<vmem>>, vector<1x32xf32>
    %c0_7 = arith.constant 0 : index
    %c0_8 = arith.constant 0 : index
    %c0_9 = arith.constant 0 : index
    %4 = vector.load %arg1[%c0_7, %c0_8, %c0_9] : memref<8x2x32xf32, #tpu.memory_space<vmem>>, vector<8x1x32xf32>
    %5 = vector.shape_cast %4 : vector<8x1x32xf32> to vector<8x32xf32>
    %6 = arith.truncf %5 : vector<8x32xf32> to vector<8x32xbf16>
    %cst = arith.constant dense<0.000000e+00> : vector<8x96xf32>
    %7 = tpu.matmul %6, %0, %cst {dimension_numbers = #tpu.dot_dimension_numbers<[1], [0], [0], [1], [0, 0, 1, 1], [], []>} : vector<8x32xbf16>, vector<32x96xbf16>, vector<8x96xf32> -> vector<8x96xf32>
    %8 = vector.broadcast %1 : vector<1x96xf32> to vector<8x96xf32>
    %9 = arith.addf %7, %8 : vector<8x96xf32>
    %10 = vector.extract_strided_slice %9 {offsets = [0, 0], sizes = [8, 32], strides = [1, 1]} : vector<8x96xf32> to vector<8x32xf32>
    %11 = arith.truncf %10 : vector<8x32xf32> to vector<8x32xbf16>
    %12 = vector.extract_strided_slice %9 {offsets = [0, 32], sizes = [8, 32], strides = [1, 1]} : vector<8x96xf32> to vector<8x32xf32>
    %13 = arith.truncf %12 : vector<8x32xf32> to vector<8x32xbf16>
    %14 = vector.extract_strided_slice %9 {offsets = [0, 64], sizes = [8, 32], strides = [1, 1]} : vector<8x96xf32> to vector<8x32xf32>
    %15 = arith.truncf %14 : vector<8x32xf32> to vector<8x32xbf16>
    %16 = vector.extract_strided_slice %11 {offsets = [0, 0], sizes = [8, 8], strides = [1, 1]} : vector<8x32xbf16> to vector<8x8xbf16>
    %cst_10 = arith.constant -1.000000e+30 : f32
    %17 = vector.broadcast %cst_10 : f32 to vector<8x1xf32>
    %cst_11 = arith.constant 0.000000e+00 : f32
    %18 = vector.broadcast %cst_11 : f32 to vector<8x1xf32>
    %cst_12 = arith.constant 0.000000e+00 : f32
    %19 = vector.broadcast %cst_12 : f32 to vector<8x8xf32>
    %20 = vector.extract_strided_slice %13 {offsets = [0, 0], sizes = [8, 8], strides = [1, 1]} : vector<8x32xbf16> to vector<8x8xbf16>
    %21 = vector.extract_strided_slice %15 {offsets = [0, 0], sizes = [8, 8], strides = [1, 1]} : vector<8x32xbf16> to vector<8x8xbf16>
    %cst_13 = arith.constant dense<0.000000e+00> : vector<8x8xf32>
    %22 = tpu.matmul %16, %20, %cst_13 {dimension_numbers = #tpu.dot_dimension_numbers<[1], [1], [0], [0], [0, 0, 1, 0], [], []>} : vector<8x8xbf16>, vector<8x8xbf16>, vector<8x8xf32> -> vector<8x8xf32>
    %cst_14 = arith.constant dense<0xFF800000> : vector<8xf32>
    %23 = vector.multi_reduction <maximumf>, %22, %cst_14 [1] : vector<8x8xf32> to vector<8xf32>
    %24 = vector.shape_cast %23 : vector<8xf32> to vector<8x1xf32>
    %25 = arith.maximumf %17, %24 : vector<8x1xf32>
    %26 = arith.subf %17, %25 : vector<8x1xf32>
    %27 = math.exp %26 : vector<8x1xf32>
    %28 = vector.broadcast %25 : vector<8x1xf32> to vector<8x8xf32>
    %29 = arith.subf %22, %28 : vector<8x8xf32>
    %30 = math.exp %29 : vector<8x8xf32>
    %31 = arith.mulf %27, %18 : vector<8x1xf32>
    %cst_15 = arith.constant dense<0.000000e+00> : vector<8xf32>
    %32 = vector.multi_reduction <add>, %30, %cst_15 [1] : vector<8x8xf32> to vector<8xf32>
    %33 = vector.shape_cast %32 : vector<8xf32> to vector<8x1xf32>
    %34 = arith.addf %31, %33 : vector<8x1xf32>
    %35 = vector.broadcast %27 : vector<8x1xf32> to vector<8x8xf32>
    %36 = arith.mulf %35, %19 : vector<8x8xf32>
    %37 = arith.truncf %30 : vector<8x8xf32> to vector<8x8xbf16>
    %cst_16 = arith.constant dense<0.000000e+00> : vector<8x8xf32>
    %38 = tpu.matmul %37, %21, %cst_16 {dimension_numbers = #tpu.dot_dimension_numbers<[1], [0], [0], [1], [0, 0, 1, 1], [], []>} : vector<8x8xbf16>, vector<8x8xbf16>, vector<8x8xf32> -> vector<8x8xf32>
    %39 = arith.addf %36, %38 : vector<8x8xf32>
    %40 = tpu.reciprocal %34 {approx = true} : vector<8x1xf32> -> vector<8x1xf32>
    %41 = vector.broadcast %40 : vector<8x1xf32> to vector<8x8xf32>
    %42 = arith.mulf %39, %41 : vector<8x8xf32>
    %43 = vector.extract_strided_slice %11 {offsets = [0, 8], sizes = [8, 8], strides = [1, 1]} : vector<8x32xbf16> to vector<8x8xbf16>
    %cst_17 = arith.constant -1.000000e+30 : f32
    %44 = vector.broadcast %cst_17 : f32 to vector<8x1xf32>
    %cst_18 = arith.constant 0.000000e+00 : f32
    %45 = vector.broadcast %cst_18 : f32 to vector<8x1xf32>
    %cst_19 = arith.constant 0.000000e+00 : f32
    %46 = vector.broadcast %cst_19 : f32 to vector<8x8xf32>
    %47 = vector.extract_strided_slice %13 {offsets = [0, 8], sizes = [8, 8], strides = [1, 1]} : vector<8x32xbf16> to vector<8x8xbf16>
    %48 = vector.extract_strided_slice %15 {offsets = [0, 8], sizes = [8, 8], strides = [1, 1]} : vector<8x32xbf16> to vector<8x8xbf16>
    %cst_20 = arith.constant dense<0.000000e+00> : vector<8x8xf32>
    %49 = tpu.matmul %43, %47, %cst_20 {dimension_numbers = #tpu.dot_dimension_numbers<[1], [1], [0], [0], [0, 0, 1, 0], [], []>} : vector<8x8xbf16>, vector<8x8xbf16>, vector<8x8xf32> -> vector<8x8xf32>
    %cst_21 = arith.constant dense<0xFF800000> : vector<8xf32>
    %50 = vector.multi_reduction <maximumf>, %49, %cst_21 [1] : vector<8x8xf32> to vector<8xf32>
    %51 = vector.shape_cast %50 : vector<8xf32> to vector<8x1xf32>
    %52 = arith.maximumf %44, %51 : vector<8x1xf32>
    %53 = arith.subf %44, %52 : vector<8x1xf32>
    %54 = math.exp %53 : vector<8x1xf32>
    %55 = vector.broadcast %52 : vector<8x1xf32> to vector<8x8xf32>
    %56 = arith.subf %49, %55 : vector<8x8xf32>
    %57 = math.exp %56 : vector<8x8xf32>
    %58 = arith.mulf %54, %45 : vector<8x1xf32>
    %cst_22 = arith.constant dense<0.000000e+00> : vector<8xf32>
    %59 = vector.multi_reduction <add>, %57, %cst_22 [1] : vector<8x8xf32> to vector<8xf32>
    %60 = vector.shape_cast %59 : vector<8xf32> to vector<8x1xf32>
    %61 = arith.addf %58, %60 : vector<8x1xf32>
    %62 = vector.broadcast %54 : vector<8x1xf32> to vector<8x8xf32>
    %63 = arith.mulf %62, %46 : vector<8x8xf32>
    %64 = arith.truncf %57 : vector<8x8xf32> to vector<8x8xbf16>
    %cst_23 = arith.constant dense<0.000000e+00> : vector<8x8xf32>
    %65 = tpu.matmul %64, %48, %cst_23 {dimension_numbers = #tpu.dot_dimension_numbers<[1], [0], [0], [1], [0, 0, 1, 1], [], []>} : vector<8x8xbf16>, vector<8x8xbf16>, vector<8x8xf32> -> vector<8x8xf32>
    %66 = arith.addf %63, %65 : vector<8x8xf32>
    %67 = tpu.reciprocal %61 {approx = true} : vector<8x1xf32> -> vector<8x1xf32>
    %68 = vector.broadcast %67 : vector<8x1xf32> to vector<8x8xf32>
    %69 = arith.mulf %66, %68 : vector<8x8xf32>
    %70 = vector.extract_strided_slice %11 {offsets = [0, 16], sizes = [8, 8], strides = [1, 1]} : vector<8x32xbf16> to vector<8x8xbf16>
    %cst_24 = arith.constant -1.000000e+30 : f32
    %71 = vector.broadcast %cst_24 : f32 to vector<8x1xf32>
    %cst_25 = arith.constant 0.000000e+00 : f32
    %72 = vector.broadcast %cst_25 : f32 to vector<8x1xf32>
    %cst_26 = arith.constant 0.000000e+00 : f32
    %73 = vector.broadcast %cst_26 : f32 to vector<8x8xf32>
    %74 = vector.extract_strided_slice %13 {offsets = [0, 16], sizes = [8, 8], strides = [1, 1]} : vector<8x32xbf16> to vector<8x8xbf16>
    %75 = vector.extract_strided_slice %15 {offsets = [0, 16], sizes = [8, 8], strides = [1, 1]} : vector<8x32xbf16> to vector<8x8xbf16>
    %cst_27 = arith.constant dense<0.000000e+00> : vector<8x8xf32>
    %76 = tpu.matmul %70, %74, %cst_27 {dimension_numbers = #tpu.dot_dimension_numbers<[1], [1], [0], [0], [0, 0, 1, 0], [], []>} : vector<8x8xbf16>, vector<8x8xbf16>, vector<8x8xf32> -> vector<8x8xf32>
    %cst_28 = arith.constant dense<0xFF800000> : vector<8xf32>
    %77 = vector.multi_reduction <maximumf>, %76, %cst_28 [1] : vector<8x8xf32> to vector<8xf32>
    %78 = vector.shape_cast %77 : vector<8xf32> to vector<8x1xf32>
    %79 = arith.maximumf %71, %78 : vector<8x1xf32>
    %80 = arith.subf %71, %79 : vector<8x1xf32>
    %81 = math.exp %80 : vector<8x1xf32>
    %82 = vector.broadcast %79 : vector<8x1xf32> to vector<8x8xf32>
    %83 = arith.subf %76, %82 : vector<8x8xf32>
    %84 = math.exp %83 : vector<8x8xf32>
    %85 = arith.mulf %81, %72 : vector<8x1xf32>
    %cst_29 = arith.constant dense<0.000000e+00> : vector<8xf32>
    %86 = vector.multi_reduction <add>, %84, %cst_29 [1] : vector<8x8xf32> to vector<8xf32>
    %87 = vector.shape_cast %86 : vector<8xf32> to vector<8x1xf32>
    %88 = arith.addf %85, %87 : vector<8x1xf32>
    %89 = vector.broadcast %81 : vector<8x1xf32> to vector<8x8xf32>
    %90 = arith.mulf %89, %73 : vector<8x8xf32>
    %91 = arith.truncf %84 : vector<8x8xf32> to vector<8x8xbf16>
    %cst_30 = arith.constant dense<0.000000e+00> : vector<8x8xf32>
    %92 = tpu.matmul %91, %75, %cst_30 {dimension_numbers = #tpu.dot_dimension_numbers<[1], [0], [0], [1], [0, 0, 1, 1], [], []>} : vector<8x8xbf16>, vector<8x8xbf16>, vector<8x8xf32> -> vector<8x8xf32>
    %93 = arith.addf %90, %92 : vector<8x8xf32>
    %94 = tpu.reciprocal %88 {approx = true} : vector<8x1xf32> -> vector<8x1xf32>
    %95 = vector.broadcast %94 : vector<8x1xf32> to vector<8x8xf32>
    %96 = arith.mulf %93, %95 : vector<8x8xf32>
    %97 = vector.extract_strided_slice %11 {offsets = [0, 24], sizes = [8, 8], strides = [1, 1]} : vector<8x32xbf16> to vector<8x8xbf16>
    %cst_31 = arith.constant -1.000000e+30 : f32
    %98 = vector.broadcast %cst_31 : f32 to vector<8x1xf32>
    %cst_32 = arith.constant 0.000000e+00 : f32
    %99 = vector.broadcast %cst_32 : f32 to vector<8x1xf32>
    %cst_33 = arith.constant 0.000000e+00 : f32
    %100 = vector.broadcast %cst_33 : f32 to vector<8x8xf32>
    %101 = vector.extract_strided_slice %13 {offsets = [0, 24], sizes = [8, 8], strides = [1, 1]} : vector<8x32xbf16> to vector<8x8xbf16>
    %102 = vector.extract_strided_slice %15 {offsets = [0, 24], sizes = [8, 8], strides = [1, 1]} : vector<8x32xbf16> to vector<8x8xbf16>
    %cst_34 = arith.constant dense<0.000000e+00> : vector<8x8xf32>
    %103 = tpu.matmul %97, %101, %cst_34 {dimension_numbers = #tpu.dot_dimension_numbers<[1], [1], [0], [0], [0, 0, 1, 0], [], []>} : vector<8x8xbf16>, vector<8x8xbf16>, vector<8x8xf32> -> vector<8x8xf32>
    %cst_35 = arith.constant dense<0xFF800000> : vector<8xf32>
    %104 = vector.multi_reduction <maximumf>, %103, %cst_35 [1] : vector<8x8xf32> to vector<8xf32>
    %105 = vector.shape_cast %104 : vector<8xf32> to vector<8x1xf32>
    %106 = arith.maximumf %98, %105 : vector<8x1xf32>
    %107 = arith.subf %98, %106 : vector<8x1xf32>
    %108 = math.exp %107 : vector<8x1xf32>
    %109 = vector.broadcast %106 : vector<8x1xf32> to vector<8x8xf32>
    %110 = arith.subf %103, %109 : vector<8x8xf32>
    %111 = math.exp %110 : vector<8x8xf32>
    %112 = arith.mulf %108, %99 : vector<8x1xf32>
    %cst_36 = arith.constant dense<0.000000e+00> : vector<8xf32>
    %113 = vector.multi_reduction <add>, %111, %cst_36 [1] : vector<8x8xf32> to vector<8xf32>
    %114 = vector.shape_cast %113 : vector<8xf32> to vector<8x1xf32>
    %115 = arith.addf %112, %114 : vector<8x1xf32>
    %116 = vector.broadcast %108 : vector<8x1xf32> to vector<8x8xf32>
    %117 = arith.mulf %116, %100 : vector<8x8xf32>
    %118 = arith.truncf %111 : vector<8x8xf32> to vector<8x8xbf16>
    %cst_37 = arith.constant dense<0.000000e+00> : vector<8x8xf32>
    %119 = tpu.matmul %118, %102, %cst_37 {dimension_numbers = #tpu.dot_dimension_numbers<[1], [0], [0], [1], [0, 0, 1, 1], [], []>} : vector<8x8xbf16>, vector<8x8xbf16>, vector<8x8xf32> -> vector<8x8xf32>
    %120 = arith.addf %117, %119 : vector<8x8xf32>
    %121 = tpu.reciprocal %115 {approx = true} : vector<8x1xf32> -> vector<8x1xf32>
    %122 = vector.broadcast %121 : vector<8x1xf32> to vector<8x8xf32>
    %123 = arith.mulf %120, %122 : vector<8x8xf32>
    %124 = tpu.concatenate %42, %69, %96, %123 in 1 : vector<8x8xf32>, vector<8x8xf32>, vector<8x8xf32>, vector<8x8xf32> -> vector<8x32xf32>
    %125 = arith.truncf %124 : vector<8x32xf32> to vector<8x32xbf16>
    %cst_38 = arith.constant dense<0.000000e+00> : vector<8x32xf32>
    %126 = tpu.matmul %125, %2, %cst_38 {dimension_numbers = #tpu.dot_dimension_numbers<[1], [0], [0], [1], [0, 0, 1, 1], [], []>} : vector<8x32xbf16>, vector<32x32xbf16>, vector<8x32xf32> -> vector<8x32xf32>
    %127 = vector.broadcast %3 : vector<1x32xf32> to vector<8x32xf32>
    %128 = arith.addf %126, %127 : vector<8x32xf32>
    %c0_39 = arith.constant 0 : index
    %c0_40 = arith.constant 0 : index
    %c0_41 = arith.constant 0 : index
    %129 = vector.load %arg6[%c0_39, %c0_40, %c0_41] : memref<8x2x32xf32, #tpu.memory_space<vmem>>, vector<8x1x32xf32>
    %130 = vector.shape_cast %129 : vector<8x1x32xf32> to vector<8x32xf32>
    %131 = vector.shape_cast %128 : vector<8x32xf32> to vector<8x1x32xf32>
    tpu.vector_store %arg6[%c0_39, %c0_40, %c0_41], %131 {strides = array<i32>} : memref<8x2x32xf32, #tpu.memory_space<vmem>>, vector<8x1x32xf32>,
    %c0_42 = arith.constant 0 : index
    %c1 = arith.constant 1 : index
    %c0_43 = arith.constant 0 : index
    %132 = vector.load %arg1[%c0_42, %c1, %c0_43] : memref<8x2x32xf32, #tpu.memory_space<vmem>>, vector<8x1x32xf32>
    %133 = vector.shape_cast %132 : vector<8x1x32xf32> to vector<8x32xf32>
    %134 = arith.truncf %133 : vector<8x32xf32> to vector<8x32xbf16>
    %cst_44 = arith.constant dense<0.000000e+00> : vector<8x96xf32>
    %135 = tpu.matmul %134, %0, %cst_44 {dimension_numbers = #tpu.dot_dimension_numbers<[1], [0], [0], [1], [0, 0, 1, 1], [], []>} : vector<8x32xbf16>, vector<32x96xbf16>, vector<8x96xf32> -> vector<8x96xf32>
    %136 = vector.broadcast %1 : vector<1x96xf32> to vector<8x96xf32>
    %137 = arith.addf %135, %136 : vector<8x96xf32>
    %138 = vector.extract_strided_slice %137 {offsets = [0, 0], sizes = [8, 32], strides = [1, 1]} : vector<8x96xf32> to vector<8x32xf32>
    %139 = arith.truncf %138 : vector<8x32xf32> to vector<8x32xbf16>
    %140 = vector.extract_strided_slice %137 {offsets = [0, 32], sizes = [8, 32], strides = [1, 1]} : vector<8x96xf32> to vector<8x32xf32>
    %141 = arith.truncf %140 : vector<8x32xf32> to vector<8x32xbf16>
    %142 = vector.extract_strided_slice %137 {offsets = [0, 64], sizes = [8, 32], strides = [1, 1]} : vector<8x96xf32> to vector<8x32xf32>
    %143 = arith.truncf %142 : vector<8x32xf32> to vector<8x32xbf16>
    %144 = vector.extract_strided_slice %139 {offsets = [0, 0], sizes = [8, 8], strides = [1, 1]} : vector<8x32xbf16> to vector<8x8xbf16>
    %cst_45 = arith.constant -1.000000e+30 : f32
    %145 = vector.broadcast %cst_45 : f32 to vector<8x1xf32>
    %cst_46 = arith.constant 0.000000e+00 : f32
    %146 = vector.broadcast %cst_46 : f32 to vector<8x1xf32>
    %cst_47 = arith.constant 0.000000e+00 : f32
    %147 = vector.broadcast %cst_47 : f32 to vector<8x8xf32>
    %148 = vector.extract_strided_slice %141 {offsets = [0, 0], sizes = [8, 8], strides = [1, 1]} : vector<8x32xbf16> to vector<8x8xbf16>
    %149 = vector.extract_strided_slice %143 {offsets = [0, 0], sizes = [8, 8], strides = [1, 1]} : vector<8x32xbf16> to vector<8x8xbf16>
    %cst_48 = arith.constant dense<0.000000e+00> : vector<8x8xf32>
    %150 = tpu.matmul %144, %148, %cst_48 {dimension_numbers = #tpu.dot_dimension_numbers<[1], [1], [0], [0], [0, 0, 1, 0], [], []>} : vector<8x8xbf16>, vector<8x8xbf16>, vector<8x8xf32> -> vector<8x8xf32>
    %cst_49 = arith.constant dense<0xFF800000> : vector<8xf32>
    %151 = vector.multi_reduction <maximumf>, %150, %cst_49 [1] : vector<8x8xf32> to vector<8xf32>
    %152 = vector.shape_cast %151 : vector<8xf32> to vector<8x1xf32>
    %153 = arith.maximumf %145, %152 : vector<8x1xf32>
    %154 = arith.subf %145, %153 : vector<8x1xf32>
    %155 = math.exp %154 : vector<8x1xf32>
    %156 = vector.broadcast %153 : vector<8x1xf32> to vector<8x8xf32>
    %157 = arith.subf %150, %156 : vector<8x8xf32>
    %158 = math.exp %157 : vector<8x8xf32>
    %159 = arith.mulf %155, %146 : vector<8x1xf32>
    %cst_50 = arith.constant dense<0.000000e+00> : vector<8xf32>
    %160 = vector.multi_reduction <add>, %158, %cst_50 [1] : vector<8x8xf32> to vector<8xf32>
    %161 = vector.shape_cast %160 : vector<8xf32> to vector<8x1xf32>
    %162 = arith.addf %159, %161 : vector<8x1xf32>
    %163 = vector.broadcast %155 : vector<8x1xf32> to vector<8x8xf32>
    %164 = arith.mulf %163, %147 : vector<8x8xf32>
    %165 = arith.truncf %158 : vector<8x8xf32> to vector<8x8xbf16>
    %cst_51 = arith.constant dense<0.000000e+00> : vector<8x8xf32>
    %166 = tpu.matmul %165, %149, %cst_51 {dimension_numbers = #tpu.dot_dimension_numbers<[1], [0], [0], [1], [0, 0, 1, 1], [], []>} : vector<8x8xbf16>, vector<8x8xbf16>, vector<8x8xf32> -> vector<8x8xf32>
    %167 = arith.addf %164, %166 : vector<8x8xf32>
    %168 = tpu.reciprocal %162 {approx = true} : vector<8x1xf32> -> vector<8x1xf32>
    %169 = vector.broadcast %168 : vector<8x1xf32> to vector<8x8xf32>
    %170 = arith.mulf %167, %169 : vector<8x8xf32>
    %171 = vector.extract_strided_slice %139 {offsets = [0, 8], sizes = [8, 8], strides = [1, 1]} : vector<8x32xbf16> to vector<8x8xbf16>
    %cst_52 = arith.constant -1.000000e+30 : f32
    %172 = vector.broadcast %cst_52 : f32 to vector<8x1xf32>
    %cst_53 = arith.constant 0.000000e+00 : f32
    %173 = vector.broadcast %cst_53 : f32 to vector<8x1xf32>
    %cst_54 = arith.constant 0.000000e+00 : f32
    %174 = vector.broadcast %cst_54 : f32 to vector<8x8xf32>
    %175 = vector.extract_strided_slice %141 {offsets = [0, 8], sizes = [8, 8], strides = [1, 1]} : vector<8x32xbf16> to vector<8x8xbf16>
    %176 = vector.extract_strided_slice %143 {offsets = [0, 8], sizes = [8, 8], strides = [1, 1]} : vector<8x32xbf16> to vector<8x8xbf16>
    %cst_55 = arith.constant dense<0.000000e+00> : vector<8x8xf32>
    %177 = tpu.matmul %171, %175, %cst_55 {dimension_numbers = #tpu.dot_dimension_numbers<[1], [1], [0], [0], [0, 0, 1, 0], [], []>} : vector<8x8xbf16>, vector<8x8xbf16>, vector<8x8xf32> -> vector<8x8xf32>
    %cst_56 = arith.constant dense<0xFF800000> : vector<8xf32>
    %178 = vector.multi_reduction <maximumf>, %177, %cst_56 [1] : vector<8x8xf32> to vector<8xf32>
    %179 = vector.shape_cast %178 : vector<8xf32> to vector<8x1xf32>
    %180 = arith.maximumf %172, %179 : vector<8x1xf32>
    %181 = arith.subf %172, %180 : vector<8x1xf32>
    %182 = math.exp %181 : vector<8x1xf32>
    %183 = vector.broadcast %180 : vector<8x1xf32> to vector<8x8xf32>
    %184 = arith.subf %177, %183 : vector<8x8xf32>
    %185 = math.exp %184 : vector<8x8xf32>
    %186 = arith.mulf %182, %173 : vector<8x1xf32>
    %cst_57 = arith.constant dense<0.000000e+00> : vector<8xf32>
    %187 = vector.multi_reduction <add>, %185, %cst_57 [1] : vector<8x8xf32> to vector<8xf32>
    %188 = vector.shape_cast %187 : vector<8xf32> to vector<8x1xf32>
    %189 = arith.addf %186, %188 : vector<8x1xf32>
    %190 = vector.broadcast %182 : vector<8x1xf32> to vector<8x8xf32>
    %191 = arith.mulf %190, %174 : vector<8x8xf32>
    %192 = arith.truncf %185 : vector<8x8xf32> to vector<8x8xbf16>
    %cst_58 = arith.constant dense<0.000000e+00> : vector<8x8xf32>
    %193 = tpu.matmul %192, %176, %cst_58 {dimension_numbers = #tpu.dot_dimension_numbers<[1], [0], [0], [1], [0, 0, 1, 1], [], []>} : vector<8x8xbf16>, vector<8x8xbf16>, vector<8x8xf32> -> vector<8x8xf32>
    %194 = arith.addf %191, %193 : vector<8x8xf32>
    %195 = tpu.reciprocal %189 {approx = true} : vector<8x1xf32> -> vector<8x1xf32>
    %196 = vector.broadcast %195 : vector<8x1xf32> to vector<8x8xf32>
    %197 = arith.mulf %194, %196 : vector<8x8xf32>
    %198 = vector.extract_strided_slice %139 {offsets = [0, 16], sizes = [8, 8], strides = [1, 1]} : vector<8x32xbf16> to vector<8x8xbf16>
    %cst_59 = arith.constant -1.000000e+30 : f32
    %199 = vector.broadcast %cst_59 : f32 to vector<8x1xf32>
    %cst_60 = arith.constant 0.000000e+00 : f32
    %200 = vector.broadcast %cst_60 : f32 to vector<8x1xf32>
    %cst_61 = arith.constant 0.000000e+00 : f32
    %201 = vector.broadcast %cst_61 : f32 to vector<8x8xf32>
    %202 = vector.extract_strided_slice %141 {offsets = [0, 16], sizes = [8, 8], strides = [1, 1]} : vector<8x32xbf16> to vector<8x8xbf16>
    %203 = vector.extract_strided_slice %143 {offsets = [0, 16], sizes = [8, 8], strides = [1, 1]} : vector<8x32xbf16> to vector<8x8xbf16>
    %cst_62 = arith.constant dense<0.000000e+00> : vector<8x8xf32>
    %204 = tpu.matmul %198, %202, %cst_62 {dimension_numbers = #tpu.dot_dimension_numbers<[1], [1], [0], [0], [0, 0, 1, 0], [], []>} : vector<8x8xbf16>, vector<8x8xbf16>, vector<8x8xf32> -> vector<8x8xf32>
    %cst_63 = arith.constant dense<0xFF800000> : vector<8xf32>
    %205 = vector.multi_reduction <maximumf>, %204, %cst_63 [1] : vector<8x8xf32> to vector<8xf32>
    %206 = vector.shape_cast %205 : vector<8xf32> to vector<8x1xf32>
    %207 = arith.maximumf %199, %206 : vector<8x1xf32>
    %208 = arith.subf %199, %207 : vector<8x1xf32>
    %209 = math.exp %208 : vector<8x1xf32>
    %210 = vector.broadcast %207 : vector<8x1xf32> to vector<8x8xf32>
    %211 = arith.subf %204, %210 : vector<8x8xf32>
    %212 = math.exp %211 : vector<8x8xf32>
    %213 = arith.mulf %209, %200 : vector<8x1xf32>
    %cst_64 = arith.constant dense<0.000000e+00> : vector<8xf32>
    %214 = vector.multi_reduction <add>, %212, %cst_64 [1] : vector<8x8xf32> to vector<8xf32>
    %215 = vector.shape_cast %214 : vector<8xf32> to vector<8x1xf32>
    %216 = arith.addf %213, %215 : vector<8x1xf32>
    %217 = vector.broadcast %209 : vector<8x1xf32> to vector<8x8xf32>
    %218 = arith.mulf %217, %201 : vector<8x8xf32>
    %219 = arith.truncf %212 : vector<8x8xf32> to vector<8x8xbf16>
    %cst_65 = arith.constant dense<0.000000e+00> : vector<8x8xf32>
    %220 = tpu.matmul %219, %203, %cst_65 {dimension_numbers = #tpu.dot_dimension_numbers<[1], [0], [0], [1], [0, 0, 1, 1], [], []>} : vector<8x8xbf16>, vector<8x8xbf16>, vector<8x8xf32> -> vector<8x8xf32>
    %221 = arith.addf %218, %220 : vector<8x8xf32>
    %222 = tpu.reciprocal %216 {approx = true} : vector<8x1xf32> -> vector<8x1xf32>
    %223 = vector.broadcast %222 : vector<8x1xf32> to vector<8x8xf32>
    %224 = arith.mulf %221, %223 : vector<8x8xf32>
    %225 = vector.extract_strided_slice %139 {offsets = [0, 24], sizes = [8, 8], strides = [1, 1]} : vector<8x32xbf16> to vector<8x8xbf16>
    %cst_66 = arith.constant -1.000000e+30 : f32
    %226 = vector.broadcast %cst_66 : f32 to vector<8x1xf32>
    %cst_67 = arith.constant 0.000000e+00 : f32
    %227 = vector.broadcast %cst_67 : f32 to vector<8x1xf32>
    %cst_68 = arith.constant 0.000000e+00 : f32
    %228 = vector.broadcast %cst_68 : f32 to vector<8x8xf32>
    %229 = vector.extract_strided_slice %141 {offsets = [0, 24], sizes = [8, 8], strides = [1, 1]} : vector<8x32xbf16> to vector<8x8xbf16>
    %230 = vector.extract_strided_slice %143 {offsets = [0, 24], sizes = [8, 8], strides = [1, 1]} : vector<8x32xbf16> to vector<8x8xbf16>
    %cst_69 = arith.constant dense<0.000000e+00> : vector<8x8xf32>
    %231 = tpu.matmul %225, %229, %cst_69 {dimension_numbers = #tpu.dot_dimension_numbers<[1], [1], [0], [0], [0, 0, 1, 0], [], []>} : vector<8x8xbf16>, vector<8x8xbf16>, vector<8x8xf32> -> vector<8x8xf32>
    %cst_70 = arith.constant dense<0xFF800000> : vector<8xf32>
    %232 = vector.multi_reduction <maximumf>, %231, %cst_70 [1] : vector<8x8xf32> to vector<8xf32>
    %233 = vector.shape_cast %232 : vector<8xf32> to vector<8x1xf32>
    %234 = arith.maximumf %226, %233 : vector<8x1xf32>
    %235 = arith.subf %226, %234 : vector<8x1xf32>
    %236 = math.exp %235 : vector<8x1xf32>
    %237 = vector.broadcast %234 : vector<8x1xf32> to vector<8x8xf32>
    %238 = arith.subf %231, %237 : vector<8x8xf32>
    %239 = math.exp %238 : vector<8x8xf32>
    %240 = arith.mulf %236, %227 : vector<8x1xf32>
    %cst_71 = arith.constant dense<0.000000e+00> : vector<8xf32>
    %241 = vector.multi_reduction <add>, %239, %cst_71 [1] : vector<8x8xf32> to vector<8xf32>
    %242 = vector.shape_cast %241 : vector<8xf32> to vector<8x1xf32>
    %243 = arith.addf %240, %242 : vector<8x1xf32>
    %244 = vector.broadcast %236 : vector<8x1xf32> to vector<8x8xf32>
    %245 = arith.mulf %244, %228 : vector<8x8xf32>
    %246 = arith.truncf %239 : vector<8x8xf32> to vector<8x8xbf16>
    %cst_72 = arith.constant dense<0.000000e+00> : vector<8x8xf32>
    %247 = tpu.matmul %246, %230, %cst_72 {dimension_numbers = #tpu.dot_dimension_numbers<[1], [0], [0], [1], [0, 0, 1, 1], [], []>} : vector<8x8xbf16>, vector<8x8xbf16>, vector<8x8xf32> -> vector<8x8xf32>
    %248 = arith.addf %245, %247 : vector<8x8xf32>
    %249 = tpu.reciprocal %243 {approx = true} : vector<8x1xf32> -> vector<8x1xf32>
    %250 = vector.broadcast %249 : vector<8x1xf32> to vector<8x8xf32>
    %251 = arith.mulf %248, %250 : vector<8x8xf32>
    %252 = tpu.concatenate %170, %197, %224, %251 in 1 : vector<8x8xf32>, vector<8x8xf32>, vector<8x8xf32>, vector<8x8xf32> -> vector<8x32xf32>
    %253 = arith.truncf %252 : vector<8x32xf32> to vector<8x32xbf16>
    %cst_73 = arith.constant dense<0.000000e+00> : vector<8x32xf32>
    %254 = tpu.matmul %253, %2, %cst_73 {dimension_numbers = #tpu.dot_dimension_numbers<[1], [0], [0], [1], [0, 0, 1, 1], [], []>} : vector<8x32xbf16>, vector<32x32xbf16>, vector<8x32xf32> -> vector<8x32xf32>
    %255 = vector.broadcast %3 : vector<1x32xf32> to vector<8x32xf32>
    %256 = arith.addf %254, %255 : vector<8x32xf32>
    %c0_74 = arith.constant 0 : index
    %c1_75 = arith.constant 1 : index
    %c0_76 = arith.constant 0 : index
    %257 = vector.load %arg6[%c0_74, %c1_75, %c0_76] : memref<8x2x32xf32, #tpu.memory_space<vmem>>, vector<8x1x32xf32>
    %258 = vector.shape_cast %257 : vector<8x1x32xf32> to vector<8x32xf32>
    %259 = vector.shape_cast %256 : vector<8x32xf32> to vector<8x1x32xf32>
    tpu.vector_store %arg6[%c0_74, %c1_75, %c0_76], %259 {strides = array<i32>} : memref<8x2x32xf32, #tpu.memory_space<vmem>>, vector<8x1x32xf32>,
    return
  }
  func.func @transform_0(%arg0: i32) -> (i32, i32, i32) {
    %c0_i32 = arith.constant 0 : i32
    %c0_i32_0 = arith.constant 0 : i32
    %c0_i32_1 = arith.constant 0 : i32
    return %c0_i32, %arg0, %c0_i32_0 : i32, i32, i32
  }
  func.func @transform_1(%arg0: i32) -> (i32, i32) {
    %c0_i32 = arith.constant 0 : i32
    %c0_i32_0 = arith.constant 0 : i32
    %c0_i32_1 = arith.constant 0 : i32
    return %c0_i32, %c0_i32_0 : i32, i32
  }
  func.func @transform_2(%arg0: i32) -> (i32, i32) {
    %c0_i32 = arith.constant 0 : i32
    %c0_i32_0 = arith.constant 0 : i32
    %c0_i32_1 = arith.constant 0 : i32
    return %c0_i32, %c0_i32_0 : i32, i32
  }
  func.func @transform_3(%arg0: i32) -> (i32, i32) {
    %c0_i32 = arith.constant 0 : i32
    %c0_i32_0 = arith.constant 0 : i32
    %c0_i32_1 = arith.constant 0 : i32
    return %c0_i32, %c0_i32_0 : i32, i32
  }
  func.func @transform_4(%arg0: i32) -> (i32, i32) {
    %c0_i32 = arith.constant 0 : i32
    %c0_i32_0 = arith.constant 0 : i32
    %c0_i32_1 = arith.constant 0 : i32
    return %c0_i32, %c0_i32_0 : i32, i32
  }
  func.func @transform_5(%arg0: i32) -> (i32, i32, i32) {
    %c0_i32 = arith.constant 0 : i32
    %c0_i32_0 = arith.constant 0 : i32
    %c0_i32_1 = arith.constant 0 : i32
    return %c0_i32, %arg0, %c0_i32_0 : i32, i32, i32
  }
}

</mosaic_0001>

<llo_original>
// kernel: self_attention_layer.1
$region0: #{self_attention_layer.1}
  #allocation0 [shape = 'u32[]', space=smem, size = 0x4, offset = 0x4, fixed_abs, tag = 'smem constant byte address 0x4 - core index']
  #allocation1 [shape = 'u32[144,128]{1,0:T(1,128)}', space=vmem, size = 0x12000, scoped, tag = 'internal scratch']
  %s0 = inlined_call_operand.vmem [shape: f32[8,2,32], index: 0, kind: input, shape index: {}]
  %s1 = inlined_call_operand.vmem [shape: bf16[32,96], index: 1, kind: input, shape index: {}]
  %s2 = inlined_call_operand.vmem [shape: f32[1,96], index: 2, kind: input, shape index: {}]
  %s3 = inlined_call_operand.vmem [shape: bf16[32,32], index: 3, kind: input, shape index: {}]
  %s4 = inlined_call_operand.vmem [shape: f32[1,32], index: 4, kind: input, shape index: {}]
  %s5 = inlined_call_operand.hbm [shape: f32[8,2,32], index: 5, kind: output, shape index: {}]
  %s6 = sld [smem:[#allocation0]]
  $region30: #{self_attention_layer.1} parent=0
    _
  %s8 = ssub.s32 1, %s6
  %s9 = scalar_select 0, %s8, %s6
  $region1: #{self_attention_layer.1} parent=0
    #allocation2 [shape = 'u8[8192]{0}', space=vmem, size = 0x2000, scoped, tag = 'output window, operand 0, single buffered']
    #allocation3 [shape = 's32[1]{0}', space=sflag, size = 0x4, scoped, tag = 'scoped memory for self_attention_layer.1']
    %10 = vsyncpa [#allocation3], 0
    // Predicated region
    $region2: #{self_attention_layer.1} parent=1 // pred_check
      _
    $region3: #{self_attention_layer.1} parent=1 // pred_check_branch
      %12 = sbr.rel (0) target = $region5
    $region4: #{self_attention_layer.1} parent=1 // pred_region
      _
    $region5: #{self_attention_layer.1} parent=1 // pred_fallthru
      _
    // Predicated region
    $region6: #{self_attention_layer.1} parent=1 // pred_check
      _
    $region7: #{self_attention_layer.1} parent=1 // pred_check_branch
      %14 = sbr.rel (0) target = $region9
    $region8: #{self_attention_layer.1} parent=1 // pred_region
      _
    $region9: #{self_attention_layer.1} parent=1 // pred_fallthru
      _
    // Predicated region
    $region10: #{self_attention_layer.1} parent=1 // pred_check
      _
    $region11: #{self_attention_layer.1} parent=1 // pred_check_branch
      %16 = sbr.rel (0) target = $region13
    $region12: #{self_attention_layer.1} parent=1 // pred_region
      _
    $region13: #{self_attention_layer.1} parent=1 // pred_fallthru
      _
    // Predicated region
    $region14: #{self_attention_layer.1} parent=1 // pred_check
      _
    $region15: #{self_attention_layer.1} parent=1 // pred_check_branch
      %18 = sbr.rel (0) target = $region17
    $region16: #{self_attention_layer.1} parent=1 // pred_region
      _
    $region17: #{self_attention_layer.1} parent=1 // pred_fallthru
      _
    // Predicated region
    $region18: #{self_attention_layer.1} parent=1 // pred_check
      _
    $region19: #{self_attention_layer.1} parent=1 // pred_check_branch
      %20 = sbr.rel (0) target = $region21
    $region20: #{self_attention_layer.1} parent=1 // pred_region
      _
    $region21: #{self_attention_layer.1} parent=1 // pred_fallthru
      _
    %v22 = vld [vmem:[%s1] sm:$0xf]
    %v23 = vld [vmem:[%s1 + $0x4] sm:$0xf]
    %v24 = vld [vmem:[%s1 + $0x8] sm:$0xf]
    %v25 = vld [vmem:[%s1 + $0xc] sm:$0xf]
    %v26 = vld [vmem:[%s2] sm:$0x1]
    %v27 = vld [vmem:[%s3] sm:$0xf]
    %v28 = vld [vmem:[%s3 + $0x4] sm:$0xf]
    %v29 = vld [vmem:[%s3 + $0x8] sm:$0xf]
    %v30 = vld [vmem:[%s3 + $0xc] sm:$0xf]
    %v31 = vld [vmem:[%s4] sm:$0x1]
    %v32 = vld [vmem:[%s0] sm:$0x1]
    %v33 = vld [vmem:[%s0 + $0x2] sm:$0x1]
    %v34 = vld [vmem:[%s0 + $0x4] sm:$0x1]
    %v35 = vld [vmem:[%s0 + $0x6] sm:$0x1]
    %v36 = vld [vmem:[%s0 + $0x8] sm:$0x1]
    %v37 = vld [vmem:[%s0 + $0xa] sm:$0x1]
    %v38 = vld [vmem:[%s0 + $0xc] sm:$0x1]
    %v39 = vld [vmem:[%s0 + $0xe] sm:$0x1]
    %v40 = vpack.c.bf16 %v32, %v32
    %v41 = vpack.c.bf16 %v33, %v33
    %v42 = vpack.c.bf16 %v34, %v34
    %v43 = vpack.c.bf16 %v35, %v35
    %v44 = vpack.c.bf16 %v36, %v36
    %v45 = vpack.c.bf16 %v37, %v37
    %v46 = vpack.c.bf16 %v38, %v38
    %v47 = vpack.c.bf16 %v39, %v39
    %v49 = vlaneseq
    %v50 = vshrl.u32 %v49, 7
    %v51 = vsub.s32 0, %v50
    %v52 = vrot.slane %v26, %v51
    %v62 = vunpack.c.l.b16 %v40
    %v63 = vunpack.c.l.b16 %v41
    %v64 = vunpack.c.l.b16 %v42
    %v65 = vunpack.c.l.b16 %v43
    %v66 = vunpack.c.l.b16 %v44
    %v67 = vunpack.c.l.b16 %v45
    %v68 = vunpack.c.l.b16 %v46
    %v69 = vunpack.c.l.b16 %v47
    %v70 = vrot.slane %v63, 7
    %vm71 = vcmask 1041409
    %v72 = vsel %vm71, %v70, %v62
    %v73 = vrot.slane %v64, 6
    %vm74 = vcmask 1042434
    %v75 = vsel %vm74, %v73, %v72
    %v76 = vrot.slane %v65, 5
    %vm77 = vcmask 1043459
    %v78 = vsel %vm77, %v76, %v75
    %v79 = vrot.slane %v66, 4
    %vm80 = vcmask 1044484
    %v81 = vsel %vm80, %v79, %v78
    %v82 = vrot.slane %v67, 3
    %vm83 = vcmask 1045509
    %v84 = vsel %vm83, %v82, %v81
    %v85 = vrot.slane %v68, 2
    %vm86 = vcmask 1046534
    %v87 = vsel %vm86, %v85, %v84
    %v88 = vrot.slane %v69, 1
    %vm89 = vcmask 1047559
    %v90 = vsel %vm89, %v88, %v87
    %v91 = vpack.c.b16 %v90, %v90
    %v96 = vunpack.c.l.b16 %v22
    %v97 = vunpack.c.l.b16 %v23
    %v98 = vunpack.c.l.b16 %v24
    %v99 = vunpack.c.l.b16 %v25
    %v100 = vpack.c.b16 %v97, %v96
    %v101 = vpack.c.b16 %v99, %v98
    %vm104 = vcmask 261120
    %v106 = vsel %vm104, %v91, 0
    %108 = vmatprep.subr.bf16.mxu0 0
    %109 = vmatpush1.bf16.msra.mxu0 0
    %110 = vmatprep.subr.bf16.mxu0 0
    %111 = vmatpush1.bf16.msra.mxu0 0
    %112 = vmatprep.subr.bf16.mxu0 0
    %113 = vmatpush1.bf16.msra.mxu0 0
    %114 = vmatprep.subr.bf16.mxu0 0
    %115 = vmatpush1.bf16.msra.mxu0 0
    %116 = vmatprep.subr.bf16.mxu0 0
    %117 = vmatpush1.bf16.msra.mxu0 0
    %118 = vmatprep.subr.bf16.mxu0 0
    %119 = vmatpush1.bf16.msra.mxu0 0
    %120 = vmatprep.subr.bf16.mxu0 0
    %121 = vmatpush1.bf16.msra.mxu0 %v101
    %122 = vmatprep.subr.bf16.mxu0 0
    %123 = vmatpush1.bf16.msra.mxu0 %v100
    %124 = vmatprep.subr.bf16.mxu0 0
    %125 = vmatpush2.bf16.msra.mxu0 0
    %126 = vmatprep.subr.bf16.mxu0 0
    %127 = vmatpush2.bf16.msra.mxu0 0
    %128 = vmatprep.subr.bf16.mxu0 0
    %129 = vmatpush2.bf16.msra.mxu0 0
    %130 = vmatprep.subr.bf16.mxu0 0
    %131 = vmatpush2.bf16.msra.mxu0 0
    %132 = vmatprep.subr.bf16.mxu0 0
    %133 = vmatpush2.bf16.msra.mxu0 0
    %134 = vmatprep.subr.bf16.mxu0 0
    %135 = vmatpush2.bf16.msra.mxu0 0
    %136 = vmatprep.subr.bf16.mxu0 0
    %137 = vmatpush2.bf16.msra.mxu0 0
    %138 = vmatprep.subr.bf16.mxu0 0
    %139 = vmatpush2.bf16.msra.mxu0 0
    %140 = vmatprep.mubr.bf16.mxu0 0
    %141 = vmatmul.mubr.bf16.gmra.mxu0 %v106
    %v142 = vpop.f32.mrf.mxu0
    %v143 = vadd.f32 %v52, %v142
    %v144 = vpop.f32.mrf.mxu0
    %v145 = vpop.f32.mrf.mxu0
    %v146 = vpop.f32.mrf.mxu0
    %147 = vdwg.mxu0
    %v148 = vpack.c.bf16 %v143, %v143
    %150 = vrot.lane.b32.xlu0 %v148, 96
    %v151 = vpop.permute.xlu0 %150
    %vm152 = vcmask 64512
    %v154 = vsel %vm152, %v148, 0
    %v157 = vsel %vm152, %v151, 0
    %159 = vmatprep.subr.bf16.mxu0 0
    %160 = vmatpush1.bf16.xpose.msra.mxu0 0
    %161 = vmatprep.subr.bf16.mxu0 0
    %162 = vmatpush1.bf16.xpose.msra.mxu0 0
    %163 = vmatprep.subr.bf16.mxu0 0
    %164 = vmatpush1.bf16.xpose.msra.mxu0 0
    %165 = vmatprep.subr.bf16.mxu0 0
    %166 = vmatpush1.bf16.xpose.msra.mxu0 0
    %167 = vmatprep.subr.bf16.mxu0 0
    %168 = vmatpush1.bf16.xpose.msra.mxu0 0
    %169 = vmatprep.subr.bf16.mxu0 0
    %170 = vmatpush1.bf16.xpose.msra.mxu0 0
    %171 = vmatprep.subr.bf16.mxu0 0
    %172 = vmatpush1.bf16.xpose.msra.mxu0 0
    %173 = vmatprep.subr.bf16.mxu0 0
    %174 = vmatpush1.bf16.xpose.msra.mxu0 %v157
    %175 = vmatprep.subr.bf16.mxu0 0
    %176 = vmatpush2.bf16.xpose.msra.mxu0 0
    %177 = vmatprep.subr.bf16.mxu0 0
    %178 = vmatpush2.bf16.xpose.msra.mxu0 0
    %179 = vmatprep.subr.bf16.mxu0 0
    %180 = vmatpush2.bf16.xpose.msra.mxu0 0
    %181 = vmatprep.subr.bf16.mxu0 0
    %182 = vmatpush2.bf16.xpose.msra.mxu0 0
    %183 = vmatprep.subr.bf16.mxu0 0
    %184 = vmatpush2.bf16.xpose.msra.mxu0 0
    %185 = vmatprep.subr.bf16.mxu0 0
    %186 = vmatpush2.bf16.xpose.msra.mxu0 0
    %187 = vmatprep.subr.bf16.mxu0 0
    %188 = vmatpush2.bf16.xpose.msra.mxu0 0
    %189 = vmatprep.subr.bf16.mxu0 0
    %190 = vmatpush2.bf16.xpose.msra.mxu0 0
    %191 = vmatprep.mubr.bf16.mxu0 0
    %192 = vmatmul.mubr.bf16.gmra.mxu0 %v154
    %v193 = vpop.f32.mrf.mxu0
    %v194 = vadd.f32 0.0, %v193
    %v195 = vpop.f32.mrf.mxu0
    %v196 = vpop.f32.mrf.mxu0
    %v197 = vpop.f32.mrf.mxu0
    %198 = vdwg.mxu0
    %v199 = vsel %vm152, %v194, -inf
    %200 = vmax.xlane.f32.xlu0 %v199
    %v201 = vpop.xlane.xlu0 %200
    %v202 = vmax.f32 %v201, -1e+30
    %v203 = vsub.f32 -1e+30, %v202
    %v204 = vmul.f32 %v203, 1.442695
    %v205 = vpow.pop %v204
    %v206 = vsub.f32 %v194, %v202
    %v207 = vmul.f32 %v206, 1.442695
    %v208 = vpow.pop %v207
    %v209 = vmul.f32 %v205, 0.0
    %v210 = vsel %vm152, %v208, 0.0
    %211 = vadd.xlane.f32.xlu0 %v210
    %v212 = vpop.xlane.xlu0 %211
    %v213 = vadd.f32 %v209, %v212
    %v214 = vpack.c.bf16 %v208, %v208
    %215 = vrot.lane.b32.xlu0 %v148, 64
    %v216 = vpop.permute.xlu0 %215
    %v218 = vsel %vm152, %v214, 0
    %vm220 = vcmask 1043456
    %v222 = vsel %vm220, %v216, 0
    %224 = vmatprep.subr.bf16.mxu0 0
    %225 = vmatpush1.bf16.msra.mxu0 0
    %226 = vmatprep.subr.bf16.mxu0 0
    %227 = vmatpush1.bf16.msra.mxu0 0
    %228 = vmatprep.subr.bf16.mxu0 0
    %229 = vmatpush1.bf16.msra.mxu0 0
    %230 = vmatprep.subr.bf16.mxu0 0
    %231 = vmatpush1.bf16.msra.mxu0 0
    %232 = vmatprep.subr.bf16.mxu0 0
    %233 = vmatpush1.bf16.msra.mxu0 0
    %234 = vmatprep.subr.bf16.mxu0 0
    %235 = vmatpush1.bf16.msra.mxu0 0
    %236 = vmatprep.subr.bf16.mxu0 0
    %237 = vmatpush1.bf16.msra.mxu0 0
    %238 = vmatprep.subr.bf16.mxu0 0
    %239 = vmatpush1.bf16.msra.mxu0 %v222
    %240 = vmatprep.subr.bf16.mxu0 0
    %241 = vmatpush2.bf16.msra.mxu0 0
    %242 = vmatprep.subr.bf16.mxu0 0
    %243 = vmatpush2.bf16.msra.mxu0 0
    %244 = vmatprep.subr.bf16.mxu0 0
    %245 = vmatpush2.bf16.msra.mxu0 0
    %246 = vmatprep.subr.bf16.mxu0 0
    %247 = vmatpush2.bf16.msra.mxu0 0
    %248 = vmatprep.subr.bf16.mxu0 0
    %249 = vmatpush2.bf16.msra.mxu0 0
    %250 = vmatprep.subr.bf16.mxu0 0
    %251 = vmatpush2.bf16.msra.mxu0 0
    %252 = vmatprep.subr.bf16.mxu0 0
    %253 = vmatpush2.bf16.msra.mxu0 0
    %254 = vmatprep.subr.bf16.mxu0 0
    %255 = vmatpush2.bf16.msra.mxu0 0
    %256 = vmatprep.mubr.bf16.mxu0 0
    %257 = vmatmul.mubr.bf16.gmra.mxu0 %v218
    %v258 = vpop.f32.mrf.mxu0
    %v259 = vadd.f32 0.0, %v258
    %v260 = vpop.f32.mrf.mxu0
    %v261 = vpop.f32.mrf.mxu0
    %v262 = vpop.f32.mrf.mxu0
    %263 = vdwg.mxu0
    %v264 = vadd.f32 %v209, %v259
    %v265 = vrcp.pop %v213
    %v266 = vmul.f32 %v264, %v265
    %267 = vrot.lane.b32.xlu0 %v148, 120
    %v268 = vpop.permute.xlu0 %267
    %269 = vrot.lane.b32.xlu0 %v148, 88
    %v270 = vpop.permute.xlu0 %269
    %v272 = vsel %vm152, %v268, 0
    %v275 = vsel %vm152, %v270, 0
    %277 = vmatprep.subr.bf16.mxu0 0
    %278 = vmatpush1.bf16.xpose.msra.mxu0 0
    %279 = vmatprep.subr.bf16.mxu0 0
    %280 = vmatpush1.bf16.xpose.msra.mxu0 0
    %281 = vmatprep.subr.bf16.mxu0 0
    %282 = vmatpush1.bf16.xpose.msra.mxu0 0
    %283 = vmatprep.subr.bf16.mxu0 0
    %284 = vmatpush1.bf16.xpose.msra.mxu0 0
    %285 = vmatprep.subr.bf16.mxu0 0
    %286 = vmatpush1.bf16.xpose.msra.mxu0 0
    %287 = vmatprep.subr.bf16.mxu0 0
    %288 = vmatpush1.bf16.xpose.msra.mxu0 0
    %289 = vmatprep.subr.bf16.mxu0 0
    %290 = vmatpush1.bf16.xpose.msra.mxu0 0
    %291 = vmatprep.subr.bf16.mxu0 0
    %292 = vmatpush1.bf16.xpose.msra.mxu0 %v275
    %293 = vmatprep.subr.bf16.mxu0 0
    %294 = vmatpush2.bf16.xpose.msra.mxu0 0
    %295 = vmatprep.subr.bf16.mxu0 0
    %296 = vmatpush2.bf16.xpose.msra.mxu0 0
    %297 = vmatprep.subr.bf16.mxu0 0
    %298 = vmatpush2.bf16.xpose.msra.mxu0 0
    %299 = vmatprep.subr.bf16.mxu0 0
    %300 = vmatpush2.bf16.xpose.msra.mxu0 0
    %301 = vmatprep.subr.bf16.mxu0 0
    %302 = vmatpush2.bf16.xpose.msra.mxu0 0
    %303 = vmatprep.subr.bf16.mxu0 0
    %304 = vmatpush2.bf16.xpose.msra.mxu0 0
    %305 = vmatprep.subr.bf16.mxu0 0
    %306 = vmatpush2.bf16.xpose.msra.mxu0 0
    %307 = vmatprep.subr.bf16.mxu0 0
    %308 = vmatpush2.bf16.xpose.msra.mxu0 0
    %309 = vmatprep.mubr.bf16.mxu0 0
    %310 = vmatmul.mubr.bf16.gmra.mxu0 %v272
    %v311 = vpop.f32.mrf.mxu0
    %v312 = vadd.f32 0.0, %v311
    %v313 = vpop.f32.mrf.mxu0
    %v314 = vpop.f32.mrf.mxu0
    %v315 = vpop.f32.mrf.mxu0
    %316 = vdwg.mxu0
    %v317 = vsel %vm152, %v312, -inf
    %318 = vmax.xlane.f32.xlu0 %v317
    %v319 = vpop.xlane.xlu0 %318
    %v320 = vmax.f32 %v319, -1e+30
    %v321 = vsub.f32 -1e+30, %v320
    %v322 = vmul.f32 %v321, 1.442695
    %v323 = vpow.pop %v322
    %v324 = vsub.f32 %v312, %v320
    %v325 = vmul.f32 %v324, 1.442695
    %v326 = vpow.pop %v325
    %v327 = vmul.f32 %v323, 0.0
    %v328 = vsel %vm152, %v326, 0.0
    %329 = vadd.xlane.f32.xlu0 %v328
    %v330 = vpop.xlane.xlu0 %329
    %v331 = vadd.f32 %v327, %v330
    %v332 = vpack.c.bf16 %v326, %v326
    %333 = vrot.lane.b32.xlu0 %v148, 56
    %v334 = vpop.permute.xlu0 %333
    %v336 = vsel %vm152, %v332, 0
    %v339 = vsel %vm220, %v334, 0
    %341 = vmatprep.subr.bf16.mxu0 0
    %342 = vmatpush1.bf16.msra.mxu0 0
    %343 = vmatprep.subr.bf16.mxu0 0
    %344 = vmatpush1.bf16.msra.mxu0 0
    %345 = vmatprep.subr.bf16.mxu0 0
    %346 = vmatpush1.bf16.msra.mxu0 0
    %347 = vmatprep.subr.bf16.mxu0 0
    %348 = vmatpush1.bf16.msra.mxu0 0
    %349 = vmatprep.subr.bf16.mxu0 0
    %350 = vmatpush1.bf16.msra.mxu0 0
    %351 = vmatprep.subr.bf16.mxu0 0
    %352 = vmatpush1.bf16.msra.mxu0 0
    %353 = vmatprep.subr.bf16.mxu0 0
    %354 = vmatpush1.bf16.msra.mxu0 0
    %355 = vmatprep.subr.bf16.mxu0 0
    %356 = vmatpush1.bf16.msra.mxu0 %v339
    %357 = vmatprep.subr.bf16.mxu0 0
    %358 = vmatpush2.bf16.msra.mxu0 0
    %359 = vmatprep.subr.bf16.mxu0 0
    %360 = vmatpush2.bf16.msra.mxu0 0
    %361 = vmatprep.subr.bf16.mxu0 0
    %362 = vmatpush2.bf16.msra.mxu0 0
    %363 = vmatprep.subr.bf16.mxu0 0
    %364 = vmatpush2.bf16.msra.mxu0 0
    %365 = vmatprep.subr.bf16.mxu0 0
    %366 = vmatpush2.bf16.msra.mxu0 0
    %367 = vmatprep.subr.bf16.mxu0 0
    %368 = vmatpush2.bf16.msra.mxu0 0
    %369 = vmatprep.subr.bf16.mxu0 0
    %370 = vmatpush2.bf16.msra.mxu0 0
    %371 = vmatprep.subr.bf16.mxu0 0
    %372 = vmatpush2.bf16.msra.mxu0 0
    %373 = vmatprep.mubr.bf16.mxu0 0
    %374 = vmatmul.mubr.bf16.gmra.mxu0 %v336
    %v375 = vpop.f32.mrf.mxu0
    %v376 = vadd.f32 0.0, %v375
    %v377 = vpop.f32.mrf.mxu0
    %v378 = vpop.f32.mrf.mxu0
    %v379 = vpop.f32.mrf.mxu0
    %380 = vdwg.mxu0
    %v381 = vadd.f32 %v327, %v376
    %v382 = vrcp.pop %v331
    %v383 = vmul.f32 %v381, %v382
    %384 = vrot.lane.b32.xlu0 %v148, 112
    %v385 = vpop.permute.xlu0 %384
    %386 = vrot.lane.b32.xlu0 %v148, 80
    %v387 = vpop.permute.xlu0 %386
    %v389 = vsel %vm152, %v385, 0
    %v392 = vsel %vm152, %v387, 0
    %394 = vmatprep.subr.bf16.mxu0 0
    %395 = vmatpush1.bf16.xpose.msra.mxu0 0
    %396 = vmatprep.subr.bf16.mxu0 0
    %397 = vmatpush1.bf16.xpose.msra.mxu0 0
    %398 = vmatprep.subr.bf16.mxu0 0
    %399 = vmatpush1.bf16.xpose.msra.mxu0 0
    %400 = vmatprep.subr.bf16.mxu0 0
    %401 = vmatpush1.bf16.xpose.msra.mxu0 0
    %402 = vmatprep.subr.bf16.mxu0 0
    %403 = vmatpush1.bf16.xpose.msra.mxu0 0
    %404 = vmatprep.subr.bf16.mxu0 0
    %405 = vmatpush1.bf16.xpose.msra.mxu0 0
    %406 = vmatprep.subr.bf16.mxu0 0
    %407 = vmatpush1.bf16.xpose.msra.mxu0 0
    %408 = vmatprep.subr.bf16.mxu0 0
    %409 = vmatpush1.bf16.xpose.msra.mxu0 %v392
    %410 = vmatprep.subr.bf16.mxu0 0
    %411 = vmatpush2.bf16.xpose.msra.mxu0 0
    %412 = vmatprep.subr.bf16.mxu0 0
    %413 = vmatpush2.bf16.xpose.msra.mxu0 0
    %414 = vmatprep.subr.bf16.mxu0 0
    %415 = vmatpush2.bf16.xpose.msra.mxu0 0
    %416 = vmatprep.subr.bf16.mxu0 0
    %417 = vmatpush2.bf16.xpose.msra.mxu0 0
    %418 = vmatprep.subr.bf16.mxu0 0
    %419 = vmatpush2.bf16.xpose.msra.mxu0 0
    %420 = vmatprep.subr.bf16.mxu0 0
    %421 = vmatpush2.bf16.xpose.msra.mxu0 0
    %422 = vmatprep.subr.bf16.mxu0 0
    %423 = vmatpush2.bf16.xpose.msra.mxu0 0
    %424 = vmatprep.subr.bf16.mxu0 0
    %425 = vmatpush2.bf16.xpose.msra.mxu0 0
    %426 = vmatprep.mubr.bf16.mxu0 0
    %427 = vmatmul.mubr.bf16.gmra.mxu0 %v389
    %v428 = vpop.f32.mrf.mxu0
    %v429 = vadd.f32 0.0, %v428
    %v430 = vpop.f32.mrf.mxu0
    %v431 = vpop.f32.mrf.mxu0
    %v432 = vpop.f32.mrf.mxu0
    %433 = vdwg.mxu0
    %v434 = vsel %vm152, %v429, -inf
    %435 = vmax.xlane.f32.xlu0 %v434
    %v436 = vpop.xlane.xlu0 %435
    %v437 = vmax.f32 %v436, -1e+30
    %v438 = vsub.f32 -1e+30, %v437
    %v439 = vmul.f32 %v438, 1.442695
    %v440 = vpow.pop %v439
    %v441 = vsub.f32 %v429, %v437
    %v442 = vmul.f32 %v441, 1.442695
    %v443 = vpow.pop %v442
    %v444 = vmul.f32 %v440, 0.0
    %v445 = vsel %vm152, %v443, 0.0
    %446 = vadd.xlane.f32.xlu0 %v445
    %v447 = vpop.xlane.xlu0 %446
    %v448 = vadd.f32 %v444, %v447
    %v449 = vpack.c.bf16 %v443, %v443
    %450 = vrot.lane.b32.xlu0 %v148, 48
    %v451 = vpop.permute.xlu0 %450
    %v453 = vsel %vm152, %v449, 0
    %v456 = vsel %vm220, %v451, 0
    %458 = vmatprep.subr.bf16.mxu0 0
    %459 = vmatpush1.bf16.msra.mxu0 0
    %460 = vmatprep.subr.bf16.mxu0 0
    %461 = vmatpush1.bf16.msra.mxu0 0
    %462 = vmatprep.subr.bf16.mxu0 0
    %463 = vmatpush1.bf16.msra.mxu0 0
    %464 = vmatprep.subr.bf16.mxu0 0
    %465 = vmatpush1.bf16.msra.mxu0 0
    %466 = vmatprep.subr.bf16.mxu0 0
    %467 = vmatpush1.bf16.msra.mxu0 0
    %468 = vmatprep.subr.bf16.mxu0 0
    %469 = vmatpush1.bf16.msra.mxu0 0
    %470 = vmatprep.subr.bf16.mxu0 0
    %471 = vmatpush1.bf16.msra.mxu0 0
    %472 = vmatprep.subr.bf16.mxu0 0
    %473 = vmatpush1.bf16.msra.mxu0 %v456
    %474 = vmatprep.subr.bf16.mxu0 0
    %475 = vmatpush2.bf16.msra.mxu0 0
    %476 = vmatprep.subr.bf16.mxu0 0
    %477 = vmatpush2.bf16.msra.mxu0 0
    %478 = vmatprep.subr.bf16.mxu0 0
    %479 = vmatpush2.bf16.msra.mxu0 0
    %480 = vmatprep.subr.bf16.mxu0 0
    %481 = vmatpush2.bf16.msra.mxu0 0
    %482 = vmatprep.subr.bf16.mxu0 0
    %483 = vmatpush2.bf16.msra.mxu0 0
    %484 = vmatprep.subr.bf16.mxu0 0
    %485 = vmatpush2.bf16.msra.mxu0 0
    %486 = vmatprep.subr.bf16.mxu0 0
    %487 = vmatpush2.bf16.msra.mxu0 0
    %488 = vmatprep.subr.bf16.mxu0 0
    %489 = vmatpush2.bf16.msra.mxu0 0
    %490 = vmatprep.mubr.bf16.mxu0 0
    %491 = vmatmul.mubr.bf16.gmra.mxu0 %v453
    %v492 = vpop.f32.mrf.mxu0
    %v493 = vadd.f32 0.0, %v492
    %v494 = vpop.f32.mrf.mxu0
    %v495 = vpop.f32.mrf.mxu0
    %v496 = vpop.f32.mrf.mxu0
    %497 = vdwg.mxu0
    %v498 = vadd.f32 %v444, %v493
    %v499 = vrcp.pop %v448
    %v500 = vmul.f32 %v498, %v499
    %501 = vrot.lane.b32.xlu0 %v148, 104
    %v502 = vpop.permute.xlu0 %501
    %503 = vrot.lane.b32.xlu0 %v148, 72
    %v504 = vpop.permute.xlu0 %503
    %v506 = vsel %vm152, %v502, 0
    %v509 = vsel %vm152, %v504, 0
    %511 = vmatprep.subr.bf16.mxu0 0
    %512 = vmatpush1.bf16.xpose.msra.mxu0 0
    %513 = vmatprep.subr.bf16.mxu0 0
    %514 = vmatpush1.bf16.xpose.msra.mxu0 0
    %515 = vmatprep.subr.bf16.mxu0 0
    %516 = vmatpush1.bf16.xpose.msra.mxu0 0
    %517 = vmatprep.subr.bf16.mxu0 0
    %518 = vmatpush1.bf16.xpose.msra.mxu0 0
    %519 = vmatprep.subr.bf16.mxu0 0
    %520 = vmatpush1.bf16.xpose.msra.mxu0 0
    %521 = vmatprep.subr.bf16.mxu0 0
    %522 = vmatpush1.bf16.xpose.msra.mxu0 0
    %523 = vmatprep.subr.bf16.mxu0 0
    %524 = vmatpush1.bf16.xpose.msra.mxu0 0
    %525 = vmatprep.subr.bf16.mxu0 0
    %526 = vmatpush1.bf16.xpose.msra.mxu0 %v509
    %527 = vmatprep.subr.bf16.mxu0 0
    %528 = vmatpush2.bf16.xpose.msra.mxu0 0
    %529 = vmatprep.subr.bf16.mxu0 0
    %530 = vmatpush2.bf16.xpose.msra.mxu0 0
    %531 = vmatprep.subr.bf16.mxu0 0
    %532 = vmatpush2.bf16.xpose.msra.mxu0 0
    %533 = vmatprep.subr.bf16.mxu0 0
    %534 = vmatpush2.bf16.xpose.msra.mxu0 0
    %535 = vmatprep.subr.bf16.mxu0 0
    %536 = vmatpush2.bf16.xpose.msra.mxu0 0
    %537 = vmatprep.subr.bf16.mxu0 0
    %538 = vmatpush2.bf16.xpose.msra.mxu0 0
    %539 = vmatprep.subr.bf16.mxu0 0
    %540 = vmatpush2.bf16.xpose.msra.mxu0 0
    %541 = vmatprep.subr.bf16.mxu0 0
    %542 = vmatpush2.bf16.xpose.msra.mxu0 0
    %543 = vmatprep.mubr.bf16.mxu0 0
    %544 = vmatmul.mubr.bf16.gmra.mxu0 %v506
    %v545 = vpop.f32.mrf.mxu0
    %v546 = vadd.f32 0.0, %v545
    %v547 = vpop.f32.mrf.mxu0
    %v548 = vpop.f32.mrf.mxu0
    %v549 = vpop.f32.mrf.mxu0
    %550 = vdwg.mxu0
    %v551 = vsel %vm152, %v546, -inf
    %552 = vmax.xlane.f32.xlu0 %v551
    %v553 = vpop.xlane.xlu0 %552
    %v554 = vmax.f32 %v553, -1e+30
    %v555 = vsub.f32 -1e+30, %v554
    %v556 = vmul.f32 %v555, 1.442695
    %v557 = vpow.pop %v556
    %v558 = vsub.f32 %v546, %v554
    %v559 = vmul.f32 %v558, 1.442695
    %v560 = vpow.pop %v559
    %v561 = vmul.f32 %v557, 0.0
    %v562 = vsel %vm152, %v560, 0.0
    %563 = vadd.xlane.f32.xlu0 %v562
    %v564 = vpop.xlane.xlu0 %563
    %v565 = vadd.f32 %v561, %v564
    %v566 = vpack.c.bf16 %v560, %v560
    %567 = vrot.lane.b32.xlu0 %v148, 40
    %v568 = vpop.permute.xlu0 %567
    %v570 = vsel %vm152, %v566, 0
    %v573 = vsel %vm220, %v568, 0
    %575 = vmatprep.subr.bf16.mxu0 0
    %576 = vmatpush1.bf16.msra.mxu0 0
    %577 = vmatprep.subr.bf16.mxu0 0
    %578 = vmatpush1.bf16.msra.mxu0 0
    %579 = vmatprep.subr.bf16.mxu0 0
    %580 = vmatpush1.bf16.msra.mxu0 0
    %581 = vmatprep.subr.bf16.mxu0 0
    %582 = vmatpush1.bf16.msra.mxu0 0
    %583 = vmatprep.subr.bf16.mxu0 0
    %584 = vmatpush1.bf16.msra.mxu0 0
    %585 = vmatprep.subr.bf16.mxu0 0
    %586 = vmatpush1.bf16.msra.mxu0 0
    %587 = vmatprep.subr.bf16.mxu0 0
    %588 = vmatpush1.bf16.msra.mxu0 0
    %589 = vmatprep.subr.bf16.mxu0 0
    %590 = vmatpush1.bf16.msra.mxu0 %v573
    %591 = vmatprep.subr.bf16.mxu0 0
    %592 = vmatpush2.bf16.msra.mxu0 0
    %593 = vmatprep.subr.bf16.mxu0 0
    %594 = vmatpush2.bf16.msra.mxu0 0
    %595 = vmatprep.subr.bf16.mxu0 0
    %596 = vmatpush2.bf16.msra.mxu0 0
    %597 = vmatprep.subr.bf16.mxu0 0
    %598 = vmatpush2.bf16.msra.mxu0 0
    %599 = vmatprep.subr.bf16.mxu0 0
    %600 = vmatpush2.bf16.msra.mxu0 0
    %601 = vmatprep.subr.bf16.mxu0 0
    %602 = vmatpush2.bf16.msra.mxu0 0
    %603 = vmatprep.subr.bf16.mxu0 0
    %604 = vmatpush2.bf16.msra.mxu0 0
    %605 = vmatprep.subr.bf16.mxu0 0
    %606 = vmatpush2.bf16.msra.mxu0 0
    %607 = vmatprep.mubr.bf16.mxu0 0
    %608 = vmatmul.mubr.bf16.gmra.mxu0 %v570
    %v609 = vpop.f32.mrf.mxu0
    %v610 = vadd.f32 0.0, %v609
    %v611 = vpop.f32.mrf.mxu0
    %v612 = vpop.f32.mrf.mxu0
    %v613 = vpop.f32.mrf.mxu0
    %614 = vdwg.mxu0
    %v615 = vadd.f32 %v561, %v610
    %v616 = vrcp.pop %v565
    %v617 = vmul.f32 %v615, %v616
    %619 = vrot.lane.b32.xlu0 %v383, 8
    %v620 = vpop.permute.xlu0 %619
    %623 = vrot.lane.b32.xlu0 %v500, 16
    %v624 = vpop.permute.xlu0 %623
    %627 = vrot.lane.b32.xlu0 %v617, 24
    %v628 = vpop.permute.xlu0 %627
    %v630 = vsel %vm152, %v266, %v620
    %vm631 = vcmask 130048
    %v632 = vsel %vm631, %v630, %v624
    %vm633 = vcmask 195584
    %v634 = vsel %vm633, %v632, %v628
    %v635 = vpack.c.bf16 %v634, %v634
    %v637 = vlaneseq
    %v638 = vshrl.u32 %v637, 7
    %v639 = vsub.s32 0, %v638
    %v640 = vrot.slane %v31, %v639
    %v646 = vunpack.c.l.b16 %v27
    %v647 = vunpack.c.l.b16 %v28
    %v648 = vunpack.c.l.b16 %v29
    %v649 = vunpack.c.l.b16 %v30
    %v650 = vpack.c.b16 %v647, %v646
    %v651 = vpack.c.b16 %v649, %v648
    %v655 = vsel %vm104, %v635, 0
    %657 = vmatprep.subr.bf16.mxu0 0
    %658 = vmatpush1.bf16.msra.mxu0 0
    %659 = vmatprep.subr.bf16.mxu0 0
    %660 = vmatpush1.bf16.msra.mxu0 0
    %661 = vmatprep.subr.bf16.mxu0 0
    %662 = vmatpush1.bf16.msra.mxu0 0
    %663 = vmatprep.subr.bf16.mxu0 0
    %664 = vmatpush1.bf16.msra.mxu0 0
    %665 = vmatprep.subr.bf16.mxu0 0
    %666 = vmatpush1.bf16.msra.mxu0 0
    %667 = vmatprep.subr.bf16.mxu0 0
    %668 = vmatpush1.bf16.msra.mxu0 0
    %669 = vmatprep.subr.bf16.mxu0 0
    %670 = vmatpush1.bf16.msra.mxu0 %v651
    %671 = vmatprep.subr.bf16.mxu0 0
    %672 = vmatpush1.bf16.msra.mxu0 %v650
    %673 = vmatprep.subr.bf16.mxu0 0
    %674 = vmatpush2.bf16.msra.mxu0 0
    %675 = vmatprep.subr.bf16.mxu0 0
    %676 = vmatpush2.bf16.msra.mxu0 0
    %677 = vmatprep.subr.bf16.mxu0 0
    %678 = vmatpush2.bf16.msra.mxu0 0
    %679 = vmatprep.subr.bf16.mxu0 0
    %680 = vmatpush2.bf16.msra.mxu0 0
    %681 = vmatprep.subr.bf16.mxu0 0
    %682 = vmatpush2.bf16.msra.mxu0 0
    %683 = vmatprep.subr.bf16.mxu0 0
    %684 = vmatpush2.bf16.msra.mxu0 0
    %685 = vmatprep.subr.bf16.mxu0 0
    %686 = vmatpush2.bf16.msra.mxu0 0
    %687 = vmatprep.subr.bf16.mxu0 0
    %688 = vmatpush2.bf16.msra.mxu0 0
    %689 = vmatprep.mubr.bf16.mxu0 0
    %690 = vmatmul.mubr.bf16.gmra.mxu0 %v655
    %v691 = vpop.f32.mrf.mxu0
    %v692 = vadd.f32 %v640, %v691
    %v693 = vpop.f32.mrf.mxu0
    %v694 = vpop.f32.mrf.mxu0
    %v695 = vpop.f32.mrf.mxu0
    %696 = vdwg.mxu0
    %v698 = vcombine.high %v692, %v692
    %v700 = vunpack.c.l.s4 1966171168
    %v701 = vunpack.c.0.s8 %v700
    %v702 = vlaneseq
    %v703 = vshrl.u32 %v702, 7
    %v704 = vsub.s32 %v701, %v703
    %v705 = vrot.slane %v692, %v704
    %v707 = vunpack.c.l.s4 1966171168
    %v708 = vunpack.c.0.s8 %v707
    %v709 = vlaneseq
    %v710 = vshrl.u32 %v709, 7
    %v711 = vsub.s32 %v708, %v710
    %v712 = vrot.slane %v698, %v711
    %v713 = vcombine.high %v705, %v705
    %v714 = vcombine.high %v712, %v712
    %v716 = vunpack.c.l.s4 1966171168
    %v717 = vunpack.c.0.s8 %v716
    %v718 = vlaneseq
    %v719 = vshrl.u32 %v718, 7
    %v720 = vsub.s32 %v717, %v719
    %v721 = vrot.slane %v705, %v720
    %v723 = vunpack.c.l.s4 1966171168
    %v724 = vunpack.c.0.s8 %v723
    %v725 = vlaneseq
    %v726 = vshrl.u32 %v725, 7
    %v727 = vsub.s32 %v724, %v726
    %v728 = vrot.slane %v712, %v727
    %v730 = vunpack.c.l.s4 1966171168
    %v731 = vunpack.c.0.s8 %v730
    %v732 = vlaneseq
    %v733 = vshrl.u32 %v732, 7
    %v734 = vsub.s32 %v731, %v733
    %v735 = vrot.slane %v713, %v734
    %v737 = vunpack.c.l.s4 1966171168
    %v738 = vunpack.c.0.s8 %v737
    %v739 = vlaneseq
    %v740 = vshrl.u32 %v739, 7
    %v741 = vsub.s32 %v738, %v740
    %v742 = vrot.slane %v714, %v741
    %v743 = vcombine.high %v721, %v721
    %v744 = vcombine.high %v728, %v728
    %v745 = vcombine.high %v735, %v735
    %v746 = vcombine.high %v742, %v742
    %vm755 = vcmask 253952
    %756 = vst.msk [vmem:[#allocation2] sm:$0x1] %vm755, %v721
    %757 = vst.msk [vmem:[#allocation2 + $0x2] sm:$0x1] %vm755, %v735
    %758 = vst.msk [vmem:[#allocation2 + $0x4] sm:$0x1] %vm755, %v743
    %759 = vst.msk [vmem:[#allocation2 + $0x6] sm:$0x1] %vm755, %v745
    %760 = vst.msk [vmem:[#allocation2 + $0x8] sm:$0x1] %vm755, %v728
    %761 = vst.msk [vmem:[#allocation2 + $0xa] sm:$0x1] %vm755, %v742
    %762 = vst.msk [vmem:[#allocation2 + $0xc] sm:$0x1] %vm755, %v744
    %763 = vst.msk [vmem:[#allocation2 + $0xe] sm:$0x1] %vm755, %v746
    %v764 = vld [vmem:[%s0 + $0x1] sm:$0x1]
    %v765 = vld [vmem:[%s0 + $0x3] sm:$0x1]
    %v766 = vld [vmem:[%s0 + $0x5] sm:$0x1]
    %v767 = vld [vmem:[%s0 + $0x7] sm:$0x1]
    %v768 = vld [vmem:[%s0 + $0x9] sm:$0x1]
    %v769 = vld [vmem:[%s0 + $0xb] sm:$0x1]
    %v770 = vld [vmem:[%s0 + $0xd] sm:$0x1]
    %v771 = vld [vmem:[%s0 + $0xf] sm:$0x1]
    %v772 = vpack.c.bf16 %v764, %v764
    %v773 = vpack.c.bf16 %v765, %v765
    %v774 = vpack.c.bf16 %v766, %v766
    %v775 = vpack.c.bf16 %v767, %v767
    %v776 = vpack.c.bf16 %v768, %v768
    %v777 = vpack.c.bf16 %v769, %v769
    %v778 = vpack.c.bf16 %v770, %v770
    %v779 = vpack.c.bf16 %v771, %v771
    %v788 = vunpack.c.l.b16 %v772
    %v789 = vunpack.c.l.b16 %v773
    %v790 = vunpack.c.l.b16 %v774
    %v791 = vunpack.c.l.b16 %v775
    %v792 = vunpack.c.l.b16 %v776
    %v793 = vunpack.c.l.b16 %v777
    %v794 = vunpack.c.l.b16 %v778
    %v795 = vunpack.c.l.b16 %v779
    %v796 = vrot.slane %v789, 7
    %v797 = vsel %vm71, %v796, %v788
    %v798 = vrot.slane %v790, 6
    %v799 = vsel %vm74, %v798, %v797
    %v800 = vrot.slane %v791, 5
    %v801 = vsel %vm77, %v800, %v799
    %v802 = vrot.slane %v792, 4
    %v803 = vsel %vm80, %v802, %v801
    %v804 = vrot.slane %v793, 3
    %v805 = vsel %vm83, %v804, %v803
    %v806 = vrot.slane %v794, 2
    %v807 = vsel %vm86, %v806, %v805
    %v808 = vrot.slane %v795, 1
    %v809 = vsel %vm89, %v808, %v807
    %v810 = vpack.c.b16 %v809, %v809
    %v812 = vsel %vm104, %v810, 0
    %814 = vmatprep.subr.bf16.mxu0 0
    %815 = vmatpush1.bf16.msra.mxu0 0
    %816 = vmatprep.subr.bf16.mxu0 0
    %817 = vmatpush1.bf16.msra.mxu0 0
    %818 = vmatprep.subr.bf16.mxu0 0
    %819 = vmatpush1.bf16.msra.mxu0 0
    %820 = vmatprep.subr.bf16.mxu0 0
    %821 = vmatpush1.bf16.msra.mxu0 0
    %822 = vmatprep.subr.bf16.mxu0 0
    %823 = vmatpush1.bf16.msra.mxu0 0
    %824 = vmatprep.subr.bf16.mxu0 0
    %825 = vmatpush1.bf16.msra.mxu0 0
    %826 = vmatprep.subr.bf16.mxu0 0
    %827 = vmatpush1.bf16.msra.mxu0 %v101
    %828 = vmatprep.subr.bf16.mxu0 0
    %829 = vmatpush1.bf16.msra.mxu0 %v100
    %830 = vmatprep.subr.bf16.mxu0 0
    %831 = vmatpush2.bf16.msra.mxu0 0
    %832 = vmatprep.subr.bf16.mxu0 0
    %833 = vmatpush2.bf16.msra.mxu0 0
    %834 = vmatprep.subr.bf16.mxu0 0
    %835 = vmatpush2.bf16.msra.mxu0 0
    %836 = vmatprep.subr.bf16.mxu0 0
    %837 = vmatpush2.bf16.msra.mxu0 0
    %838 = vmatprep.subr.bf16.mxu0 0
    %839 = vmatpush2.bf16.msra.mxu0 0
    %840 = vmatprep.subr.bf16.mxu0 0
    %841 = vmatpush2.bf16.msra.mxu0 0
    %842 = vmatprep.subr.bf16.mxu0 0
    %843 = vmatpush2.bf16.msra.mxu0 0
    %844 = vmatprep.subr.bf16.mxu0 0
    %845 = vmatpush2.bf16.msra.mxu0 0
    %846 = vmatprep.mubr.bf16.mxu0 0
    %847 = vmatmul.mubr.bf16.gmra.mxu0 %v812
    %v848 = vpop.f32.mrf.mxu0
    %v849 = vadd.f32 %v52, %v848
    %v850 = vpop.f32.mrf.mxu0
    %v851 = vpop.f32.mrf.mxu0
    %v852 = vpop.f32.mrf.mxu0
    %853 = vdwg.mxu0
    %v854 = vpack.c.bf16 %v849, %v849
    %856 = vrot.lane.b32.xlu0 %v854, 96
    %v857 = vpop.permute.xlu0 %856
    %v859 = vsel %vm152, %v854, 0
    %v862 = vsel %vm152, %v857, 0
    %864 = vmatprep.subr.bf16.mxu0 0
    %865 = vmatpush1.bf16.xpose.msra.mxu0 0
    %866 = vmatprep.subr.bf16.mxu0 0
    %867 = vmatpush1.bf16.xpose.msra.mxu0 0
    %868 = vmatprep.subr.bf16.mxu0 0
    %869 = vmatpush1.bf16.xpose.msra.mxu0 0
    %870 = vmatprep.subr.bf16.mxu0 0
    %871 = vmatpush1.bf16.xpose.msra.mxu0 0
    %872 = vmatprep.subr.bf16.mxu0 0
    %873 = vmatpush1.bf16.xpose.msra.mxu0 0
    %874 = vmatprep.subr.bf16.mxu0 0
    %875 = vmatpush1.bf16.xpose.msra.mxu0 0
    %876 = vmatprep.subr.bf16.mxu0 0
    %877 = vmatpush1.bf16.xpose.msra.mxu0 0
    %878 = vmatprep.subr.bf16.mxu0 0
    %879 = vmatpush1.bf16.xpose.msra.mxu0 %v862
    %880 = vmatprep.subr.bf16.mxu0 0
    %881 = vmatpush2.bf16.xpose.msra.mxu0 0
    %882 = vmatprep.subr.bf16.mxu0 0
    %883 = vmatpush2.bf16.xpose.msra.mxu0 0
    %884 = vmatprep.subr.bf16.mxu0 0
    %885 = vmatpush2.bf16.xpose.msra.mxu0 0
    %886 = vmatprep.subr.bf16.mxu0 0
    %887 = vmatpush2.bf16.xpose.msra.mxu0 0
    %888 = vmatprep.subr.bf16.mxu0 0
    %889 = vmatpush2.bf16.xpose.msra.mxu0 0
    %890 = vmatprep.subr.bf16.mxu0 0
    %891 = vmatpush2.bf16.xpose.msra.mxu0 0
    %892 = vmatprep.subr.bf16.mxu0 0
    %893 = vmatpush2.bf16.xpose.msra.mxu0 0
    %894 = vmatprep.subr.bf16.mxu0 0
    %895 = vmatpush2.bf16.xpose.msra.mxu0 0
    %896 = vmatprep.mubr.bf16.mxu0 0
    %897 = vmatmul.mubr.bf16.gmra.mxu0 %v859
    %v898 = vpop.f32.mrf.mxu0
    %v899 = vadd.f32 0.0, %v898
    %v900 = vpop.f32.mrf.mxu0
    %v901 = vpop.f32.mrf.mxu0
    %v902 = vpop.f32.mrf.mxu0
    %903 = vdwg.mxu0
    %v904 = vsel %vm152, %v899, -inf
    %905 = vmax.xlane.f32.xlu0 %v904
    %v906 = vpop.xlane.xlu0 %905
    %v907 = vmax.f32 %v906, -1e+30
    %v908 = vsub.f32 -1e+30, %v907
    %v909 = vmul.f32 %v908, 1.442695
    %v910 = vpow.pop %v909
    %v911 = vsub.f32 %v899, %v907
    %v912 = vmul.f32 %v911, 1.442695
    %v913 = vpow.pop %v912
    %v914 = vmul.f32 %v910, 0.0
    %v915 = vsel %vm152, %v913, 0.0
    %916 = vadd.xlane.f32.xlu0 %v915
    %v917 = vpop.xlane.xlu0 %916
    %v918 = vadd.f32 %v914, %v917
    %v919 = vpack.c.bf16 %v913, %v913
    %920 = vrot.lane.b32.xlu0 %v854, 64
    %v921 = vpop.permute.xlu0 %920
    %v923 = vsel %vm152, %v919, 0
    %v926 = vsel %vm220, %v921, 0
    %928 = vmatprep.subr.bf16.mxu0 0
    %929 = vmatpush1.bf16.msra.mxu0 0
    %930 = vmatprep.subr.bf16.mxu0 0
    %931 = vmatpush1.bf16.msra.mxu0 0
    %932 = vmatprep.subr.bf16.mxu0 0
    %933 = vmatpush1.bf16.msra.mxu0 0
    %934 = vmatprep.subr.bf16.mxu0 0
    %935 = vmatpush1.bf16.msra.mxu0 0
    %936 = vmatprep.subr.bf16.mxu0 0
    %937 = vmatpush1.bf16.msra.mxu0 0
    %938 = vmatprep.subr.bf16.mxu0 0
    %939 = vmatpush1.bf16.msra.mxu0 0
    %940 = vmatprep.subr.bf16.mxu0 0
    %941 = vmatpush1.bf16.msra.mxu0 0
    %942 = vmatprep.subr.bf16.mxu0 0
    %943 = vmatpush1.bf16.msra.mxu0 %v926
    %944 = vmatprep.subr.bf16.mxu0 0
    %945 = vmatpush2.bf16.msra.mxu0 0
    %946 = vmatprep.subr.bf16.mxu0 0
    %947 = vmatpush2.bf16.msra.mxu0 0
    %948 = vmatprep.subr.bf16.mxu0 0
    %949 = vmatpush2.bf16.msra.mxu0 0
    %950 = vmatprep.subr.bf16.mxu0 0
    %951 = vmatpush2.bf16.msra.mxu0 0
    %952 = vmatprep.subr.bf16.mxu0 0
    %953 = vmatpush2.bf16.msra.mxu0 0
    %954 = vmatprep.subr.bf16.mxu0 0
    %955 = vmatpush2.bf16.msra.mxu0 0
    %956 = vmatprep.subr.bf16.mxu0 0
    %957 = vmatpush2.bf16.msra.mxu0 0
    %958 = vmatprep.subr.bf16.mxu0 0
    %959 = vmatpush2.bf16.msra.mxu0 0
    %960 = vmatprep.mubr.bf16.mxu0 0
    %961 = vmatmul.mubr.bf16.gmra.mxu0 %v923
    %v962 = vpop.f32.mrf.mxu0
    %v963 = vadd.f32 0.0, %v962
    %v964 = vpop.f32.mrf.mxu0
    %v965 = vpop.f32.mrf.mxu0
    %v966 = vpop.f32.mrf.mxu0
    %967 = vdwg.mxu0
    %v968 = vadd.f32 %v914, %v963
    %v969 = vrcp.pop %v918
    %v970 = vmul.f32 %v968, %v969
    %971 = vrot.lane.b32.xlu0 %v854, 120
    %v972 = vpop.permute.xlu0 %971
    %973 = vrot.lane.b32.xlu0 %v854, 88
    %v974 = vpop.permute.xlu0 %973
    %v976 = vsel %vm152, %v972, 0
    %v979 = vsel %vm152, %v974, 0
    %981 = vmatprep.subr.bf16.mxu0 0
    %982 = vmatpush1.bf16.xpose.msra.mxu0 0
    %983 = vmatprep.subr.bf16.mxu0 0
    %984 = vmatpush1.bf16.xpose.msra.mxu0 0
    %985 = vmatprep.subr.bf16.mxu0 0
    %986 = vmatpush1.bf16.xpose.msra.mxu0 0
    %987 = vmatprep.subr.bf16.mxu0 0
    %988 = vmatpush1.bf16.xpose.msra.mxu0 0
    %989 = vmatprep.subr.bf16.mxu0 0
    %990 = vmatpush1.bf16.xpose.msra.mxu0 0
    %991 = vmatprep.subr.bf16.mxu0 0
    %992 = vmatpush1.bf16.xpose.msra.mxu0 0
    %993 = vmatprep.subr.bf16.mxu0 0
    %994 = vmatpush1.bf16.xpose.msra.mxu0 0
    %995 = vmatprep.subr.bf16.mxu0 0
    %996 = vmatpush1.bf16.xpose.msra.mxu0 %v979
    %997 = vmatprep.subr.bf16.mxu0 0
    %998 = vmatpush2.bf16.xpose.msra.mxu0 0
    %999 = vmatprep.subr.bf16.mxu0 0
    %1000 = vmatpush2.bf16.xpose.msra.mxu0 0
    %1001 = vmatprep.subr.bf16.mxu0 0
    %1002 = vmatpush2.bf16.xpose.msra.mxu0 0
    %1003 = vmatprep.subr.bf16.mxu0 0
    %1004 = vmatpush2.bf16.xpose.msra.mxu0 0
    %1005 = vmatprep.subr.bf16.mxu0 0
    %1006 = vmatpush2.bf16.xpose.msra.mxu0 0
    %1007 = vmatprep.subr.bf16.mxu0 0
    %1008 = vmatpush2.bf16.xpose.msra.mxu0 0
    %1009 = vmatprep.subr.bf16.mxu0 0
    %1010 = vmatpush2.bf16.xpose.msra.mxu0 0
    %1011 = vmatprep.subr.bf16.mxu0 0
    %1012 = vmatpush2.bf16.xpose.msra.mxu0 0
    %1013 = vmatprep.mubr.bf16.mxu0 0
    %1014 = vmatmul.mubr.bf16.gmra.mxu0 %v976
    %v1015 = vpop.f32.mrf.mxu0
    %v1016 = vadd.f32 0.0, %v1015
    %v1017 = vpop.f32.mrf.mxu0
    %v1018 = vpop.f32.mrf.mxu0
    %v1019 = vpop.f32.mrf.mxu0
    %1020 = vdwg.mxu0
    %v1021 = vsel %vm152, %v1016, -inf
    %1022 = vmax.xlane.f32.xlu0 %v1021
    %v1023 = vpop.xlane.xlu0 %1022
    %v1024 = vmax.f32 %v1023, -1e+30
    %v1025 = vsub.f32 -1e+30, %v1024
    %v1026 = vmul.f32 %v1025, 1.442695
    %v1027 = vpow.pop %v1026
    %v1028 = vsub.f32 %v1016, %v1024
    %v1029 = vmul.f32 %v1028, 1.442695
    %v1030 = vpow.pop %v1029
    %v1031 = vmul.f32 %v1027, 0.0
    %v1032 = vsel %vm152, %v1030, 0.0
    %1033 = vadd.xlane.f32.xlu0 %v1032
    %v1034 = vpop.xlane.xlu0 %1033
    %v1035 = vadd.f32 %v1031, %v1034
    %v1036 = vpack.c.bf16 %v1030, %v1030
    %1037 = vrot.lane.b32.xlu0 %v854, 56
    %v1038 = vpop.permute.xlu0 %1037
    %v1040 = vsel %vm152, %v1036, 0
    %v1043 = vsel %vm220, %v1038, 0
    %1045 = vmatprep.subr.bf16.mxu0 0
    %1046 = vmatpush1.bf16.msra.mxu0 0
    %1047 = vmatprep.subr.bf16.mxu0 0
    %1048 = vmatpush1.bf16.msra.mxu0 0
    %1049 = vmatprep.subr.bf16.mxu0 0
    %1050 = vmatpush1.bf16.msra.mxu0 0
    %1051 = vmatprep.subr.bf16.mxu0 0
    %1052 = vmatpush1.bf16.msra.mxu0 0
    %1053 = vmatprep.subr.bf16.mxu0 0
    %1054 = vmatpush1.bf16.msra.mxu0 0
    %1055 = vmatprep.subr.bf16.mxu0 0
    %1056 = vmatpush1.bf16.msra.mxu0 0
    %1057 = vmatprep.subr.bf16.mxu0 0
    %1058 = vmatpush1.bf16.msra.mxu0 0
    %1059 = vmatprep.subr.bf16.mxu0 0
    %1060 = vmatpush1.bf16.msra.mxu0 %v1043
    %1061 = vmatprep.subr.bf16.mxu0 0
    %1062 = vmatpush2.bf16.msra.mxu0 0
    %1063 = vmatprep.subr.bf16.mxu0 0
    %1064 = vmatpush2.bf16.msra.mxu0 0
    %1065 = vmatprep.subr.bf16.mxu0 0
    %1066 = vmatpush2.bf16.msra.mxu0 0
    %1067 = vmatprep.subr.bf16.mxu0 0
    %1068 = vmatpush2.bf16.msra.mxu0 0
    %1069 = vmatprep.subr.bf16.mxu0 0
    %1070 = vmatpush2.bf16.msra.mxu0 0
    %1071 = vmatprep.subr.bf16.mxu0 0
    %1072 = vmatpush2.bf16.msra.mxu0 0
    %1073 = vmatprep.subr.bf16.mxu0 0
    %1074 = vmatpush2.bf16.msra.mxu0 0
    %1075 = vmatprep.subr.bf16.mxu0 0
    %1076 = vmatpush2.bf16.msra.mxu0 0
    %1077 = vmatprep.mubr.bf16.mxu0 0
    %1078 = vmatmul.mubr.bf16.gmra.mxu0 %v1040
    %v1079 = vpop.f32.mrf.mxu0
    %v1080 = vadd.f32 0.0, %v1079
    %v1081 = vpop.f32.mrf.mxu0
    %v1082 = vpop.f32.mrf.mxu0
    %v1083 = vpop.f32.mrf.mxu0
    %1084 = vdwg.mxu0
    %v1085 = vadd.f32 %v1031, %v1080
    %v1086 = vrcp.pop %v1035
    %v1087 = vmul.f32 %v1085, %v1086
    %1088 = vrot.lane.b32.xlu0 %v854, 112
    %v1089 = vpop.permute.xlu0 %1088
    %1090 = vrot.lane.b32.xlu0 %v854, 80
    %v1091 = vpop.permute.xlu0 %1090
    %v1093 = vsel %vm152, %v1089, 0
    %v1096 = vsel %vm152, %v1091, 0
    %1098 = vmatprep.subr.bf16.mxu0 0
    %1099 = vmatpush1.bf16.xpose.msra.mxu0 0
    %1100 = vmatprep.subr.bf16.mxu0 0
    %1101 = vmatpush1.bf16.xpose.msra.mxu0 0
    %1102 = vmatprep.subr.bf16.mxu0 0
    %1103 = vmatpush1.bf16.xpose.msra.mxu0 0
    %1104 = vmatprep.subr.bf16.mxu0 0
    %1105 = vmatpush1.bf16.xpose.msra.mxu0 0
    %1106 = vmatprep.subr.bf16.mxu0 0
    %1107 = vmatpush1.bf16.xpose.msra.mxu0 0
    %1108 = vmatprep.subr.bf16.mxu0 0
    %1109 = vmatpush1.bf16.xpose.msra.mxu0 0
    %1110 = vmatprep.subr.bf16.mxu0 0
    %1111 = vmatpush1.bf16.xpose.msra.mxu0 0
    %1112 = vmatprep.subr.bf16.mxu0 0
    %1113 = vmatpush1.bf16.xpose.msra.mxu0 %v1096
    %1114 = vmatprep.subr.bf16.mxu0 0
    %1115 = vmatpush2.bf16.xpose.msra.mxu0 0
    %1116 = vmatprep.subr.bf16.mxu0 0
    %1117 = vmatpush2.bf16.xpose.msra.mxu0 0
    %1118 = vmatprep.subr.bf16.mxu0 0
    %1119 = vmatpush2.bf16.xpose.msra.mxu0 0
    %1120 = vmatprep.subr.bf16.mxu0 0
    %1121 = vmatpush2.bf16.xpose.msra.mxu0 0
    %1122 = vmatprep.subr.bf16.mxu0 0
    %1123 = vmatpush2.bf16.xpose.msra.mxu0 0
    %1124 = vmatprep.subr.bf16.mxu0 0
    %1125 = vmatpush2.bf16.xpose.msra.mxu0 0
    %1126 = vmatprep.subr.bf16.mxu0 0
    %1127 = vmatpush2.bf16.xpose.msra.mxu0 0
    %1128 = vmatprep.subr.bf16.mxu0 0
    %1129 = vmatpush2.bf16.xpose.msra.mxu0 0
    %1130 = vmatprep.mubr.bf16.mxu0 0
    %1131 = vmatmul.mubr.bf16.gmra.mxu0 %v1093
    %v1132 = vpop.f32.mrf.mxu0
    %v1133 = vadd.f32 0.0, %v1132
    %v1134 = vpop.f32.mrf.mxu0
    %v1135 = vpop.f32.mrf.mxu0
    %v1136 = vpop.f32.mrf.mxu0
    %1137 = vdwg.mxu0
    %v1138 = vsel %vm152, %v1133, -inf
    %1139 = vmax.xlane.f32.xlu0 %v1138
    %v1140 = vpop.xlane.xlu0 %1139
    %v1141 = vmax.f32 %v1140, -1e+30
    %v1142 = vsub.f32 -1e+30, %v1141
    %v1143 = vmul.f32 %v1142, 1.442695
    %v1144 = vpow.pop %v1143
    %v1145 = vsub.f32 %v1133, %v1141
    %v1146 = vmul.f32 %v1145, 1.442695
    %v1147 = vpow.pop %v1146
    %v1148 = vmul.f32 %v1144, 0.0
    %v1149 = vsel %vm152, %v1147, 0.0
    %1150 = vadd.xlane.f32.xlu0 %v1149
    %v1151 = vpop.xlane.xlu0 %1150
    %v1152 = vadd.f32 %v1148, %v1151
    %v1153 = vpack.c.bf16 %v1147, %v1147
    %1154 = vrot.lane.b32.xlu0 %v854, 48
    %v1155 = vpop.permute.xlu0 %1154
    %v1157 = vsel %vm152, %v1153, 0
    %v1160 = vsel %vm220, %v1155, 0
    %1162 = vmatprep.subr.bf16.mxu0 0
    %1163 = vmatpush1.bf16.msra.mxu0 0
    %1164 = vmatprep.subr.bf16.mxu0 0
    %1165 = vmatpush1.bf16.msra.mxu0 0
    %1166 = vmatprep.subr.bf16.mxu0 0
    %1167 = vmatpush1.bf16.msra.mxu0 0
    %1168 = vmatprep.subr.bf16.mxu0 0
    %1169 = vmatpush1.bf16.msra.mxu0 0
    %1170 = vmatprep.subr.bf16.mxu0 0
    %1171 = vmatpush1.bf16.msra.mxu0 0
    %1172 = vmatprep.subr.bf16.mxu0 0
    %1173 = vmatpush1.bf16.msra.mxu0 0
    %1174 = vmatprep.subr.bf16.mxu0 0
    %1175 = vmatpush1.bf16.msra.mxu0 0
    %1176 = vmatprep.subr.bf16.mxu0 0
    %1177 = vmatpush1.bf16.msra.mxu0 %v1160
    %1178 = vmatprep.subr.bf16.mxu0 0
    %1179 = vmatpush2.bf16.msra.mxu0 0
    %1180 = vmatprep.subr.bf16.mxu0 0
    %1181 = vmatpush2.bf16.msra.mxu0 0
    %1182 = vmatprep.subr.bf16.mxu0 0
    %1183 = vmatpush2.bf16.msra.mxu0 0
    %1184 = vmatprep.subr.bf16.mxu0 0
    %1185 = vmatpush2.bf16.msra.mxu0 0
    %1186 = vmatprep.subr.bf16.mxu0 0
    %1187 = vmatpush2.bf16.msra.mxu0 0
    %1188 = vmatprep.subr.bf16.mxu0 0
    %1189 = vmatpush2.bf16.msra.mxu0 0
    %1190 = vmatprep.subr.bf16.mxu0 0
    %1191 = vmatpush2.bf16.msra.mxu0 0
    %1192 = vmatprep.subr.bf16.mxu0 0
    %1193 = vmatpush2.bf16.msra.mxu0 0
    %1194 = vmatprep.mubr.bf16.mxu0 0
    %1195 = vmatmul.mubr.bf16.gmra.mxu0 %v1157
    %v1196 = vpop.f32.mrf.mxu0
    %v1197 = vadd.f32 0.0, %v1196
    %v1198 = vpop.f32.mrf.mxu0
    %v1199 = vpop.f32.mrf.mxu0
    %v1200 = vpop.f32.mrf.mxu0
    %1201 = vdwg.mxu0
    %v1202 = vadd.f32 %v1148, %v1197
    %v1203 = vrcp.pop %v1152
    %v1204 = vmul.f32 %v1202, %v1203
    %1205 = vrot.lane.b32.xlu0 %v854, 104
    %v1206 = vpop.permute.xlu0 %1205
    %1207 = vrot.lane.b32.xlu0 %v854, 72
    %v1208 = vpop.permute.xlu0 %1207
    %v1210 = vsel %vm152, %v1206, 0
    %v1213 = vsel %vm152, %v1208, 0
    %1215 = vmatprep.subr.bf16.mxu0 0
    %1216 = vmatpush1.bf16.xpose.msra.mxu0 0
    %1217 = vmatprep.subr.bf16.mxu0 0
    %1218 = vmatpush1.bf16.xpose.msra.mxu0 0
    %1219 = vmatprep.subr.bf16.mxu0 0
    %1220 = vmatpush1.bf16.xpose.msra.mxu0 0
    %1221 = vmatprep.subr.bf16.mxu0 0
    %1222 = vmatpush1.bf16.xpose.msra.mxu0 0
    %1223 = vmatprep.subr.bf16.mxu0 0
    %1224 = vmatpush1.bf16.xpose.msra.mxu0 0
    %1225 = vmatprep.subr.bf16.mxu0 0
    %1226 = vmatpush1.bf16.xpose.msra.mxu0 0
    %1227 = vmatprep.subr.bf16.mxu0 0
    %1228 = vmatpush1.bf16.xpose.msra.mxu0 0
    %1229 = vmatprep.subr.bf16.mxu0 0
    %1230 = vmatpush1.bf16.xpose.msra.mxu0 %v1213
    %1231 = vmatprep.subr.bf16.mxu0 0
    %1232 = vmatpush2.bf16.xpose.msra.mxu0 0
    %1233 = vmatprep.subr.bf16.mxu0 0
    %1234 = vmatpush2.bf16.xpose.msra.mxu0 0
    %1235 = vmatprep.subr.bf16.mxu0 0
    %1236 = vmatpush2.bf16.xpose.msra.mxu0 0
    %1237 = vmatprep.subr.bf16.mxu0 0
    %1238 = vmatpush2.bf16.xpose.msra.mxu0 0
    %1239 = vmatprep.subr.bf16.mxu0 0
    %1240 = vmatpush2.bf16.xpose.msra.mxu0 0
    %1241 = vmatprep.subr.bf16.mxu0 0
    %1242 = vmatpush2.bf16.xpose.msra.mxu0 0
    %1243 = vmatprep.subr.bf16.mxu0 0
    %1244 = vmatpush2.bf16.xpose.msra.mxu0 0
    %1245 = vmatprep.subr.bf16.mxu0 0
    %1246 = vmatpush2.bf16.xpose.msra.mxu0 0
    %1247 = vmatprep.mubr.bf16.mxu0 0
    %1248 = vmatmul.mubr.bf16.gmra.mxu0 %v1210
    %v1249 = vpop.f32.mrf.mxu0
    %v1250 = vadd.f32 0.0, %v1249
    %v1251 = vpop.f32.mrf.mxu0
    %v1252 = vpop.f32.mrf.mxu0
    %v1253 = vpop.f32.mrf.mxu0
    %1254 = vdwg.mxu0
    %v1255 = vsel %vm152, %v1250, -inf
    %1256 = vmax.xlane.f32.xlu0 %v1255
    %v1257 = vpop.xlane.xlu0 %1256
    %v1258 = vmax.f32 %v1257, -1e+30
    %v1259 = vsub.f32 -1e+30, %v1258
    %v1260 = vmul.f32 %v1259, 1.442695
    %v1261 = vpow.pop %v1260
    %v1262 = vsub.f32 %v1250, %v1258
    %v1263 = vmul.f32 %v1262, 1.442695
    %v1264 = vpow.pop %v1263
    %v1265 = vmul.f32 %v1261, 0.0
    %v1266 = vsel %vm152, %v1264, 0.0
    %1267 = vadd.xlane.f32.xlu0 %v1266
    %v1268 = vpop.xlane.xlu0 %1267
    %v1269 = vadd.f32 %v1265, %v1268
    %v1270 = vpack.c.bf16 %v1264, %v1264
    %1271 = vrot.lane.b32.xlu0 %v854, 40
    %v1272 = vpop.permute.xlu0 %1271
    %v1274 = vsel %vm152, %v1270, 0
    %v1277 = vsel %vm220, %v1272, 0
    %1279 = vmatprep.subr.bf16.mxu0 0
    %1280 = vmatpush1.bf16.msra.mxu0 0
    %1281 = vmatprep.subr.bf16.mxu0 0
    %1282 = vmatpush1.bf16.msra.mxu0 0
    %1283 = vmatprep.subr.bf16.mxu0 0
    %1284 = vmatpush1.bf16.msra.mxu0 0
    %1285 = vmatprep.subr.bf16.mxu0 0
    %1286 = vmatpush1.bf16.msra.mxu0 0
    %1287 = vmatprep.subr.bf16.mxu0 0
    %1288 = vmatpush1.bf16.msra.mxu0 0
    %1289 = vmatprep.subr.bf16.mxu0 0
    %1290 = vmatpush1.bf16.msra.mxu0 0
    %1291 = vmatprep.subr.bf16.mxu0 0
    %1292 = vmatpush1.bf16.msra.mxu0 0
    %1293 = vmatprep.subr.bf16.mxu0 0
    %1294 = vmatpush1.bf16.msra.mxu0 %v1277
    %1295 = vmatprep.subr.bf16.mxu0 0
    %1296 = vmatpush2.bf16.msra.mxu0 0
    %1297 = vmatprep.subr.bf16.mxu0 0
    %1298 = vmatpush2.bf16.msra.mxu0 0
    %1299 = vmatprep.subr.bf16.mxu0 0
    %1300 = vmatpush2.bf16.msra.mxu0 0
    %1301 = vmatprep.subr.bf16.mxu0 0
    %1302 = vmatpush2.bf16.msra.mxu0 0
    %1303 = vmatprep.subr.bf16.mxu0 0
    %1304 = vmatpush2.bf16.msra.mxu0 0
    %1305 = vmatprep.subr.bf16.mxu0 0
    %1306 = vmatpush2.bf16.msra.mxu0 0
    %1307 = vmatprep.subr.bf16.mxu0 0
    %1308 = vmatpush2.bf16.msra.mxu0 0
    %1309 = vmatprep.subr.bf16.mxu0 0
    %1310 = vmatpush2.bf16.msra.mxu0 0
    %1311 = vmatprep.mubr.bf16.mxu0 0
    %1312 = vmatmul.mubr.bf16.gmra.mxu0 %v1274
    %v1313 = vpop.f32.mrf.mxu0
    %v1314 = vadd.f32 0.0, %v1313
    %v1315 = vpop.f32.mrf.mxu0
    %v1316 = vpop.f32.mrf.mxu0
    %v1317 = vpop.f32.mrf.mxu0
    %1318 = vdwg.mxu0
    %v1319 = vadd.f32 %v1265, %v1314
    %v1320 = vrcp.pop %v1269
    %v1321 = vmul.f32 %v1319, %v1320
    %1323 = vrot.lane.b32.xlu0 %v1087, 8
    %v1324 = vpop.permute.xlu0 %1323
    %1327 = vrot.lane.b32.xlu0 %v1204, 16
    %v1328 = vpop.permute.xlu0 %1327
    %1331 = vrot.lane.b32.xlu0 %v1321, 24
    %v1332 = vpop.permute.xlu0 %1331
    %v1334 = vsel %vm152, %v970, %v1324
    %v1335 = vsel %vm631, %v1334, %v1328
    %v1336 = vsel %vm633, %v1335, %v1332
    %v1337 = vpack.c.bf16 %v1336, %v1336
    %v1339 = vsel %vm104, %v1337, 0
    %1341 = vmatprep.subr.bf16.mxu0 0
    %1342 = vmatpush1.bf16.msra.mxu0 0
    %1343 = vmatprep.subr.bf16.mxu0 0
    %1344 = vmatpush1.bf16.msra.mxu0 0
    %1345 = vmatprep.subr.bf16.mxu0 0
    %1346 = vmatpush1.bf16.msra.mxu0 0
    %1347 = vmatprep.subr.bf16.mxu0 0
    %1348 = vmatpush1.bf16.msra.mxu0 0
    %1349 = vmatprep.subr.bf16.mxu0 0
    %1350 = vmatpush1.bf16.msra.mxu0 0
    %1351 = vmatprep.subr.bf16.mxu0 0
    %1352 = vmatpush1.bf16.msra.mxu0 0
    %1353 = vmatprep.subr.bf16.mxu0 0
    %1354 = vmatpush1.bf16.msra.mxu0 %v651
    %1355 = vmatprep.subr.bf16.mxu0 0
    %1356 = vmatpush1.bf16.msra.mxu0 %v650
    %1357 = vmatprep.subr.bf16.mxu0 0
    %1358 = vmatpush2.bf16.msra.mxu0 0
    %1359 = vmatprep.subr.bf16.mxu0 0
    %1360 = vmatpush2.bf16.msra.mxu0 0
    %1361 = vmatprep.subr.bf16.mxu0 0
    %1362 = vmatpush2.bf16.msra.mxu0 0
    %1363 = vmatprep.subr.bf16.mxu0 0
    %1364 = vmatpush2.bf16.msra.mxu0 0
    %1365 = vmatprep.subr.bf16.mxu0 0
    %1366 = vmatpush2.bf16.msra.mxu0 0
    %1367 = vmatprep.subr.bf16.mxu0 0
    %1368 = vmatpush2.bf16.msra.mxu0 0
    %1369 = vmatprep.subr.bf16.mxu0 0
    %1370 = vmatpush2.bf16.msra.mxu0 0
    %1371 = vmatprep.subr.bf16.mxu0 0
    %1372 = vmatpush2.bf16.msra.mxu0 0
    %1373 = vmatprep.mubr.bf16.mxu0 0
    %1374 = vmatmul.mubr.bf16.gmra.mxu0 %v1339
    %v1375 = vpop.f32.mrf.mxu0
    %v1376 = vadd.f32 %v640, %v1375
    %v1377 = vpop.f32.mrf.mxu0
    %v1378 = vpop.f32.mrf.mxu0
    %v1379 = vpop.f32.mrf.mxu0
    %1380 = vdwg.mxu0
    %v1382 = vcombine.high %v1376, %v1376
    %v1384 = vunpack.c.l.s4 1966171168
    %v1385 = vunpack.c.0.s8 %v1384
    %v1386 = vlaneseq
    %v1387 = vshrl.u32 %v1386, 7
    %v1388 = vsub.s32 %v1385, %v1387
    %v1389 = vrot.slane %v1376, %v1388
    %v1391 = vunpack.c.l.s4 1966171168
    %v1392 = vunpack.c.0.s8 %v1391
    %v1393 = vlaneseq
    %v1394 = vshrl.u32 %v1393, 7
    %v1395 = vsub.s32 %v1392, %v1394
    %v1396 = vrot.slane %v1382, %v1395
    %v1397 = vcombine.high %v1389, %v1389
    %v1398 = vcombine.high %v1396, %v1396
    %v1400 = vunpack.c.l.s4 1966171168
    %v1401 = vunpack.c.0.s8 %v1400
    %v1402 = vlaneseq
    %v1403 = vshrl.u32 %v1402, 7
    %v1404 = vsub.s32 %v1401, %v1403
    %v1405 = vrot.slane %v1389, %v1404
    %v1407 = vunpack.c.l.s4 1966171168
    %v1408 = vunpack.c.0.s8 %v1407
    %v1409 = vlaneseq
    %v1410 = vshrl.u32 %v1409, 7
    %v1411 = vsub.s32 %v1408, %v1410
    %v1412 = vrot.slane %v1396, %v1411
    %v1414 = vunpack.c.l.s4 1966171168
    %v1415 = vunpack.c.0.s8 %v1414
    %v1416 = vlaneseq
    %v1417 = vshrl.u32 %v1416, 7
    %v1418 = vsub.s32 %v1415, %v1417
    %v1419 = vrot.slane %v1397, %v1418
    %v1421 = vunpack.c.l.s4 1966171168
    %v1422 = vunpack.c.0.s8 %v1421
    %v1423 = vlaneseq
    %v1424 = vshrl.u32 %v1423, 7
    %v1425 = vsub.s32 %v1422, %v1424
    %v1426 = vrot.slane %v1398, %v1425
    %v1427 = vcombine.high %v1405, %v1405
    %v1428 = vcombine.high %v1412, %v1412
    %v1429 = vcombine.high %v1419, %v1419
    %v1430 = vcombine.high %v1426, %v1426
    %1439 = vst.msk [vmem:[#allocation2 + $0x1] sm:$0x1] %vm755, %v1405
    %1440 = vst.msk [vmem:[#allocation2 + $0x3] sm:$0x1] %vm755, %v1419
    %1441 = vst.msk [vmem:[#allocation2 + $0x5] sm:$0x1] %vm755, %v1427
    %1442 = vst.msk [vmem:[#allocation2 + $0x7] sm:$0x1] %vm755, %v1429
    %1443 = vst.msk [vmem:[#allocation2 + $0x9] sm:$0x1] %vm755, %v1412
    %1444 = vst.msk [vmem:[#allocation2 + $0xb] sm:$0x1] %vm755, %v1426
    %1445 = vst.msk [vmem:[#allocation2 + $0xd] sm:$0x1] %vm755, %v1428
    %1446 = vst.msk [vmem:[#allocation2 + $0xf] sm:$0x1] %vm755, %v1430
    // Predicated region
    $region22: #{self_attention_layer.1} parent=1 // pred_check
      _
    $region23: #{self_attention_layer.1} parent=1 // pred_check_branch
      %1448 = sbr.rel (0) target = $region25
    $region24: #{self_attention_layer.1} parent=1 // pred_region
      %s1450 = ssub.s32 256, 256
      %1451 = vsyncadd [#allocation3], %s1450
      %s1452 = sshll.u32 [#allocation2], 4
      %s1453 = int_to_ptr.vmem [resolvable:$true] %s1452
      %1458 = dma.vmem_to_hbm [thread:$0]  %s1453, 256, %s5, [#allocation3], 32, 32, 2
    $region25: #{self_attention_layer.1} parent=1 // pred_fallthru
      _
    // Predicated region
    $region26: #{self_attention_layer.1} parent=1 // pred_check
      _
    $region27: #{self_attention_layer.1} parent=1 // pred_check_branch
      %1460 = sbr.rel (0) target = $region29
    $region28: #{self_attention_layer.1} parent=1 // pred_region
      %1461 = dma.done [#allocation3], 256
    $region29: #{self_attention_layer.1} parent=1 // pred_fallthru
      _
    %1462 = vsyncpa [#allocation3], 1

// kernel: self_attention_layer.1
$region0: #{self_attention_layer.1}
  #allocation0 [shape = 'u32[]', space=smem, size = 0x4, offset = 0x4, fixed_abs, tag = 'smem constant byte address 0x4 - core index']
  #allocation1 [shape = 'u32[144,128]{1,0:T(1,128)}', space=vmem, size = 0x12000, scoped, tag = 'internal scratch']
  %s0 = inlined_call_operand.vmem [shape: f32[8,2,32], index: 0, kind: input, shape index: {}]
  %s1 = inlined_call_operand.vmem [shape: bf16[32,96], index: 1, kind: input, shape index: {}]
  %s2 = inlined_call_operand.vmem [shape: f32[1,96], index: 2, kind: input, shape index: {}]
  %s3 = inlined_call_operand.vmem [shape: bf16[32,32], index: 3, kind: input, shape index: {}]
  %s4 = inlined_call_operand.vmem [shape: f32[1,32], index: 4, kind: input, shape index: {}]
  %s5 = inlined_call_operand.hbm [shape: f32[8,2,32], index: 5, kind: output, shape index: {}]
  %s6 = sld [smem:[#allocation0]]
  $region30: #{self_attention_layer.1} parent=0
    _
  %s8 = ssub.s32 1, %s6
  %s9 = scalar_select 0, %s8, %s6
  $region1: #{self_attention_layer.1} parent=0
    #allocation2 [shape = 'u8[8192]{0}', space=vmem, size = 0x2000, scoped, tag = 'output window, operand 0, single buffered']
    #allocation3 [shape = 's32[1]{0}', space=sflag, size = 0x4, scoped, tag = 'scoped memory for self_attention_layer.1']
    %10 = vsyncpa [#allocation3], 0
    // Predicated region
    $region2: #{self_attention_layer.1} parent=1 // pred_check
      _
    $region3: #{self_attention_layer.1} parent=1 // pred_check_branch
      %12 = sbr.rel (0) target = $region5
    $region4: #{self_attention_layer.1} parent=1 // pred_region
      _
    $region5: #{self_attention_layer.1} parent=1 // pred_fallthru
      _
    // Predicated region
    $region6: #{self_attention_layer.1} parent=1 // pred_check
      _
    $region7: #{self_attention_layer.1} parent=1 // pred_check_branch
      %14 = sbr.rel (0) target = $region9
    $region8: #{self_attention_layer.1} parent=1 // pred_region
      _
    $region9: #{self_attention_layer.1} parent=1 // pred_fallthru
      _
    // Predicated region
    $region10: #{self_attention_layer.1} parent=1 // pred_check
      _
    $region11: #{self_attention_layer.1} parent=1 // pred_check_branch
      %16 = sbr.rel (0) target = $region13
    $region12: #{self_attention_layer.1} parent=1 // pred_region
      _
    $region13: #{self_attention_layer.1} parent=1 // pred_fallthru
      _
    // Predicated region
    $region14: #{self_attention_layer.1} parent=1 // pred_check
      _
    $region15: #{self_attention_layer.1} parent=1 // pred_check_branch
      %18 = sbr.rel (0) target = $region17
    $region16: #{self_attention_layer.1} parent=1 // pred_region
      _
    $region17: #{self_attention_layer.1} parent=1 // pred_fallthru
      _
    // Predicated region
    $region18: #{self_attention_layer.1} parent=1 // pred_check
      _
    $region19: #{self_attention_layer.1} parent=1 // pred_check_branch
      %20 = sbr.rel (0) target = $region21
    $region20: #{self_attention_layer.1} parent=1 // pred_region
      _
    $region21: #{self_attention_layer.1} parent=1 // pred_fallthru
      _
    %v22 = vld [vmem:[%s1] sm:$0xf]
    %v23 = vld [vmem:[%s1 + $0x4] sm:$0xf]
    %v24 = vld [vmem:[%s1 + $0x8] sm:$0xf]
    %v25 = vld [vmem:[%s1 + $0xc] sm:$0xf]
    %v26 = vld [vmem:[%s2] sm:$0x1]
    %v27 = vld [vmem:[%s3] sm:$0xf]
    %v28 = vld [vmem:[%s3 + $0x4] sm:$0xf]
    %v29 = vld [vmem:[%s3 + $0x8] sm:$0xf]
    %v30 = vld [vmem:[%s3 + $0xc] sm:$0xf]
    %v31 = vld [vmem:[%s4] sm:$0x1]
    %v32 = vld [vmem:[%s0] sm:$0x1]
    %v33 = vld [vmem:[%s0 + $0x2] sm:$0x1]
    %v34 = vld [vmem:[%s0 + $0x4] sm:$0x1]
    %v35 = vld [vmem:[%s0 + $0x6] sm:$0x1]
    %v36 = vld [vmem:[%s0 + $0x8] sm:$0x1]
    %v37 = vld [vmem:[%s0 + $0xa] sm:$0x1]
    %v38 = vld [vmem:[%s0 + $0xc] sm:$0x1]
    %v39 = vld [vmem:[%s0 + $0xe] sm:$0x1]
    %v40 = vpack.c.bf16 %v32, %v32
    %v41 = vpack.c.bf16 %v33, %v33
    %v42 = vpack.c.bf16 %v34, %v34
    %v43 = vpack.c.bf16 %v35, %v35
    %v44 = vpack.c.bf16 %v36, %v36
    %v45 = vpack.c.bf16 %v37, %v37
    %v46 = vpack.c.bf16 %v38, %v38
    %v47 = vpack.c.bf16 %v39, %v39
    %v49 = vlaneseq
    %v50 = vshrl.u32 %v49, 7
    %v51 = vsub.s32 0, %v50
    %v52 = vrot.slane %v26, %v51
    %v62 = vunpack.c.l.b16 %v40
    %v63 = vunpack.c.l.b16 %v41
    %v64 = vunpack.c.l.b16 %v42
    %v65 = vunpack.c.l.b16 %v43
    %v66 = vunpack.c.l.b16 %v44
    %v67 = vunpack.c.l.b16 %v45
    %v68 = vunpack.c.l.b16 %v46
    %v69 = vunpack.c.l.b16 %v47
    %v70 = vrot.slane %v63, 7
    %vm71 = vcmask 1041409
    %v72 = vsel %vm71, %v70, %v62
    %v73 = vrot.slane %v64, 6
    %vm74 = vcmask 1042434
    %v75 = vsel %vm74, %v73, %v72
    %v76 = vrot.slane %v65, 5
    %vm77 = vcmask 1043459
    %v78 = vsel %vm77, %v76, %v75
    %v79 = vrot.slane %v66, 4
    %vm80 = vcmask 1044484
    %v81 = vsel %vm80, %v79, %v78
    %v82 = vrot.slane %v67, 3
    %vm83 = vcmask 1045509
    %v84 = vsel %vm83, %v82, %v81
    %v85 = vrot.slane %v68, 2
    %vm86 = vcmask 1046534
    %v87 = vsel %vm86, %v85, %v84
    %v88 = vrot.slane %v69, 1
    %vm89 = vcmask 1047559
    %v90 = vsel %vm89, %v88, %v87
    %v91 = vpack.c.b16 %v90, %v90
    %v96 = vunpack.c.l.b16 %v22
    %v97 = vunpack.c.l.b16 %v23
    %v98 = vunpack.c.l.b16 %v24
    %v99 = vunpack.c.l.b16 %v25
    %v100 = vpack.c.b16 %v97, %v96
    %v101 = vpack.c.b16 %v99, %v98
    %vm104 = vcmask 261120
    %v106 = vsel %vm104, %v91, 0
    %108 = vmatprep.subr.bf16.mxu0 0
    %109 = vmatpush1.bf16.msra.mxu0 0
    %110 = vmatprep.subr.bf16.mxu0 0
    %111 = vmatpush1.bf16.msra.mxu0 0
    %112 = vmatprep.subr.bf16.mxu0 0
    %113 = vmatpush1.bf16.msra.mxu0 0
    %114 = vmatprep.subr.bf16.mxu0 0
    %115 = vmatpush1.bf16.msra.mxu0 0
    %116 = vmatprep.subr.bf16.mxu0 0
    %117 = vmatpush1.bf16.msra.mxu0 0
    %118 = vmatprep.subr.bf16.mxu0 0
    %119 = vmatpush1.bf16.msra.mxu0 0
    %120 = vmatprep.subr.bf16.mxu0 0
    %121 = vmatpush1.bf16.msra.mxu0 %v101
    %122 = vmatprep.subr.bf16.mxu0 0
    %123 = vmatpush1.bf16.msra.mxu0 %v100
    %124 = vmatprep.subr.bf16.mxu0 0
    %125 = vmatpush2.bf16.msra.mxu0 0
    %126 = vmatprep.subr.bf16.mxu0 0
    %127 = vmatpush2.bf16.msra.mxu0 0
    %128 = vmatprep.subr.bf16.mxu0 0
    %129 = vmatpush2.bf16.msra.mxu0 0
    %130 = vmatprep.subr.bf16.mxu0 0
    %131 = vmatpush2.bf16.msra.mxu0 0
    %132 = vmatprep.subr.bf16.mxu0 0
    %133 = vmatpush2.bf16.msra.mxu0 0
    %134 = vmatprep.subr.bf16.mxu0 0
    %135 = vmatpush2.bf16.msra.mxu0 0
    %136 = vmatprep.subr.bf16.mxu0 0
    %137 = vmatpush2.bf16.msra.mxu0 0
    %138 = vmatprep.subr.bf16.mxu0 0
    %139 = vmatpush2.bf16.msra.mxu0 0
    %140 = vmatprep.mubr.bf16.mxu0 0
    %141 = vmatmul.mubr.bf16.gmra.mxu0 %v106
    %v142 = vpop.f32.mrf.mxu0
    %v143 = vadd.f32 %v52, %v142
    %v144 = vpop.f32.mrf.mxu0
    %v145 = vpop.f32.mrf.mxu0
    %v146 = vpop.f32.mrf.mxu0
    %147 = vdwg.mxu0
    %v148 = vpack.c.bf16 %v143, %v143
    %150 = vrot.lane.b32.xlu0 %v148, 96
    %v151 = vpop.permute.xlu0 %150
    %vm152 = vcmask 64512
    %v154 = vsel %vm152, %v148, 0
    %v157 = vsel %vm152, %v151, 0
    %159 = vmatprep.subr.bf16.mxu0 0
    %160 = vmatpush1.bf16.xpose.msra.mxu0 0
    %161 = vmatprep.subr.bf16.mxu0 0
    %162 = vmatpush1.bf16.xpose.msra.mxu0 0
    %163 = vmatprep.subr.bf16.mxu0 0
    %164 = vmatpush1.bf16.xpose.msra.mxu0 0
    %165 = vmatprep.subr.bf16.mxu0 0
    %166 = vmatpush1.bf16.xpose.msra.mxu0 0
    %167 = vmatprep.subr.bf16.mxu0 0
    %168 = vmatpush1.bf16.xpose.msra.mxu0 0
    %169 = vmatprep.subr.bf16.mxu0 0
    %170 = vmatpush1.bf16.xpose.msra.mxu0 0
    %171 = vmatprep.subr.bf16.mxu0 0
    %172 = vmatpush1.bf16.xpose.msra.mxu0 0
    %173 = vmatprep.subr.bf16.mxu0 0
    %174 = vmatpush1.bf16.xpose.msra.mxu0 %v157
    %175 = vmatprep.subr.bf16.mxu0 0
    %176 = vmatpush2.bf16.xpose.msra.mxu0 0
    %177 = vmatprep.subr.bf16.mxu0 0
    %178 = vmatpush2.bf16.xpose.msra.mxu0 0
    %179 = vmatprep.subr.bf16.mxu0 0
    %180 = vmatpush2.bf16.xpose.msra.mxu0 0
    %181 = vmatprep.subr.bf16.mxu0 0
    %182 = vmatpush2.bf16.xpose.msra.mxu0 0
    %183 = vmatprep.subr.bf16.mxu0 0
    %184 = vmatpush2.bf16.xpose.msra.mxu0 0
    %185 = vmatprep.subr.bf16.mxu0 0
    %186 = vmatpush2.bf16.xpose.msra.mxu0 0
    %187 = vmatprep.subr.bf16.mxu0 0
    %188 = vmatpush2.bf16.xpose.msra.mxu0 0
    %189 = vmatprep.subr.bf16.mxu0 0
    %190 = vmatpush2.bf16.xpose.msra.mxu0 0
    %191 = vmatprep.mubr.bf16.mxu0 0
    %192 = vmatmul.mubr.bf16.gmra.mxu0 %v154
    %v193 = vpop.f32.mrf.mxu0
    %v194 = vadd.f32 0.0, %v193
    %v195 = vpop.f32.mrf.mxu0
    %v196 = vpop.f32.mrf.mxu0
    %v197 = vpop.f32.mrf.mxu0
    %198 = vdwg.mxu0
    %v199 = vsel %vm152, %v194, -inf
    %200 = vmax.xlane.f32.xlu0 %v199
    %v201 = vpop.xlane.xlu0 %200
    %v202 = vmax.f32 %v201, -1e+30
    %v203 = vsub.f32 -1e+30, %v202
    %v204 = vmul.f32 %v203, 1.442695
    %v205 = vpow.pop %v204
    %v206 = vsub.f32 %v194, %v202
    %v207 = vmul.f32 %v206, 1.442695
    %v208 = vpow.pop %v207
    %v209 = vmul.f32 %v205, 0.0
    %v210 = vsel %vm152, %v208, 0.0
    %211 = vadd.xlane.f32.xlu0 %v210
    %v212 = vpop.xlane.xlu0 %211
    %v213 = vadd.f32 %v209, %v212
    %v214 = vpack.c.bf16 %v208, %v208
    %215 = vrot.lane.b32.xlu0 %v148, 64
    %v216 = vpop.permute.xlu0 %215
    %v218 = vsel %vm152, %v214, 0
    %vm220 = vcmask 1043456
    %v222 = vsel %vm220, %v216, 0
    %224 = vmatprep.subr.bf16.mxu0 0
    %225 = vmatpush1.bf16.msra.mxu0 0
    %226 = vmatprep.subr.bf16.mxu0 0
    %227 = vmatpush1.bf16.msra.mxu0 0
    %228 = vmatprep.subr.bf16.mxu0 0
    %229 = vmatpush1.bf16.msra.mxu0 0
    %230 = vmatprep.subr.bf16.mxu0 0
    %231 = vmatpush1.bf16.msra.mxu0 0
    %232 = vmatprep.subr.bf16.mxu0 0
    %233 = vmatpush1.bf16.msra.mxu0 0
    %234 = vmatprep.subr.bf16.mxu0 0
    %235 = vmatpush1.bf16.msra.mxu0 0
    %236 = vmatprep.subr.bf16.mxu0 0
    %237 = vmatpush1.bf16.msra.mxu0 0
    %238 = vmatprep.subr.bf16.mxu0 0
    %239 = vmatpush1.bf16.msra.mxu0 %v222
    %240 = vmatprep.subr.bf16.mxu0 0
    %241 = vmatpush2.bf16.msra.mxu0 0
    %242 = vmatprep.subr.bf16.mxu0 0
    %243 = vmatpush2.bf16.msra.mxu0 0
    %244 = vmatprep.subr.bf16.mxu0 0
    %245 = vmatpush2.bf16.msra.mxu0 0
    %246 = vmatprep.subr.bf16.mxu0 0
    %247 = vmatpush2.bf16.msra.mxu0 0
    %248 = vmatprep.subr.bf16.mxu0 0
    %249 = vmatpush2.bf16.msra.mxu0 0
    %250 = vmatprep.subr.bf16.mxu0 0
    %251 = vmatpush2.bf16.msra.mxu0 0
    %252 = vmatprep.subr.bf16.mxu0 0
    %253 = vmatpush2.bf16.msra.mxu0 0
    %254 = vmatprep.subr.bf16.mxu0 0
    %255 = vmatpush2.bf16.msra.mxu0 0
    %256 = vmatprep.mubr.bf16.mxu0 0
    %257 = vmatmul.mubr.bf16.gmra.mxu0 %v218
    %v258 = vpop.f32.mrf.mxu0
    %v259 = vadd.f32 0.0, %v258
    %v260 = vpop.f32.mrf.mxu0
    %v261 = vpop.f32.mrf.mxu0
    %v262 = vpop.f32.mrf.mxu0
    %263 = vdwg.mxu0
    %v264 = vadd.f32 %v209, %v259
    %v265 = vrcp.pop %v213
    %v266 = vmul.f32 %v264, %v265
    %267 = vrot.lane.b32.xlu0 %v148, 120
    %v268 = vpop.permute.xlu0 %267
    %269 = vrot.lane.b32.xlu0 %v148, 88
    %v270 = vpop.permute.xlu0 %269
    %v272 = vsel %vm152, %v268, 0
    %v275 = vsel %vm152, %v270, 0
    %277 = vmatprep.subr.bf16.mxu0 0
    %278 = vmatpush1.bf16.xpose.msra.mxu0 0
    %279 = vmatprep.subr.bf16.mxu0 0
    %280 = vmatpush1.bf16.xpose.msra.mxu0 0
    %281 = vmatprep.subr.bf16.mxu0 0
    %282 = vmatpush1.bf16.xpose.msra.mxu0 0
    %283 = vmatprep.subr.bf16.mxu0 0
    %284 = vmatpush1.bf16.xpose.msra.mxu0 0
    %285 = vmatprep.subr.bf16.mxu0 0
    %286 = vmatpush1.bf16.xpose.msra.mxu0 0
    %287 = vmatprep.subr.bf16.mxu0 0
    %288 = vmatpush1.bf16.xpose.msra.mxu0 0
    %289 = vmatprep.subr.bf16.mxu0 0
    %290 = vmatpush1.bf16.xpose.msra.mxu0 0
    %291 = vmatprep.subr.bf16.mxu0 0
    %292 = vmatpush1.bf16.xpose.msra.mxu0 %v275
    %293 = vmatprep.subr.bf16.mxu0 0
    %294 = vmatpush2.bf16.xpose.msra.mxu0 0
    %295 = vmatprep.subr.bf16.mxu0 0
    %296 = vmatpush2.bf16.xpose.msra.mxu0 0
    %297 = vmatprep.subr.bf16.mxu0 0
    %298 = vmatpush2.bf16.xpose.msra.mxu0 0
    %299 = vmatprep.subr.bf16.mxu0 0
    %300 = vmatpush2.bf16.xpose.msra.mxu0 0
    %301 = vmatprep.subr.bf16.mxu0 0
    %302 = vmatpush2.bf16.xpose.msra.mxu0 0
    %303 = vmatprep.subr.bf16.mxu0 0
    %304 = vmatpush2.bf16.xpose.msra.mxu0 0
    %305 = vmatprep.subr.bf16.mxu0 0
    %306 = vmatpush2.bf16.xpose.msra.mxu0 0
    %307 = vmatprep.subr.bf16.mxu0 0
    %308 = vmatpush2.bf16.xpose.msra.mxu0 0
    %309 = vmatprep.mubr.bf16.mxu0 0
    %310 = vmatmul.mubr.bf16.gmra.mxu0 %v272
    %v311 = vpop.f32.mrf.mxu0
    %v312 = vadd.f32 0.0, %v311
    %v313 = vpop.f32.mrf.mxu0
    %v314 = vpop.f32.mrf.mxu0
    %v315 = vpop.f32.mrf.mxu0
    %316 = vdwg.mxu0
    %v317 = vsel %vm152, %v312, -inf
    %318 = vmax.xlane.f32.xlu0 %v317
    %v319 = vpop.xlane.xlu0 %318
    %v320 = vmax.f32 %v319, -1e+30
    %v321 = vsub.f32 -1e+30, %v320
    %v322 = vmul.f32 %v321, 1.442695
    %v323 = vpow.pop %v322
    %v324 = vsub.f32 %v312, %v320
    %v325 = vmul.f32 %v324, 1.442695
    %v326 = vpow.pop %v325
    %v327 = vmul.f32 %v323, 0.0
    %v328 = vsel %vm152, %v326, 0.0
    %329 = vadd.xlane.f32.xlu0 %v328
    %v330 = vpop.xlane.xlu0 %329
    %v331 = vadd.f32 %v327, %v330
    %v332 = vpack.c.bf16 %v326, %v326
    %333 = vrot.lane.b32.xlu0 %v148, 56
    %v334 = vpop.permute.xlu0 %333
    %v336 = vsel %vm152, %v332, 0
    %v339 = vsel %vm220, %v334, 0
    %341 = vmatprep.subr.bf16.mxu0 0
    %342 = vmatpush1.bf16.msra.mxu0 0
    %343 = vmatprep.subr.bf16.mxu0 0
    %344 = vmatpush1.bf16.msra.mxu0 0
    %345 = vmatprep.subr.bf16.mxu0 0
    %346 = vmatpush1.bf16.msra.mxu0 0
    %347 = vmatprep.subr.bf16.mxu0 0
    %348 = vmatpush1.bf16.msra.mxu0 0
    %349 = vmatprep.subr.bf16.mxu0 0
    %350 = vmatpush1.bf16.msra.mxu0 0
    %351 = vmatprep.subr.bf16.mxu0 0
    %352 = vmatpush1.bf16.msra.mxu0 0
    %353 = vmatprep.subr.bf16.mxu0 0
    %354 = vmatpush1.bf16.msra.mxu0 0
    %355 = vmatprep.subr.bf16.mxu0 0
    %356 = vmatpush1.bf16.msra.mxu0 %v339
    %357 = vmatprep.subr.bf16.mxu0 0
    %358 = vmatpush2.bf16.msra.mxu0 0
    %359 = vmatprep.subr.bf16.mxu0 0
    %360 = vmatpush2.bf16.msra.mxu0 0
    %361 = vmatprep.subr.bf16.mxu0 0
    %362 = vmatpush2.bf16.msra.mxu0 0
    %363 = vmatprep.subr.bf16.mxu0 0
    %364 = vmatpush2.bf16.msra.mxu0 0
    %365 = vmatprep.subr.bf16.mxu0 0
    %366 = vmatpush2.bf16.msra.mxu0 0
    %367 = vmatprep.subr.bf16.mxu0 0
    %368 = vmatpush2.bf16.msra.mxu0 0
    %369 = vmatprep.subr.bf16.mxu0 0
    %370 = vmatpush2.bf16.msra.mxu0 0
    %371 = vmatprep.subr.bf16.mxu0 0
    %372 = vmatpush2.bf16.msra.mxu0 0
    %373 = vmatprep.mubr.bf16.mxu0 0
    %374 = vmatmul.mubr.bf16.gmra.mxu0 %v336
    %v375 = vpop.f32.mrf.mxu0
    %v376 = vadd.f32 0.0, %v375
    %v377 = vpop.f32.mrf.mxu0
    %v378 = vpop.f32.mrf.mxu0
    %v379 = vpop.f32.mrf.mxu0
    %380 = vdwg.mxu0
    %v381 = vadd.f32 %v327, %v376
    %v382 = vrcp.pop %v331
    %v383 = vmul.f32 %v381, %v382
    %384 = vrot.lane.b32.xlu0 %v148, 112
    %v385 = vpop.permute.xlu0 %384
    %386 = vrot.lane.b32.xlu0 %v148, 80
    %v387 = vpop.permute.xlu0 %386
    %v389 = vsel %vm152, %v385, 0
    %v392 = vsel %vm152, %v387, 0
    %394 = vmatprep.subr.bf16.mxu0 0
    %395 = vmatpush1.bf16.xpose.msra.mxu0 0
    %396 = vmatprep.subr.bf16.mxu0 0
    %397 = vmatpush1.bf16.xpose.msra.mxu0 0
    %398 = vmatprep.subr.bf16.mxu0 0
    %399 = vmatpush1.bf16.xpose.msra.mxu0 0
    %400 = vmatprep.subr.bf16.mxu0 0
    %401 = vmatpush1.bf16.xpose.msra.mxu0 0
    %402 = vmatprep.subr.bf16.mxu0 0
    %403 = vmatpush1.bf16.xpose.msra.mxu0 0
    %404 = vmatprep.subr.bf16.mxu0 0
    %405 = vmatpush1.bf16.xpose.msra.mxu0 0
    %406 = vmatprep.subr.bf16.mxu0 0
    %407 = vmatpush1.bf16.xpose.msra.mxu0 0
    %408 = vmatprep.subr.bf16.mxu0 0
    %409 = vmatpush1.bf16.xpose.msra.mxu0 %v392
    %410 = vmatprep.subr.bf16.mxu0 0
    %411 = vmatpush2.bf16.xpose.msra.mxu0 0
    %412 = vmatprep.subr.bf16.mxu0 0
    %413 = vmatpush2.bf16.xpose.msra.mxu0 0
    %414 = vmatprep.subr.bf16.mxu0 0
    %415 = vmatpush2.bf16.xpose.msra.mxu0 0
    %416 = vmatprep.subr.bf16.mxu0 0
    %417 = vmatpush2.bf16.xpose.msra.mxu0 0
    %418 = vmatprep.subr.bf16.mxu0 0
    %419 = vmatpush2.bf16.xpose.msra.mxu0 0
    %420 = vmatprep.subr.bf16.mxu0 0
    %421 = vmatpush2.bf16.xpose.msra.mxu0 0
    %422 = vmatprep.subr.bf16.mxu0 0
    %423 = vmatpush2.bf16.xpose.msra.mxu0 0
    %424 = vmatprep.subr.bf16.mxu0 0
    %425 = vmatpush2.bf16.xpose.msra.mxu0 0
    %426 = vmatprep.mubr.bf16.mxu0 0
    %427 = vmatmul.mubr.bf16.gmra.mxu0 %v389
    %v428 = vpop.f32.mrf.mxu0
    %v429 = vadd.f32 0.0, %v428
    %v430 = vpop.f32.mrf.mxu0
    %v431 = vpop.f32.mrf.mxu0
    %v432 = vpop.f32.mrf.mxu0
    %433 = vdwg.mxu0
    %v434 = vsel %vm152, %v429, -inf
    %435 = vmax.xlane.f32.xlu0 %v434
    %v436 = vpop.xlane.xlu0 %435
    %v437 = vmax.f32 %v436, -1e+30
    %v438 = vsub.f32 -1e+30, %v437
    %v439 = vmul.f32 %v438, 1.442695
    %v440 = vpow.pop %v439
    %v441 = vsub.f32 %v429, %v437
    %v442 = vmul.f32 %v441, 1.442695
    %v443 = vpow.pop %v442
    %v444 = vmul.f32 %v440, 0.0
    %v445 = vsel %vm152, %v443, 0.0
    %446 = vadd.xlane.f32.xlu0 %v445
    %v447 = vpop.xlane.xlu0 %446
    %v448 = vadd.f32 %v444, %v447
    %v449 = vpack.c.bf16 %v443, %v443
    %450 = vrot.lane.b32.xlu0 %v148, 48
    %v451 = vpop.permute.xlu0 %450
    %v453 = vsel %vm152, %v449, 0
    %v456 = vsel %vm220, %v451, 0
    %458 = vmatprep.subr.bf16.mxu0 0
    %459 = vmatpush1.bf16.msra.mxu0 0
    %460 = vmatprep.subr.bf16.mxu0 0
    %461 = vmatpush1.bf16.msra.mxu0 0
    %462 = vmatprep.subr.bf16.mxu0 0
    %463 = vmatpush1.bf16.msra.mxu0 0
    %464 = vmatprep.subr.bf16.mxu0 0
    %465 = vmatpush1.bf16.msra.mxu0 0
    %466 = vmatprep.subr.bf16.mxu0 0
    %467 = vmatpush1.bf16.msra.mxu0 0
    %468 = vmatprep.subr.bf16.mxu0 0
    %469 = vmatpush1.bf16.msra.mxu0 0
    %470 = vmatprep.subr.bf16.mxu0 0
    %471 = vmatpush1.bf16.msra.mxu0 0
    %472 = vmatprep.subr.bf16.mxu0 0
    %473 = vmatpush1.bf16.msra.mxu0 %v456
    %474 = vmatprep.subr.bf16.mxu0 0
    %475 = vmatpush2.bf16.msra.mxu0 0
    %476 = vmatprep.subr.bf16.mxu0 0
    %477 = vmatpush2.bf16.msra.mxu0 0
    %478 = vmatprep.subr.bf16.mxu0 0
    %479 = vmatpush2.bf16.msra.mxu0 0
    %480 = vmatprep.subr.bf16.mxu0 0
    %481 = vmatpush2.bf16.msra.mxu0 0
    %482 = vmatprep.subr.bf16.mxu0 0
    %483 = vmatpush2.bf16.msra.mxu0 0
    %484 = vmatprep.subr.bf16.mxu0 0
    %485 = vmatpush2.bf16.msra.mxu0 0
    %486 = vmatprep.subr.bf16.mxu0 0
    %487 = vmatpush2.bf16.msra.mxu0 0
    %488 = vmatprep.subr.bf16.mxu0 0
    %489 = vmatpush2.bf16.msra.mxu0 0
    %490 = vmatprep.mubr.bf16.mxu0 0
    %491 = vmatmul.mubr.bf16.gmra.mxu0 %v453
    %v492 = vpop.f32.mrf.mxu0
    %v493 = vadd.f32 0.0, %v492
    %v494 = vpop.f32.mrf.mxu0
    %v495 = vpop.f32.mrf.mxu0
    %v496 = vpop.f32.mrf.mxu0
    %497 = vdwg.mxu0
    %v498 = vadd.f32 %v444, %v493
    %v499 = vrcp.pop %v448
    %v500 = vmul.f32 %v498, %v499
    %501 = vrot.lane.b32.xlu0 %v148, 104
    %v502 = vpop.permute.xlu0 %501
    %503 = vrot.lane.b32.xlu0 %v148, 72
    %v504 = vpop.permute.xlu0 %503
    %v506 = vsel %vm152, %v502, 0
    %v509 = vsel %vm152, %v504, 0
    %511 = vmatprep.subr.bf16.mxu0 0
    %512 = vmatpush1.bf16.xpose.msra.mxu0 0
    %513 = vmatprep.subr.bf16.mxu0 0
    %514 = vmatpush1.bf16.xpose.msra.mxu0 0
    %515 = vmatprep.subr.bf16.mxu0 0
    %516 = vmatpush1.bf16.xpose.msra.mxu0 0
    %517 = vmatprep.subr.bf16.mxu0 0
    %518 = vmatpush1.bf16.xpose.msra.mxu0 0
    %519 = vmatprep.subr.bf16.mxu0 0
    %520 = vmatpush1.bf16.xpose.msra.mxu0 0
    %521 = vmatprep.subr.bf16.mxu0 0
    %522 = vmatpush1.bf16.xpose.msra.mxu0 0
    %523 = vmatprep.subr.bf16.mxu0 0
    %524 = vmatpush1.bf16.xpose.msra.mxu0 0
    %525 = vmatprep.subr.bf16.mxu0 0
    %526 = vmatpush1.bf16.xpose.msra.mxu0 %v509
    %527 = vmatprep.subr.bf16.mxu0 0
    %528 = vmatpush2.bf16.xpose.msra.mxu0 0
    %529 = vmatprep.subr.bf16.mxu0 0
    %530 = vmatpush2.bf16.xpose.msra.mxu0 0
    %531 = vmatprep.subr.bf16.mxu0 0
    %532 = vmatpush2.bf16.xpose.msra.mxu0 0
    %533 = vmatprep.subr.bf16.mxu0 0
    %534 = vmatpush2.bf16.xpose.msra.mxu0 0
    %535 = vmatprep.subr.bf16.mxu0 0
    %536 = vmatpush2.bf16.xpose.msra.mxu0 0
    %537 = vmatprep.subr.bf16.mxu0 0
    %538 = vmatpush2.bf16.xpose.msra.mxu0 0
    %539 = vmatprep.subr.bf16.mxu0 0
    %540 = vmatpush2.bf16.xpose.msra.mxu0 0
    %541 = vmatprep.subr.bf16.mxu0 0
    %542 = vmatpush2.bf16.xpose.msra.mxu0 0
    %543 = vmatprep.mubr.bf16.mxu0 0
    %544 = vmatmul.mubr.bf16.gmra.mxu0 %v506
    %v545 = vpop.f32.mrf.mxu0
    %v546 = vadd.f32 0.0, %v545
    %v547 = vpop.f32.mrf.mxu0
    %v548 = vpop.f32.mrf.mxu0
    %v549 = vpop.f32.mrf.mxu0
    %550 = vdwg.mxu0
    %v551 = vsel %vm152, %v546, -inf
    %552 = vmax.xlane.f32.xlu0 %v551
    %v553 = vpop.xlane.xlu0 %552
    %v554 = vmax.f32 %v553, -1e+30
    %v555 = vsub.f32 -1e+30, %v554
    %v556 = vmul.f32 %v555, 1.442695
    %v557 = vpow.pop %v556
    %v558 = vsub.f32 %v546, %v554
    %v559 = vmul.f32 %v558, 1.442695
    %v560 = vpow.pop %v559
    %v561 = vmul.f32 %v557, 0.0
    %v562 = vsel %vm152, %v560, 0.0
    %563 = vadd.xlane.f32.xlu0 %v562
    %v564 = vpop.xlane.xlu0 %563
    %v565 = vadd.f32 %v561, %v564
    %v566 = vpack.c.bf16 %v560, %v560
    %567 = vrot.lane.b32.xlu0 %v148, 40
    %v568 = vpop.permute.xlu0 %567
    %v570 = vsel %vm152, %v566, 0
    %v573 = vsel %vm220, %v568, 0
    %575 = vmatprep.subr.bf16.mxu0 0
    %576 = vmatpush1.bf16.msra.mxu0 0
    %577 = vmatprep.subr.bf16.mxu0 0
    %578 = vmatpush1.bf16.msra.mxu0 0
    %579 = vmatprep.subr.bf16.mxu0 0
    %580 = vmatpush1.bf16.msra.mxu0 0
    %581 = vmatprep.subr.bf16.mxu0 0
    %582 = vmatpush1.bf16.msra.mxu0 0
    %583 = vmatprep.subr.bf16.mxu0 0
    %584 = vmatpush1.bf16.msra.mxu0 0
    %585 = vmatprep.subr.bf16.mxu0 0
    %586 = vmatpush1.bf16.msra.mxu0 0
    %587 = vmatprep.subr.bf16.mxu0 0
    %588 = vmatpush1.bf16.msra.mxu0 0
    %589 = vmatprep.subr.bf16.mxu0 0
    %590 = vmatpush1.bf16.msra.mxu0 %v573
    %591 = vmatprep.subr.bf16.mxu0 0
    %592 = vmatpush2.bf16.msra.mxu0 0
    %593 = vmatprep.subr.bf16.mxu0 0
    %594 = vmatpush2.bf16.msra.mxu0 0
    %595 = vmatprep.subr.bf16.mxu0 0
    %596 = vmatpush2.bf16.msra.mxu0 0
    %597 = vmatprep.subr.bf16.mxu0 0
    %598 = vmatpush2.bf16.msra.mxu0 0
    %599 = vmatprep.subr.bf16.mxu0 0
    %600 = vmatpush2.bf16.msra.mxu0 0
    %601 = vmatprep.subr.bf16.mxu0 0
    %602 = vmatpush2.bf16.msra.mxu0 0
    %603 = vmatprep.subr.bf16.mxu0 0
    %604 = vmatpush2.bf16.msra.mxu0 0
    %605 = vmatprep.subr.bf16.mxu0 0
    %606 = vmatpush2.bf16.msra.mxu0 0
    %607 = vmatprep.mubr.bf16.mxu0 0
    %608 = vmatmul.mubr.bf16.gmra.mxu0 %v570
    %v609 = vpop.f32.mrf.mxu0
    %v610 = vadd.f32 0.0, %v609
    %v611 = vpop.f32.mrf.mxu0
    %v612 = vpop.f32.mrf.mxu0
    %v613 = vpop.f32.mrf.mxu0
    %614 = vdwg.mxu0
    %v615 = vadd.f32 %v561, %v610
    %v616 = vrcp.pop %v565
    %v617 = vmul.f32 %v615, %v616
    %619 = vrot.lane.b32.xlu0 %v383, 8
    %v620 = vpop.permute.xlu0 %619
    %623 = vrot.lane.b32.xlu0 %v500, 16
    %v624 = vpop.permute.xlu0 %623
    %627 = vrot.lane.b32.xlu0 %v617, 24
    %v628 = vpop.permute.xlu0 %627
    %v630 = vsel %vm152, %v266, %v620
    %vm631 = vcmask 130048
    %v632 = vsel %vm631, %v630, %v624
    %vm633 = vcmask 195584
    %v634 = vsel %vm633, %v632, %v628
    %v635 = vpack.c.bf16 %v634, %v634
    %v637 = vlaneseq
    %v638 = vshrl.u32 %v637, 7
    %v639 = vsub.s32 0, %v638
    %v640 = vrot.slane %v31, %v639
    %v646 = vunpack.c.l.b16 %v27
    %v647 = vunpack.c.l.b16 %v28
    %v648 = vunpack.c.l.b16 %v29
    %v649 = vunpack.c.l.b16 %v30
    %v650 = vpack.c.b16 %v647, %v646
    %v651 = vpack.c.b16 %v649, %v648
    %v655 = vsel %vm104, %v635, 0
    %657 = vmatprep.subr.bf16.mxu0 0
    %658 = vmatpush1.bf16.msra.mxu0 0
    %659 = vmatprep.subr.bf16.mxu0 0
    %660 = vmatpush1.bf16.msra.mxu0 0
    %661 = vmatprep.subr.bf16.mxu0 0
    %662 = vmatpush1.bf16.msra.mxu0 0
    %663 = vmatprep.subr.bf16.mxu0 0
    %664 = vmatpush1.bf16.msra.mxu0 0
    %665 = vmatprep.subr.bf16.mxu0 0
    %666 = vmatpush1.bf16.msra.mxu0 0
    %667 = vmatprep.subr.bf16.mxu0 0
    %668 = vmatpush1.bf16.msra.mxu0 0
    %669 = vmatprep.subr.bf16.mxu0 0
    %670 = vmatpush1.bf16.msra.mxu0 %v651
    %671 = vmatprep.subr.bf16.mxu0 0
    %672 = vmatpush1.bf16.msra.mxu0 %v650
    %673 = vmatprep.subr.bf16.mxu0 0
    %674 = vmatpush2.bf16.msra.mxu0 0
    %675 = vmatprep.subr.bf16.mxu0 0
    %676 = vmatpush2.bf16.msra.mxu0 0
    %677 = vmatprep.subr.bf16.mxu0 0
    %678 = vmatpush2.bf16.msra.mxu0 0
    %679 = vmatprep.subr.bf16.mxu0 0
    %680 = vmatpush2.bf16.msra.mxu0 0
    %681 = vmatprep.subr.bf16.mxu0 0
    %682 = vmatpush2.bf16.msra.mxu0 0
    %683 = vmatprep.subr.bf16.mxu0 0
    %684 = vmatpush2.bf16.msra.mxu0 0
    %685 = vmatprep.subr.bf16.mxu0 0
    %686 = vmatpush2.bf16.msra.mxu0 0
    %687 = vmatprep.subr.bf16.mxu0 0
    %688 = vmatpush2.bf16.msra.mxu0 0
    %689 = vmatprep.mubr.bf16.mxu0 0
    %690 = vmatmul.mubr.bf16.gmra.mxu0 %v655
    %v691 = vpop.f32.mrf.mxu0
    %v692 = vadd.f32 %v640, %v691
    %v693 = vpop.f32.mrf.mxu0
    %v694 = vpop.f32.mrf.mxu0
    %v695 = vpop.f32.mrf.mxu0
    %696 = vdwg.mxu0
    %v698 = vcombine.high %v692, %v692
    %v700 = vunpack.c.l.s4 1966171168
    %v701 = vunpack.c.0.s8 %v700
    %v702 = vlaneseq
    %v703 = vshrl.u32 %v702, 7
    %v704 = vsub.s32 %v701, %v703
    %v705 = vrot.slane %v692, %v704
    %v707 = vunpack.c.l.s4 1966171168
    %v708 = vunpack.c.0.s8 %v707
    %v709 = vlaneseq
    %v710 = vshrl.u32 %v709, 7
    %v711 = vsub.s32 %v708, %v710
    %v712 = vrot.slane %v698, %v711
    %v713 = vcombine.high %v705, %v705
    %v714 = vcombine.high %v712, %v712
    %v716 = vunpack.c.l.s4 1966171168
    %v717 = vunpack.c.0.s8 %v716
    %v718 = vlaneseq
    %v719 = vshrl.u32 %v718, 7
    %v720 = vsub.s32 %v717, %v719
    %v721 = vrot.slane %v705, %v720
    %v723 = vunpack.c.l.s4 1966171168
    %v724 = vunpack.c.0.s8 %v723
    %v725 = vlaneseq
    %v726 = vshrl.u32 %v725, 7
    %v727 = vsub.s32 %v724, %v726
    %v728 = vrot.slane %v712, %v727
    %v730 = vunpack.c.l.s4 1966171168
    %v731 = vunpack.c.0.s8 %v730
    %v732 = vlaneseq
    %v733 = vshrl.u32 %v732, 7
    %v734 = vsub.s32 %v731, %v733
    %v735 = vrot.slane %v713, %v734
    %v737 = vunpack.c.l.s4 1966171168
    %v738 = vunpack.c.0.s8 %v737
    %v739 = vlaneseq
    %v740 = vshrl.u32 %v739, 7
    %v741 = vsub.s32 %v738, %v740
    %v742 = vrot.slane %v714, %v741
    %v743 = vcombine.high %v721, %v721
    %v744 = vcombine.high %v728, %v728
    %v745 = vcombine.high %v735, %v735
    %v746 = vcombine.high %v742, %v742
    %vm755 = vcmask 253952
    %756 = vst.msk [vmem:[#allocation2] sm:$0x1] %vm755, %v721
    %757 = vst.msk [vmem:[#allocation2 + $0x2] sm:$0x1] %vm755, %v735
    %758 = vst.msk [vmem:[#allocation2 + $0x4] sm:$0x1] %vm755, %v743
    %759 = vst.msk [vmem:[#allocation2 + $0x6] sm:$0x1] %vm755, %v745
    %760 = vst.msk [vmem:[#allocation2 + $0x8] sm:$0x1] %vm755, %v728
    %761 = vst.msk [vmem:[#allocation2 + $0xa] sm:$0x1] %vm755, %v742
    %762 = vst.msk [vmem:[#allocation2 + $0xc] sm:$0x1] %vm755, %v744
    %763 = vst.msk [vmem:[#allocation2 + $0xe] sm:$0x1] %vm755, %v746
    %v764 = vld [vmem:[%s0 + $0x1] sm:$0x1]
    %v765 = vld [vmem:[%s0 + $0x3] sm:$0x1]
    %v766 = vld [vmem:[%s0 + $0x5] sm:$0x1]
    %v767 = vld [vmem:[%s0 + $0x7] sm:$0x1]
    %v768 = vld [vmem:[%s0 + $0x9] sm:$0x1]
    %v769 = vld [vmem:[%s0 + $0xb] sm:$0x1]
    %v770 = vld [vmem:[%s0 + $0xd] sm:$0x1]
    %v771 = vld [vmem:[%s0 + $0xf] sm:$0x1]
    %v772 = vpack.c.bf16 %v764, %v764
    %v773 = vpack.c.bf16 %v765, %v765
    %v774 = vpack.c.bf16 %v766, %v766
    %v775 = vpack.c.bf16 %v767, %v767
    %v776 = vpack.c.bf16 %v768, %v768
    %v777 = vpack.c.bf16 %v769, %v769
    %v778 = vpack.c.bf16 %v770, %v770
    %v779 = vpack.c.bf16 %v771, %v771
    %v788 = vunpack.c.l.b16 %v772
    %v789 = vunpack.c.l.b16 %v773
    %v790 = vunpack.c.l.b16 %v774
    %v791 = vunpack.c.l.b16 %v775
    %v792 = vunpack.c.l.b16 %v776
    %v793 = vunpack.c.l.b16 %v777
    %v794 = vunpack.c.l.b16 %v778
    %v795 = vunpack.c.l.b16 %v779
    %v796 = vrot.slane %v789, 7
    %v797 = vsel %vm71, %v796, %v788
    %v798 = vrot.slane %v790, 6
    %v799 = vsel %vm74, %v798, %v797
    %v800 = vrot.slane %v791, 5
    %v801 = vsel %vm77, %v800, %v799
    %v802 = vrot.slane %v792, 4
    %v803 = vsel %vm80, %v802, %v801
    %v804 = vrot.slane %v793, 3
    %v805 = vsel %vm83, %v804, %v803
    %v806 = vrot.slane %v794, 2
    %v807 = vsel %vm86, %v806, %v805
    %v808 = vrot.slane %v795, 1
    %v809 = vsel %vm89, %v808, %v807
    %v810 = vpack.c.b16 %v809, %v809
    %v812 = vsel %vm104, %v810, 0
    %814 = vmatprep.subr.bf16.mxu0 0
    %815 = vmatpush1.bf16.msra.mxu0 0
    %816 = vmatprep.subr.bf16.mxu0 0
    %817 = vmatpush1.bf16.msra.mxu0 0
    %818 = vmatprep.subr.bf16.mxu0 0
    %819 = vmatpush1.bf16.msra.mxu0 0
    %820 = vmatprep.subr.bf16.mxu0 0
    %821 = vmatpush1.bf16.msra.mxu0 0
    %822 = vmatprep.subr.bf16.mxu0 0
    %823 = vmatpush1.bf16.msra.mxu0 0
    %824 = vmatprep.subr.bf16.mxu0 0
    %825 = vmatpush1.bf16.msra.mxu0 0
    %826 = vmatprep.subr.bf16.mxu0 0
    %827 = vmatpush1.bf16.msra.mxu0 %v101
    %828 = vmatprep.subr.bf16.mxu0 0
    %829 = vmatpush1.bf16.msra.mxu0 %v100
    %830 = vmatprep.subr.bf16.mxu0 0
    %831 = vmatpush2.bf16.msra.mxu0 0
    %832 = vmatprep.subr.bf16.mxu0 0
    %833 = vmatpush2.bf16.msra.mxu0 0
    %834 = vmatprep.subr.bf16.mxu0 0
    %835 = vmatpush2.bf16.msra.mxu0 0
    %836 = vmatprep.subr.bf16.mxu0 0
    %837 = vmatpush2.bf16.msra.mxu0 0
    %838 = vmatprep.subr.bf16.mxu0 0
    %839 = vmatpush2.bf16.msra.mxu0 0
    %840 = vmatprep.subr.bf16.mxu0 0
    %841 = vmatpush2.bf16.msra.mxu0 0
    %842 = vmatprep.subr.bf16.mxu0 0
    %843 = vmatpush2.bf16.msra.mxu0 0
    %844 = vmatprep.subr.bf16.mxu0 0
    %845 = vmatpush2.bf16.msra.mxu0 0
    %846 = vmatprep.mubr.bf16.mxu0 0
    %847 = vmatmul.mubr.bf16.gmra.mxu0 %v812
    %v848 = vpop.f32.mrf.mxu0
    %v849 = vadd.f32 %v52, %v848
    %v850 = vpop.f32.mrf.mxu0
    %v851 = vpop.f32.mrf.mxu0
    %v852 = vpop.f32.mrf.mxu0
    %853 = vdwg.mxu0
    %v854 = vpack.c.bf16 %v849, %v849
    %856 = vrot.lane.b32.xlu0 %v854, 96
    %v857 = vpop.permute.xlu0 %856
    %v859 = vsel %vm152, %v854, 0
    %v862 = vsel %vm152, %v857, 0
    %864 = vmatprep.subr.bf16.mxu0 0
    %865 = vmatpush1.bf16.xpose.msra.mxu0 0
    %866 = vmatprep.subr.bf16.mxu0 0
    %867 = vmatpush1.bf16.xpose.msra.mxu0 0
    %868 = vmatprep.subr.bf16.mxu0 0
    %869 = vmatpush1.bf16.xpose.msra.mxu0 0
    %870 = vmatprep.subr.bf16.mxu0 0
    %871 = vmatpush1.bf16.xpose.msra.mxu0 0
    %872 = vmatprep.subr.bf16.mxu0 0
    %873 = vmatpush1.bf16.xpose.msra.mxu0 0
    %874 = vmatprep.subr.bf16.mxu0 0
    %875 = vmatpush1.bf16.xpose.msra.mxu0 0
    %876 = vmatprep.subr.bf16.mxu0 0
    %877 = vmatpush1.bf16.xpose.msra.mxu0 0
    %878 = vmatprep.subr.bf16.mxu0 0
    %879 = vmatpush1.bf16.xpose.msra.mxu0 %v862
    %880 = vmatprep.subr.bf16.mxu0 0
    %881 = vmatpush2.bf16.xpose.msra.mxu0 0
    %882 = vmatprep.subr.bf16.mxu0 0
    %883 = vmatpush2.bf16.xpose.msra.mxu0 0
    %884 = vmatprep.subr.bf16.mxu0 0
    %885 = vmatpush2.bf16.xpose.msra.mxu0 0
    %886 = vmatprep.subr.bf16.mxu0 0
    %887 = vmatpush2.bf16.xpose.msra.mxu0 0
    %888 = vmatprep.subr.bf16.mxu0 0
    %889 = vmatpush2.bf16.xpose.msra.mxu0 0
    %890 = vmatprep.subr.bf16.mxu0 0
    %891 = vmatpush2.bf16.xpose.msra.mxu0 0
    %892 = vmatprep.subr.bf16.mxu0 0
    %893 = vmatpush2.bf16.xpose.msra.mxu0 0
    %894 = vmatprep.subr.bf16.mxu0 0
    %895 = vmatpush2.bf16.xpose.msra.mxu0 0
    %896 = vmatprep.mubr.bf16.mxu0 0
    %897 = vmatmul.mubr.bf16.gmra.mxu0 %v859
    %v898 = vpop.f32.mrf.mxu0
    %v899 = vadd.f32 0.0, %v898
    %v900 = vpop.f32.mrf.mxu0
    %v901 = vpop.f32.mrf.mxu0
    %v902 = vpop.f32.mrf.mxu0
    %903 = vdwg.mxu0
    %v904 = vsel %vm152, %v899, -inf
    %905 = vmax.xlane.f32.xlu0 %v904
    %v906 = vpop.xlane.xlu0 %905
    %v907 = vmax.f32 %v906, -1e+30
    %v908 = vsub.f32 -1e+30, %v907
    %v909 = vmul.f32 %v908, 1.442695
    %v910 = vpow.pop %v909
    %v911 = vsub.f32 %v899, %v907
    %v912 = vmul.f32 %v911, 1.442695
    %v913 = vpow.pop %v912
    %v914 = vmul.f32 %v910, 0.0
    %v915 = vsel %vm152, %v913, 0.0
    %916 = vadd.xlane.f32.xlu0 %v915
    %v917 = vpop.xlane.xlu0 %916
    %v918 = vadd.f32 %v914, %v917
    %v919 = vpack.c.bf16 %v913, %v913
    %920 = vrot.lane.b32.xlu0 %v854, 64
    %v921 = vpop.permute.xlu0 %920
    %v923 = vsel %vm152, %v919, 0
    %v926 = vsel %vm220, %v921, 0
    %928 = vmatprep.subr.bf16.mxu0 0
    %929 = vmatpush1.bf16.msra.mxu0 0
    %930 = vmatprep.subr.bf16.mxu0 0
    %931 = vmatpush1.bf16.msra.mxu0 0
    %932 = vmatprep.subr.bf16.mxu0 0
    %933 = vmatpush1.bf16.msra.mxu0 0
    %934 = vmatprep.subr.bf16.mxu0 0
    %935 = vmatpush1.bf16.msra.mxu0 0
    %936 = vmatprep.subr.bf16.mxu0 0
    %937 = vmatpush1.bf16.msra.mxu0 0
    %938 = vmatprep.subr.bf16.mxu0 0
    %939 = vmatpush1.bf16.msra.mxu0 0
    %940 = vmatprep.subr.bf16.mxu0 0
    %941 = vmatpush1.bf16.msra.mxu0 0
    %942 = vmatprep.subr.bf16.mxu0 0
    %943 = vmatpush1.bf16.msra.mxu0 %v926
    %944 = vmatprep.subr.bf16.mxu0 0
    %945 = vmatpush2.bf16.msra.mxu0 0
    %946 = vmatprep.subr.bf16.mxu0 0
    %947 = vmatpush2.bf16.msra.mxu0 0
    %948 = vmatprep.subr.bf16.mxu0 0
    %949 = vmatpush2.bf16.msra.mxu0 0
    %950 = vmatprep.subr.bf16.mxu0 0
    %951 = vmatpush2.bf16.msra.mxu0 0
    %952 = vmatprep.subr.bf16.mxu0 0
    %953 = vmatpush2.bf16.msra.mxu0 0
    %954 = vmatprep.subr.bf16.mxu0 0
    %955 = vmatpush2.bf16.msra.mxu0 0
    %956 = vmatprep.subr.bf16.mxu0 0
    %957 = vmatpush2.bf16.msra.mxu0 0
    %958 = vmatprep.subr.bf16.mxu0 0
    %959 = vmatpush2.bf16.msra.mxu0 0
    %960 = vmatprep.mubr.bf16.mxu0 0
    %961 = vmatmul.mubr.bf16.gmra.mxu0 %v923
    %v962 = vpop.f32.mrf.mxu0
    %v963 = vadd.f32 0.0, %v962
    %v964 = vpop.f32.mrf.mxu0
    %v965 = vpop.f32.mrf.mxu0
    %v966 = vpop.f32.mrf.mxu0
    %967 = vdwg.mxu0
    %v968 = vadd.f32 %v914, %v963
    %v969 = vrcp.pop %v918
    %v970 = vmul.f32 %v968, %v969
    %971 = vrot.lane.b32.xlu0 %v854, 120
    %v972 = vpop.permute.xlu0 %971
    %973 = vrot.lane.b32.xlu0 %v854, 88
    %v974 = vpop.permute.xlu0 %973
    %v976 = vsel %vm152, %v972, 0
    %v979 = vsel %vm152, %v974, 0
    %981 = vmatprep.subr.bf16.mxu0 0
    %982 = vmatpush1.bf16.xpose.msra.mxu0 0
    %983 = vmatprep.subr.bf16.mxu0 0
    %984 = vmatpush1.bf16.xpose.msra.mxu0 0
    %985 = vmatprep.subr.bf16.mxu0 0
    %986 = vmatpush1.bf16.xpose.msra.mxu0 0
    %987 = vmatprep.subr.bf16.mxu0 0
    %988 = vmatpush1.bf16.xpose.msra.mxu0 0
    %989 = vmatprep.subr.bf16.mxu0 0
    %990 = vmatpush1.bf16.xpose.msra.mxu0 0
    %991 = vmatprep.subr.bf16.mxu0 0
    %992 = vmatpush1.bf16.xpose.msra.mxu0 0
    %993 = vmatprep.subr.bf16.mxu0 0
    %994 = vmatpush1.bf16.xpose.msra.mxu0 0
    %995 = vmatprep.subr.bf16.mxu0 0
    %996 = vmatpush1.bf16.xpose.msra.mxu0 %v979
    %997 = vmatprep.subr.bf16.mxu0 0
    %998 = vmatpush2.bf16.xpose.msra.mxu0 0
    %999 = vmatprep.subr.bf16.mxu0 0
    %1000 = vmatpush2.bf16.xpose.msra.mxu0 0
    %1001 = vmatprep.subr.bf16.mxu0 0
    %1002 = vmatpush2.bf16.xpose.msra.mxu0 0
    %1003 = vmatprep.subr.bf16.mxu0 0
    %1004 = vmatpush2.bf16.xpose.msra.mxu0 0
    %1005 = vmatprep.subr.bf16.mxu0 0
    %1006 = vmatpush2.bf16.xpose.msra.mxu0 0
    %1007 = vmatprep.subr.bf16.mxu0 0
    %1008 = vmatpush2.bf16.xpose.msra.mxu0 0
    %1009 = vmatprep.subr.bf16.mxu0 0
    %1010 = vmatpush2.bf16.xpose.msra.mxu0 0
    %1011 = vmatprep.subr.bf16.mxu0 0
    %1012 = vmatpush2.bf16.xpose.msra.mxu0 0
    %1013 = vmatprep.mubr.bf16.mxu0 0
    %1014 = vmatmul.mubr.bf16.gmra.mxu0 %v976
    %v1015 = vpop.f32.mrf.mxu0
    %v1016 = vadd.f32 0.0, %v1015
    %v1017 = vpop.f32.mrf.mxu0
    %v1018 = vpop.f32.mrf.mxu0
    %v1019 = vpop.f32.mrf.mxu0
    %1020 = vdwg.mxu0
    %v1021 = vsel %vm152, %v1016, -inf
    %1022 = vmax.xlane.f32.xlu0 %v1021
    %v1023 = vpop.xlane.xlu0 %1022
    %v1024 = vmax.f32 %v1023, -1e+30
    %v1025 = vsub.f32 -1e+30, %v1024
    %v1026 = vmul.f32 %v1025, 1.442695
    %v1027 = vpow.pop %v1026
    %v1028 = vsub.f32 %v1016, %v1024
    %v1029 = vmul.f32 %v1028, 1.442695
    %v1030 = vpow.pop %v1029
    %v1031 = vmul.f32 %v1027, 0.0
    %v1032 = vsel %vm152, %v1030, 0.0
    %1033 = vadd.xlane.f32.xlu0 %v1032
    %v1034 = vpop.xlane.xlu0 %1033
    %v1035 = vadd.f32 %v1031, %v1034
    %v1036 = vpack.c.bf16 %v1030, %v1030
    %1037 = vrot.lane.b32.xlu0 %v854, 56
    %v1038 = vpop.permute.xlu0 %1037
    %v1040 = vsel %vm152, %v1036, 0
    %v1043 = vsel %vm220, %v1038, 0
    %1045 = vmatprep.subr.bf16.mxu0 0
    %1046 = vmatpush1.bf16.msra.mxu0 0
    %1047 = vmatprep.subr.bf16.mxu0 0
    %1048 = vmatpush1.bf16.msra.mxu0 0
    %1049 = vmatprep.subr.bf16.mxu0 0
    %1050 = vmatpush1.bf16.msra.mxu0 0
    %1051 = vmatprep.subr.bf16.mxu0 0
    %1052 = vmatpush1.bf16.msra.mxu0 0
    %1053 = vmatprep.subr.bf16.mxu0 0
    %1054 = vmatpush1.bf16.msra.mxu0 0
    %1055 = vmatprep.subr.bf16.mxu0 0
    %1056 = vmatpush1.bf16.msra.mxu0 0
    %1057 = vmatprep.subr.bf16.mxu0 0
    %1058 = vmatpush1.bf16.msra.mxu0 0
    %1059 = vmatprep.subr.bf16.mxu0 0
    %1060 = vmatpush1.bf16.msra.mxu0 %v1043
    %1061 = vmatprep.subr.bf16.mxu0 0
    %1062 = vmatpush2.bf16.msra.mxu0 0
    %1063 = vmatprep.subr.bf16.mxu0 0
    %1064 = vmatpush2.bf16.msra.mxu0 0
    %1065 = vmatprep.subr.bf16.mxu0 0
    %1066 = vmatpush2.bf16.msra.mxu0 0
    %1067 = vmatprep.subr.bf16.mxu0 0
    %1068 = vmatpush2.bf16.msra.mxu0 0
    %1069 = vmatprep.subr.bf16.mxu0 0
    %1070 = vmatpush2.bf16.msra.mxu0 0
    %1071 = vmatprep.subr.bf16.mxu0 0
    %1072 = vmatpush2.bf16.msra.mxu0 0
    %1073 = vmatprep.subr.bf16.mxu0 0
    %1074 = vmatpush2.bf16.msra.mxu0 0
    %1075 = vmatprep.subr.bf16.mxu0 0
    %1076 = vmatpush2.bf16.msra.mxu0 0
    %1077 = vmatprep.mubr.bf16.mxu0 0
    %1078 = vmatmul.mubr.bf16.gmra.mxu0 %v1040
    %v1079 = vpop.f32.mrf.mxu0
    %v1080 = vadd.f32 0.0, %v1079
    %v1081 = vpop.f32.mrf.mxu0
    %v1082 = vpop.f32.mrf.mxu0
    %v1083 = vpop.f32.mrf.mxu0
    %1084 = vdwg.mxu0
    %v1085 = vadd.f32 %v1031, %v1080
    %v1086 = vrcp.pop %v1035
    %v1087 = vmul.f32 %v1085, %v1086
    %1088 = vrot.lane.b32.xlu0 %v854, 112
    %v1089 = vpop.permute.xlu0 %1088
    %1090 = vrot.lane.b32.xlu0 %v854, 80
    %v1091 = vpop.permute.xlu0 %1090
    %v1093 = vsel %vm152, %v1089, 0
    %v1096 = vsel %vm152, %v1091, 0
    %1098 = vmatprep.subr.bf16.mxu0 0
    %1099 = vmatpush1.bf16.xpose.msra.mxu0 0
    %1100 = vmatprep.subr.bf16.mxu0 0
    %1101 = vmatpush1.bf16.xpose.msra.mxu0 0
    %1102 = vmatprep.subr.bf16.mxu0 0
    %1103 = vmatpush1.bf16.xpose.msra.mxu0 0
    %1104 = vmatprep.subr.bf16.mxu0 0
    %1105 = vmatpush1.bf16.xpose.msra.mxu0 0
    %1106 = vmatprep.subr.bf16.mxu0 0
    %1107 = vmatpush1.bf16.xpose.msra.mxu0 0
    %1108 = vmatprep.subr.bf16.mxu0 0
    %1109 = vmatpush1.bf16.xpose.msra.mxu0 0
    %1110 = vmatprep.subr.bf16.mxu0 0
    %1111 = vmatpush1.bf16.xpose.msra.mxu0 0
    %1112 = vmatprep.subr.bf16.mxu0 0
    %1113 = vmatpush1.bf16.xpose.msra.mxu0 %v1096
    %1114 = vmatprep.subr.bf16.mxu0 0
    %1115 = vmatpush2.bf16.xpose.msra.mxu0 0
    %1116 = vmatprep.subr.bf16.mxu0 0
    %1117 = vmatpush2.bf16.xpose.msra.mxu0 0
    %1118 = vmatprep.subr.bf16.mxu0 0
    %1119 = vmatpush2.bf16.xpose.msra.mxu0 0
    %1120 = vmatprep.subr.bf16.mxu0 0
    %1121 = vmatpush2.bf16.xpose.msra.mxu0 0
    %1122 = vmatprep.subr.bf16.mxu0 0
    %1123 = vmatpush2.bf16.xpose.msra.mxu0 0
    %1124 = vmatprep.subr.bf16.mxu0 0
    %1125 = vmatpush2.bf16.xpose.msra.mxu0 0
    %1126 = vmatprep.subr.bf16.mxu0 0
    %1127 = vmatpush2.bf16.xpose.msra.mxu0 0
    %1128 = vmatprep.subr.bf16.mxu0 0
    %1129 = vmatpush2.bf16.xpose.msra.mxu0 0
    %1130 = vmatprep.mubr.bf16.mxu0 0
    %1131 = vmatmul.mubr.bf16.gmra.mxu0 %v1093
    %v1132 = vpop.f32.mrf.mxu0
    %v1133 = vadd.f32 0.0, %v1132
    %v1134 = vpop.f32.mrf.mxu0
    %v1135 = vpop.f32.mrf.mxu0
    %v1136 = vpop.f32.mrf.mxu0
    %1137 = vdwg.mxu0
    %v1138 = vsel %vm152, %v1133, -inf
    %1139 = vmax.xlane.f32.xlu0 %v1138
    %v1140 = vpop.xlane.xlu0 %1139
    %v1141 = vmax.f32 %v1140, -1e+30
    %v1142 = vsub.f32 -1e+30, %v1141
    %v1143 = vmul.f32 %v1142, 1.442695
    %v1144 = vpow.pop %v1143
    %v1145 = vsub.f32 %v1133, %v1141
    %v1146 = vmul.f32 %v1145, 1.442695
    %v1147 = vpow.pop %v1146
    %v1148 = vmul.f32 %v1144, 0.0
    %v1149 = vsel %vm152, %v1147, 0.0
    %1150 = vadd.xlane.f32.xlu0 %v1149
    %v1151 = vpop.xlane.xlu0 %1150
    %v1152 = vadd.f32 %v1148, %v1151
    %v1153 = vpack.c.bf16 %v1147, %v1147
    %1154 = vrot.lane.b32.xlu0 %v854, 48
    %v1155 = vpop.permute.xlu0 %1154
    %v1157 = vsel %vm152, %v1153, 0
    %v1160 = vsel %vm220, %v1155, 0
    %1162 = vmatprep.subr.bf16.mxu0 0
    %1163 = vmatpush1.bf16.msra.mxu0 0
    %1164 = vmatprep.subr.bf16.mxu0 0
    %1165 = vmatpush1.bf16.msra.mxu0 0
    %1166 = vmatprep.subr.bf16.mxu0 0
    %1167 = vmatpush1.bf16.msra.mxu0 0
    %1168 = vmatprep.subr.bf16.mxu0 0
    %1169 = vmatpush1.bf16.msra.mxu0 0
    %1170 = vmatprep.subr.bf16.mxu0 0
    %1171 = vmatpush1.bf16.msra.mxu0 0
    %1172 = vmatprep.subr.bf16.mxu0 0
    %1173 = vmatpush1.bf16.msra.mxu0 0
    %1174 = vmatprep.subr.bf16.mxu0 0
    %1175 = vmatpush1.bf16.msra.mxu0 0
    %1176 = vmatprep.subr.bf16.mxu0 0
    %1177 = vmatpush1.bf16.msra.mxu0 %v1160
    %1178 = vmatprep.subr.bf16.mxu0 0
    %1179 = vmatpush2.bf16.msra.mxu0 0
    %1180 = vmatprep.subr.bf16.mxu0 0
    %1181 = vmatpush2.bf16.msra.mxu0 0
    %1182 = vmatprep.subr.bf16.mxu0 0
    %1183 = vmatpush2.bf16.msra.mxu0 0
    %1184 = vmatprep.subr.bf16.mxu0 0
    %1185 = vmatpush2.bf16.msra.mxu0 0
    %1186 = vmatprep.subr.bf16.mxu0 0
    %1187 = vmatpush2.bf16.msra.mxu0 0
    %1188 = vmatprep.subr.bf16.mxu0 0
    %1189 = vmatpush2.bf16.msra.mxu0 0
    %1190 = vmatprep.subr.bf16.mxu0 0
    %1191 = vmatpush2.bf16.msra.mxu0 0
    %1192 = vmatprep.subr.bf16.mxu0 0
    %1193 = vmatpush2.bf16.msra.mxu0 0
    %1194 = vmatprep.mubr.bf16.mxu0 0
    %1195 = vmatmul.mubr.bf16.gmra.mxu0 %v1157
    %v1196 = vpop.f32.mrf.mxu0
    %v1197 = vadd.f32 0.0, %v1196
    %v1198 = vpop.f32.mrf.mxu0
    %v1199 = vpop.f32.mrf.mxu0
    %v1200 = vpop.f32.mrf.mxu0
    %1201 = vdwg.mxu0
    %v1202 = vadd.f32 %v1148, %v1197
    %v1203 = vrcp.pop %v1152
    %v1204 = vmul.f32 %v1202, %v1203
    %1205 = vrot.lane.b32.xlu0 %v854, 104
    %v1206 = vpop.permute.xlu0 %1205
    %1207 = vrot.lane.b32.xlu0 %v854, 72
    %v1208 = vpop.permute.xlu0 %1207
    %v1210 = vsel %vm152, %v1206, 0
    %v1213 = vsel %vm152, %v1208, 0
    %1215 = vmatprep.subr.bf16.mxu0 0
    %1216 = vmatpush1.bf16.xpose.msra.mxu0 0
    %1217 = vmatprep.subr.bf16.mxu0 0
    %1218 = vmatpush1.bf16.xpose.msra.mxu0 0
    %1219 = vmatprep.subr.bf16.mxu0 0
    %1220 = vmatpush1.bf16.xpose.msra.mxu0 0
    %1221 = vmatprep.subr.bf16.mxu0 0
    %1222 = vmatpush1.bf16.xpose.msra.mxu0 0
    %1223 = vmatprep.subr.bf16.mxu0 0
    %1224 = vmatpush1.bf16.xpose.msra.mxu0 0
    %1225 = vmatprep.subr.bf16.mxu0 0
    %1226 = vmatpush1.bf16.xpose.msra.mxu0 0
    %1227 = vmatprep.subr.bf16.mxu0 0
    %1228 = vmatpush1.bf16.xpose.msra.mxu0 0
    %1229 = vmatprep.subr.bf16.mxu0 0
    %1230 = vmatpush1.bf16.xpose.msra.mxu0 %v1213
    %1231 = vmatprep.subr.bf16.mxu0 0
    %1232 = vmatpush2.bf16.xpose.msra.mxu0 0
    %1233 = vmatprep.subr.bf16.mxu0 0
    %1234 = vmatpush2.bf16.xpose.msra.mxu0 0
    %1235 = vmatprep.subr.bf16.mxu0 0
    %1236 = vmatpush2.bf16.xpose.msra.mxu0 0
    %1237 = vmatprep.subr.bf16.mxu0 0
    %1238 = vmatpush2.bf16.xpose.msra.mxu0 0
    %1239 = vmatprep.subr.bf16.mxu0 0
    %1240 = vmatpush2.bf16.xpose.msra.mxu0 0
    %1241 = vmatprep.subr.bf16.mxu0 0
    %1242 = vmatpush2.bf16.xpose.msra.mxu0 0
    %1243 = vmatprep.subr.bf16.mxu0 0
    %1244 = vmatpush2.bf16.xpose.msra.mxu0 0
    %1245 = vmatprep.subr.bf16.mxu0 0
    %1246 = vmatpush2.bf16.xpose.msra.mxu0 0
    %1247 = vmatprep.mubr.bf16.mxu0 0
    %1248 = vmatmul.mubr.bf16.gmra.mxu0 %v1210
    %v1249 = vpop.f32.mrf.mxu0
    %v1250 = vadd.f32 0.0, %v1249
    %v1251 = vpop.f32.mrf.mxu0
    %v1252 = vpop.f32.mrf.mxu0
    %v1253 = vpop.f32.mrf.mxu0
    %1254 = vdwg.mxu0
    %v1255 = vsel %vm152, %v1250, -inf
    %1256 = vmax.xlane.f32.xlu0 %v1255
    %v1257 = vpop.xlane.xlu0 %1256
    %v1258 = vmax.f32 %v1257, -1e+30
    %v1259 = vsub.f32 -1e+30, %v1258
    %v1260 = vmul.f32 %v1259, 1.442695
    %v1261 = vpow.pop %v1260
    %v1262 = vsub.f32 %v1250, %v1258
    %v1263 = vmul.f32 %v1262, 1.442695
    %v1264 = vpow.pop %v1263
    %v1265 = vmul.f32 %v1261, 0.0
    %v1266 = vsel %vm152, %v1264, 0.0
    %1267 = vadd.xlane.f32.xlu0 %v1266
    %v1268 = vpop.xlane.xlu0 %1267
    %v1269 = vadd.f32 %v1265, %v1268
    %v1270 = vpack.c.bf16 %v1264, %v1264
    %1271 = vrot.lane.b32.xlu0 %v854, 40
    %v1272 = vpop.permute.xlu0 %1271
    %v1274 = vsel %vm152, %v1270, 0
    %v1277 = vsel %vm220, %v1272, 0
    %1279 = vmatprep.subr.bf16.mxu0 0
    %1280 = vmatpush1.bf16.msra.mxu0 0
    %1281 = vmatprep.subr.bf16.mxu0 0
    %1282 = vmatpush1.bf16.msra.mxu0 0
    %1283 = vmatprep.subr.bf16.mxu0 0
    %1284 = vmatpush1.bf16.msra.mxu0 0
    %1285 = vmatprep.subr.bf16.mxu0 0
    %1286 = vmatpush1.bf16.msra.mxu0 0
    %1287 = vmatprep.subr.bf16.mxu0 0
    %1288 = vmatpush1.bf16.msra.mxu0 0
    %1289 = vmatprep.subr.bf16.mxu0 0
    %1290 = vmatpush1.bf16.msra.mxu0 0
    %1291 = vmatprep.subr.bf16.mxu0 0
    %1292 = vmatpush1.bf16.msra.mxu0 0
    %1293 = vmatprep.subr.bf16.mxu0 0
    %1294 = vmatpush1.bf16.msra.mxu0 %v1277
    %1295 = vmatprep.subr.bf16.mxu0 0
    %1296 = vmatpush2.bf16.msra.mxu0 0
    %1297 = vmatprep.subr.bf16.mxu0 0
    %1298 = vmatpush2.bf16.msra.mxu0 0
    %1299 = vmatprep.subr.bf16.mxu0 0
    %1300 = vmatpush2.bf16.msra.mxu0 0
    %1301 = vmatprep.subr.bf16.mxu0 0
    %1302 = vmatpush2.bf16.msra.mxu0 0
    %1303 = vmatprep.subr.bf16.mxu0 0
    %1304 = vmatpush2.bf16.msra.mxu0 0
    %1305 = vmatprep.subr.bf16.mxu0 0
    %1306 = vmatpush2.bf16.msra.mxu0 0
    %1307 = vmatprep.subr.bf16.mxu0 0
    %1308 = vmatpush2.bf16.msra.mxu0 0
    %1309 = vmatprep.subr.bf16.mxu0 0
    %1310 = vmatpush2.bf16.msra.mxu0 0
    %1311 = vmatprep.mubr.bf16.mxu0 0
    %1312 = vmatmul.mubr.bf16.gmra.mxu0 %v1274
    %v1313 = vpop.f32.mrf.mxu0
    %v1314 = vadd.f32 0.0, %v1313
    %v1315 = vpop.f32.mrf.mxu0
    %v1316 = vpop.f32.mrf.mxu0
    %v1317 = vpop.f32.mrf.mxu0
    %1318 = vdwg.mxu0
    %v1319 = vadd.f32 %v1265, %v1314
    %v1320 = vrcp.pop %v1269
    %v1321 = vmul.f32 %v1319, %v1320
    %1323 = vrot.lane.b32.xlu0 %v1087, 8
    %v1324 = vpop.permute.xlu0 %1323
    %1327 = vrot.lane.b32.xlu0 %v1204, 16
    %v1328 = vpop.permute.xlu0 %1327
    %1331 = vrot.lane.b32.xlu0 %v1321, 24
    %v1332 = vpop.permute.xlu0 %1331
    %v1334 = vsel %vm152, %v970, %v1324
    %v1335 = vsel %vm631, %v1334, %v1328
    %v1336 = vsel %vm633, %v1335, %v1332
    %v1337 = vpack.c.bf16 %v1336, %v1336
    %v1339 = vsel %vm104, %v1337, 0
    %1341 = vmatprep.subr.bf16.mxu0 0
    %1342 = vmatpush1.bf16.msra.mxu0 0
    %1343 = vmatprep.subr.bf16.mxu0 0
    %1344 = vmatpush1.bf16.msra.mxu0 0
    %1345 = vmatprep.subr.bf16.mxu0 0
    %1346 = vmatpush1.bf16.msra.mxu0 0
    %1347 = vmatprep.subr.bf16.mxu0 0
    %1348 = vmatpush1.bf16.msra.mxu0 0
    %1349 = vmatprep.subr.bf16.mxu0 0
    %1350 = vmatpush1.bf16.msra.mxu0 0
    %1351 = vmatprep.subr.bf16.mxu0 0
    %1352 = vmatpush1.bf16.msra.mxu0 0
    %1353 = vmatprep.subr.bf16.mxu0 0
    %1354 = vmatpush1.bf16.msra.mxu0 %v651
    %1355 = vmatprep.subr.bf16.mxu0 0
    %1356 = vmatpush1.bf16.msra.mxu0 %v650
    %1357 = vmatprep.subr.bf16.mxu0 0
    %1358 = vmatpush2.bf16.msra.mxu0 0
    %1359 = vmatprep.subr.bf16.mxu0 0
    %1360 = vmatpush2.bf16.msra.mxu0 0
    %1361 = vmatprep.subr.bf16.mxu0 0
    %1362 = vmatpush2.bf16.msra.mxu0 0
    %1363 = vmatprep.subr.bf16.mxu0 0
    %1364 = vmatpush2.bf16.msra.mxu0 0
    %1365 = vmatprep.subr.bf16.mxu0 0
    %1366 = vmatpush2.bf16.msra.mxu0 0
    %1367 = vmatprep.subr.bf16.mxu0 0
    %1368 = vmatpush2.bf16.msra.mxu0 0
    %1369 = vmatprep.subr.bf16.mxu0 0
    %1370 = vmatpush2.bf16.msra.mxu0 0
    %1371 = vmatprep.subr.bf16.mxu0 0
    %1372 = vmatpush2.bf16.msra.mxu0 0
    %1373 = vmatprep.mubr.bf16.mxu0 0
    %1374 = vmatmul.mubr.bf16.gmra.mxu0 %v1339
    %v1375 = vpop.f32.mrf.mxu0
    %v1376 = vadd.f32 %v640, %v1375
    %v1377 = vpop.f32.mrf.mxu0
    %v1378 = vpop.f32.mrf.mxu0
    %v1379 = vpop.f32.mrf.mxu0
    %1380 = vdwg.mxu0
    %v1382 = vcombine.high %v1376, %v1376
    %v1384 = vunpack.c.l.s4 1966171168
    %v1385 = vunpack.c.0.s8 %v1384
    %v1386 = vlaneseq
    %v1387 = vshrl.u32 %v1386, 7
    %v1388 = vsub.s32 %v1385, %v1387
    %v1389 = vrot.slane %v1376, %v1388
    %v1391 = vunpack.c.l.s4 1966171168
    %v1392 = vunpack.c.0.s8 %v1391
    %v1393 = vlaneseq
    %v1394 = vshrl.u32 %v1393, 7
    %v1395 = vsub.s32 %v1392, %v1394
    %v1396 = vrot.slane %v1382, %v1395
    %v1397 = vcombine.high %v1389, %v1389
    %v1398 = vcombine.high %v1396, %v1396
    %v1400 = vunpack.c.l.s4 1966171168
    %v1401 = vunpack.c.0.s8 %v1400
    %v1402 = vlaneseq
    %v1403 = vshrl.u32 %v1402, 7
    %v1404 = vsub.s32 %v1401, %v1403
    %v1405 = vrot.slane %v1389, %v1404
    %v1407 = vunpack.c.l.s4 1966171168
    %v1408 = vunpack.c.0.s8 %v1407
    %v1409 = vlaneseq
    %v1410 = vshrl.u32 %v1409, 7
    %v1411 = vsub.s32 %v1408, %v1410
    %v1412 = vrot.slane %v1396, %v1411
    %v1414 = vunpack.c.l.s4 1966171168
    %v1415 = vunpack.c.0.s8 %v1414
    %v1416 = vlaneseq
    %v1417 = vshrl.u32 %v1416, 7
    %v1418 = vsub.s32 %v1415, %v1417
    %v1419 = vrot.slane %v1397, %v1418
    %v1421 = vunpack.c.l.s4 1966171168
    %v1422 = vunpack.c.0.s8 %v1421
    %v1423 = vlaneseq
    %v1424 = vshrl.u32 %v1423, 7
    %v1425 = vsub.s32 %v1422, %v1424
    %v1426 = vrot.slane %v1398, %v1425
    %v1427 = vcombine.high %v1405, %v1405
    %v1428 = vcombine.high %v1412, %v1412
    %v1429 = vcombine.high %v1419, %v1419
    %v1430 = vcombine.high %v1426, %v1426
    %1439 = vst.msk [vmem:[#allocation2 + $0x1] sm:$0x1] %vm755, %v1405
    %1440 = vst.msk [vmem:[#allocation2 + $0x3] sm:$0x1] %vm755, %v1419
    %1441 = vst.msk [vmem:[#allocation2 + $0x5] sm:$0x1] %vm755, %v1427
    %1442 = vst.msk [vmem:[#allocation2 + $0x7] sm:$0x1] %vm755, %v1429
    %1443 = vst.msk [vmem:[#allocation2 + $0x9] sm:$0x1] %vm755, %v1412
    %1444 = vst.msk [vmem:[#allocation2 + $0xb] sm:$0x1] %vm755, %v1426
    %1445 = vst.msk [vmem:[#allocation2 + $0xd] sm:$0x1] %vm755, %v1428
    %1446 = vst.msk [vmem:[#allocation2 + $0xf] sm:$0x1] %vm755, %v1430
    // Predicated region
    $region22: #{self_attention_layer.1} parent=1 // pred_check
      _
    $region23: #{self_attention_layer.1} parent=1 // pred_check_branch
      %1448 = sbr.rel (0) target = $region25
    $region24: #{self_attention_layer.1} parent=1 // pred_region
      %s1450 = ssub.s32 256, 256
      %1451 = vsyncadd [#allocation3], %s1450
      %s1452 = sshll.u32 [#allocation2], 4
      %s1453 = int_to_ptr.vmem [resolvable:$true] %s1452
      %1458 = dma.vmem_to_hbm [thread:$0]  %s1453, 256, %s5, [#allocation3], 32, 32, 2
    $region25: #{self_attention_layer.1} parent=1 // pred_fallthru
      _
    // Predicated region
    $region26: #{self_attention_layer.1} parent=1 // pred_check
      _
    $region27: #{self_attention_layer.1} parent=1 // pred_check_branch
      %1460 = sbr.rel (0) target = $region29
    $region28: #{self_attention_layer.1} parent=1 // pred_region
      %1461 = dma.done [#allocation3], 256
    $region29: #{self_attention_layer.1} parent=1 // pred_fallthru
      _
    %1462 = vsyncpa [#allocation3], 1

</llo_original>
